<compile_context>
chip_gen: v6e
topology: v6e:2x2x1
jax: 0.10.0
libtpu: 0.0.40
codegen_flags: <defaults>
</compile_context>

<pallas_src>
import functools

import jax
import jax.numpy as jnp
import numpy as np
from jax.experimental import pallas as pl
from jax.experimental.pallas import tpu as pltpu


def _softmax_last(x):
    m = jnp.max(x, axis=-1, keepdims=True)
    e = jnp.exp(x - m)
    # reciprocal on the EUP slot (otherwise idle here); on the serial dep chain.
    return e * pl.reciprocal(jnp.sum(e, axis=-1, keepdims=True), approx=True)


# --------------------------------------------------------------------------- #
# Fused, batched GAMENet forward kernel (one grid step = one tile of patients) #
# --------------------------------------------------------------------------- #
def _gamenet_kernel(x_ref,                                   # (T, Bt, 2E) f32
                    wih_ref, bih_ref, whh_ref, bhh_ref,      # packed dual GRU
                    wq_ref, bq_ref,                          # query Linear
                    adjcat_ref, gw1_ref, gb1_ref, gw2_ref, gmemb_ref,   # packed GCNs
                    hist_ref,                                # (Bt, T-1, V) history
                    wo1_ref, bo1_ref, wo2_ref, bo2_ref,      # output MLP
                    out_ref, *, has_history):
    f32 = jnp.float32
    T, B, _ = x_ref.shape            # B = batch tile
    D = whh_ref.shape[0]             # 2 * hidden  (both GRU streams lane-packed)
    E = wq_ref.shape[1]              # emb_dim
    V = adjcat_ref.shape[0]          # med vocab

    # ---- drug memory: EHR & DDI GCN chains lane-packed (width 2E / 2V).
    #      gcn1 input is the identity, so I @ W1 == W1 (folded host-side).
    adj_cat = adjcat_ref[...]                                              # (V, 2V)
    h12 = jnp.maximum(
        jnp.dot(adj_cat, gw1_ref[...].astype(f32),
                preferred_element_type=f32) + gb1_ref[...], 0.0)           # (V, 2E)=[he|hd]
    uv = jnp.dot(h12, gw2_ref[...].astype(f32),
                 preferred_element_type=f32)                               # [he@W2e | -inter*hd@W2d]
    uv_stk = jnp.concatenate([uv[:, :E], uv[:, E:]], axis=0)               # (2V, E)
    mem = jnp.dot(adj_cat, uv_stk, preferred_element_type=f32) + gmemb_ref[...]  # (V, E)

    # ---- both GRUs, batched over the patient tile, lane-packed h = [h1 | h2].
    #      Input projection hoisted out of the recurrence as one matmul.
    x = x_ref[...].reshape(T * B, 2 * E)                                   # time-major
    gi_all = jnp.dot(x, wih_ref[...].astype(f32),
                     preferred_element_type=f32) + bih_ref[...]            # (T*B, 3D)
    whh = whh_ref[...].astype(f32)
    bhh = bhh_ref[...]
    h = jnp.zeros((B, D), f32)
    hs = []                                    # per-step hidden states stay in vregs
    for t in range(T):                         # static unroll; T is compile-time const
        gi = gi_all[t * B:(t + 1) * B, :]
        gh = jnp.dot(h, whh, preferred_element_type=f32) + bhh             # (B, 3D)
        r = jax.nn.sigmoid(gi[:, 0:D] + gh[:, 0:D])
        z = jax.nn.sigmoid(gi[:, D:2 * D] + gh[:, D:2 * D])
        n = jnp.tanh(gi[:, 2 * D:3 * D] + r * gh[:, 2 * D:3 * D])
        h = (1.0 - z) * n + z * h
        hs.append(h)

    # ---- query projection: ReLU(cat([o1, o2], -1)) @ Wq, all time steps at once.
    pr = jnp.concatenate(hs, axis=0)                                       # (T*B, D)
    q_all = jnp.dot(jnp.maximum(pr, 0.0), wq_ref[...].astype(f32),
                    preferred_element_type=f32) + bq_ref[...]              # (T*B, E)
    query = q_all[(T - 1) * B:T * B, :]                                    # (B, E)

    # ---- fact1: attention over the global drug memory bank.
    s1 = jax.lax.dot_general(query, mem, (((1,), (1,)), ((), ())),
                             preferred_element_type=f32)                   # (B, V)
    fact1 = jnp.dot(_softmax_last(s1), mem, preferred_element_type=f32)    # (B, E)

    # ---- fact2: attention over each patient's own history; PyTorch uses
    #      fact2 = fact1 when there is no history (T == 1) -- static branch.
    if has_history:
        scores = []
        for t in range(T - 1):
            key_t = q_all[t * B:(t + 1) * B, :]                            # (B, E)
            scores.append(jnp.sum(query * key_t, axis=-1, keepdims=True))  # (B, 1)
        p2 = _softmax_last(jnp.concatenate(scores, axis=-1))               # (B, T-1)
        hist = hist_ref[...]                                               # (B, T-1, V)
        wv = jnp.zeros((B, V), f32)
        for t in range(T - 1):
            wv = wv + p2[:, t:t + 1] * hist[:, t, :]                       # (B, V)
        fact2 = jnp.dot(wv, mem, preferred_element_type=f32)               # (B, E)
    else:
        fact2 = fact1

    # ---- output MLP: ReLU -> Linear(3E->2E) -> ReLU -> Linear(2E->V)
    cat = jnp.concatenate([jnp.maximum(query, 0.0),
                           jnp.maximum(fact1, 0.0),
                           jnp.maximum(fact2, 0.0)], axis=-1)              # (B, 3E)
    hmid = jnp.maximum(
        jnp.dot(cat, wo1_ref[...].astype(f32),
                preferred_element_type=f32) + bo1_ref[...], 0.0)           # (B, 2E)
    out_ref[...] = jnp.dot(hmid, wo2_ref[...].astype(f32),
                           preferred_element_type=f32) + bo2_ref[...]      # (B, V)


# --------------------------------------------------------------------------- #
# Wrapper: grid over patient tiles, weights VMEM-resident across grid steps.   #
# --------------------------------------------------------------------------- #
def gamenet_forward(x, wih_blk, bih_cat, whh_blk, bhh_cat, wq, bq,
                    adj_cat, gw1, gb1, gw2, gmem_b, hist,
                    wo1, bo1, wo2, bo2, *, b_tile=8):
    T, B, twoE = x.shape
    E = wq.shape[1]
    D = whh_blk.shape[0]
    V = wo2.shape[1]
    assert B % b_tile == 0, "batch must be a multiple of the batch tile"
    n_steps = B // b_tile
    has_history = T > 1
    if not has_history:
        hist = jnp.zeros((B, 1, V), jnp.float32)   # placeholder (never read)

    def full(a):
        # whole-array block, constant index map -> fetched once, VMEM-resident.
        return pl.BlockSpec(a.shape, lambda b, _n=a.ndim: (0,) * _n)

    in_specs = [
        pl.BlockSpec((T, b_tile, twoE), lambda b: (0, b, 0)),        # x (time-major)
        full(wih_blk), full(bih_cat), full(whh_blk), full(bhh_cat),
        full(wq), full(bq),
        full(adj_cat), full(gw1), full(gb1), full(gw2), full(gmem_b),
        pl.BlockSpec((b_tile, hist.shape[1], V), lambda b: (b, 0, 0)),
        full(wo1), full(bo1), full(wo2), full(bo2),
    ]
    out_spec = pl.BlockSpec((b_tile, V), lambda b: (b, 0))

    # ---- shape-derived advisory cost hint ----
    per = 0
    per += 2 * V * (2 * V) * (2 * E)                 # GCN layer 1 (lane-packed)
    per += 2 * V * (2 * E) * (2 * E)                 # GCN layer 2 inner
    per += 2 * V * (2 * V) * E                       # adj_cat @ stacked
    per += 2 * (T * b_tile) * (2 * E) * (3 * D)      # hoisted GRU input projection
    per += 2 * T * b_tile * D * (3 * D)              # GRU recurrence
    per += 2 * (T * b_tile) * D * E                  # query projection
    per += 2 * b_tile * E * V * 3                    # s1, fact1, fact2
    per += 2 * b_tile * (3 * E) * (2 * E)            # output MLP layer 1
    per += 2 * b_tile * (2 * E) * V                  # output MLP layer 2
    flops = per * n_steps
    trans = (T * b_tile * 3 * D + b_tile * (V + max(T - 1, 1)) + 2 * b_tile) * n_steps
    args = (x, wih_blk, bih_cat, whh_blk, bhh_cat, wq, bq,
            adj_cat, gw1, gb1, gw2, gmem_b, hist, wo1, bo1, wo2, bo2)
    bytes_accessed = sum(int(a.size) * a.dtype.itemsize for a in args) + B * V * 4
    cost = pl.CostEstimate(flops=int(flops), transcendentals=int(trans),
                           bytes_accessed=int(bytes_accessed))

    return pl.pallas_call(
        functools.partial(_gamenet_kernel, has_history=has_history),
        grid=(n_steps,),
        out_shape=jax.ShapeDtypeStruct((B, V), jnp.float32),
        in_specs=in_specs,
        out_specs=out_spec,
        compiler_params=pltpu.CompilerParams(dimension_semantics=("parallel",)),
        cost_estimate=cost,
    )(*args)


# --------------------------------------------------------------------------- #
# One-time (model-load) weight packing                                          #
# --------------------------------------------------------------------------- #
def pack_dual_gru(wih0, whh0, bih0, bhh0, wih1, whh1, bih1, bhh1):
    """Pack both GRUs lane-dense. Packed gate axis: [r1|r2 | z1|z2 | n1|n2]."""
    E = wih0.shape[0]
    H = whh0.shape[0]
    D = 2 * H
    wih_blk = jnp.zeros((2 * E, 3 * D), jnp.float32)
    whh_blk = jnp.zeros((D, 3 * D), jnp.float32)
    bih_cat = jnp.zeros((1, 3 * D), jnp.float32)
    bhh_cat = jnp.zeros((1, 3 * D), jnp.float32)
    for g in range(3):                                   # PyTorch gate order r, z, n
        c0, c1 = g * D, g * D + H
        wih_blk = wih_blk.at[0:E, c0:c0 + H].set(wih0[:, g * H:(g + 1) * H])
        wih_blk = wih_blk.at[E:2 * E, c1:c1 + H].set(wih1[:, g * H:(g + 1) * H])
        whh_blk = whh_blk.at[0:H, c0:c0 + H].set(whh0[:, g * H:(g + 1) * H])
        whh_blk = whh_blk.at[H:D, c1:c1 + H].set(whh1[:, g * H:(g + 1) * H])
        bih_cat = bih_cat.at[0, c0:c0 + H].set(bih0[0, g * H:(g + 1) * H])
        bih_cat = bih_cat.at[0, c1:c1 + H].set(bih1[0, g * H:(g + 1) * H])
        bhh_cat = bhh_cat.at[0, c0:c0 + H].set(bhh0[0, g * H:(g + 1) * H])
        bhh_cat = bhh_cat.at[0, c1:c1 + H].set(bhh1[0, g * H:(g + 1) * H])
    return wih_blk, whh_blk, bih_cat, bhh_cat


def pack_gcn(ehr_adj, ddi_adj, w1e, b1e, w2e, b2e, w1d, b1d, w2d, b2d, inter_val):
    """Lane-pack the EHR & DDI GCN chains; fold `inter` (and its sign) into DDI."""
    V, E = w1e.shape
    adj_cat = jnp.concatenate([ehr_adj, ddi_adj], axis=1)                  # (V, 2V)
    gw1 = jnp.zeros((2 * V, 2 * E), jnp.float32)
    gw1 = gw1.at[:V, :E].set(w1e).at[V:, E:].set(w1d)                      # (2V, 2E)
    gb1 = jnp.concatenate([b1e, b1d], axis=1)                              # (1, 2E)
    gw2 = jnp.zeros((2 * E, 2 * E), jnp.float32)
    gw2 = gw2.at[:E, :E].set(w2e).at[E:, E:].set(-inter_val * w2d)         # (2E, 2E)
    gmem_b = b2e - inter_val * b2d                                         # (1, E)
    return adj_cat, gw1, gb1, gw2, gmem_b


# --------------------------------------------------------------------------- #
# Driver                                                                       #
# --------------------------------------------------------------------------- #
if __name__ == "__main__":
    emb_dim = 64
    H = 2 * emb_dim            # GRU hidden
    D = 2 * H                  # both GRU hiddens lane-packed
    diag_voc, proc_voc, med_voc = 40, 30, 64
    T = 3                      # admissions per patient
    B = 16                     # patients per call
    B_TILE = 8

    key = jax.random.PRNGKey(0)
    ks = list(jax.random.split(key, 32))

    def u(k, shape, scale=0.1):
        return jax.random.uniform(k, shape, jnp.float32, -scale, scale)

    def bf16_round(w):          # weights that will be stored bf16 in the kernel
        return w.astype(jnp.bfloat16).astype(jnp.float32)

    # ---- parameters (deterministic, synthetic) ----
    emb0 = u(ks[0], (diag_voc, emb_dim))
    emb1 = u(ks[1], (proc_voc, emb_dim))

    wih0, whh0 = bf16_round(u(ks[2], (emb_dim, 3 * H))), bf16_round(u(ks[3], (H, 3 * H)))
    bih0, bhh0 = u(ks[4], (1, 3 * H)), u(ks[5], (1, 3 * H))
    wih1, whh1 = bf16_round(u(ks[6], (emb_dim, 3 * H))), bf16_round(u(ks[7], (H, 3 * H)))
    bih1, bhh1 = u(ks[8], (1, 3 * H)), u(ks[9], (1, 3 * H))

    wq = bf16_round(u(ks[10], (4 * emb_dim, emb_dim)))     # Linear(4E -> E), transposed
    bq = u(ks[11], (1, emb_dim))

    w1e, b1e = u(ks[12], (med_voc, emb_dim)), u(ks[13], (1, emb_dim))
    w2e, b2e = u(ks[14], (emb_dim, emb_dim)), u(ks[15], (1, emb_dim))
    w1d, b1d = u(ks[16], (med_voc, emb_dim)), u(ks[17], (1, emb_dim))
    w2d, b2d = u(ks[18], (emb_dim, emb_dim)), u(ks[19], (1, emb_dim))

    inter = u(ks[20], (1, 1))
    inter_val = float(inter[0, 0])

    wo1 = bf16_round(u(ks[21], (3 * emb_dim, 2 * emb_dim)))  # Linear(3E->2E), transposed
    bo1 = u(ks[22], (1, 2 * emb_dim))
    wo2 = bf16_round(u(ks[23], (2 * emb_dim, med_voc)))      # Linear(2E->V),  transposed
    bo2 = u(ks[24], (1, med_voc))

    # ---- adjacency: GCN row-normalisation of (A + I) ----
    def normalize_adj(a):
        a = a + jnp.eye(a.shape[0], dtype=jnp.float32)
        rowsum = jnp.sum(a, axis=1)
        r_inv = jnp.where(rowsum > 0, 1.0 / rowsum, 0.0)
        return r_inv[:, None] * a

    ehr_raw = (jax.random.uniform(ks[25], (med_voc, med_voc)) < 0.15).astype(jnp.float32)
    ddi_raw = (jax.random.uniform(ks[26], (med_voc, med_voc)) < 0.10).astype(jnp.float32)
    ehr_adj = normalize_adj(jnp.maximum(ehr_raw, ehr_raw.T))
    ddi_adj = normalize_adj(jnp.maximum(ddi_raw, ddi_raw.T))

    # ---- synthetic batch of patients: T admissions of [diag, proc, med] codes ----
    diag_codes = jax.random.randint(ks[27], (T, B, 4), 0, diag_voc)
    proc_codes = jax.random.randint(ks[28], (T, B, 3), 0, proc_voc)
    med_codes = jax.random.randint(ks[29], (T, B, 3), 0, med_voc)

    # glue: ragged embedding gather + mean per admission stays in plain JAX
    i1_seq = jnp.mean(emb0[diag_codes], axis=2)        # (T, B, E)
    i2_seq = jnp.mean(emb1[proc_codes], axis=2)        # (T, B, E)
    x = jnp.concatenate([i1_seq, i2_seq], axis=-1)     # (T, B, 2E), time-major

    med_np = np.asarray(med_codes)
    hist_np = np.zeros((B, T - 1, med_voc), np.float32)
    for t in range(T - 1):
        for p in range(B):
            hist_np[p, t, med_np[t, p]] = 1.0
    hist = jnp.asarray(hist_np)                        # (B, T-1, V)

    # ---- one-time packing; big weights stored bf16 (f32 accumulation in-kernel) ----
    wih_blk, whh_blk, bih_cat, bhh_cat = pack_dual_gru(
        wih0, whh0, bih0, bhh0, wih1, whh1, bih1, bhh1)
    adj_cat, gw1, gb1, gw2, gmem_b = pack_gcn(
        ehr_adj, ddi_adj, w1e, b1e, w2e, b2e, w1d, b1d, w2d, b2d, inter_val)

    wih_blk_k = wih_blk.astype(jnp.bfloat16)
    whh_blk_k = whh_blk.astype(jnp.bfloat16)
    wq_k = wq.astype(jnp.bfloat16)
    wo1_k = wo1.astype(jnp.bfloat16)
    wo2_k = wo2.astype(jnp.bfloat16)

    # ---- fused, batched Pallas forward ----
    out = gamenet_forward(x, wih_blk_k, bih_cat, whh_blk_k, bhh_cat, wq_k, bq,
                          adj_cat, gw1, gb1, gw2, gmem_b, hist,
                          wo1_k, bo1, wo2_k, bo2, b_tile=B_TILE)
    out = jax.block_until_ready(out)

    # ---- plain-JAX reference (same bf16-rounded weights, per-patient) ----
    def gcn_ref(adj, w1, b1, w2, b2):
        hh = jnp.maximum(adj @ w1 + b1[0], 0.0)
        return adj @ (hh @ w2) + b2[0]

    def gru_ref(x_seq, wih, whh, bih, bhh):
        Hh = whh.shape[0]

        def step(hc, xv):
            gi = xv @ wih + bih[0]
            gh = hc @ whh + bhh[0]
            r = jax.nn.sigmoid(gi[:Hh] + gh[:Hh])
            z = jax.nn.sigmoid(gi[Hh:2 * Hh] + gh[Hh:2 * Hh])
            n = jnp.tanh(gi[2 * Hh:] + r * gh[2 * Hh:])
            h_new = (1.0 - z) * n + z * hc
            return h_new, h_new

        _, outs = jax.lax.scan(step, jnp.zeros((Hh,), jnp.float32), x_seq)
        return outs

    mem_ref_val = (gcn_ref(ehr_adj, w1e, b1e, w2e, b2e)
                   - inter_val * gcn_ref(ddi_adj, w1d, b1d, w2d, b2d))

    def ref_one(x1_p, x2_p, hist_p):                   # (T,E), (T,E), (T-1,V)
        o1 = gru_ref(x1_p, wih0, whh0, bih0, bhh0)
        o2 = gru_ref(x2_p, wih1, whh1, bih1, bhh1)
        pr = jnp.concatenate([o1, o2], axis=-1)
        q_all = jnp.maximum(pr, 0.0) @ wq + bq[0]
        query, hist_keys = q_all[-1:], q_all[:-1]
        fact1 = jax.nn.softmax(query @ mem_ref_val.T, axis=-1) @ mem_ref_val
        fact2 = (jax.nn.softmax(query @ hist_keys.T, axis=-1) @ hist_p) @ mem_ref_val
        cat = jnp.concatenate([query, fact1, fact2], axis=-1)
        hmid = jnp.maximum(jnp.maximum(cat, 0.0) @ wo1 + bo1[0], 0.0)
        return (hmid @ wo2 + bo2[0])[0]

    ref_out = jax.vmap(ref_one)(jnp.transpose(i1_seq, (1, 0, 2)),
                                jnp.transpose(i2_seq, (1, 0, 2)),
                                hist)                   # (B, V)

    # Tolerance accounts for bf16 weight storage + TPU default matmul precision
    # (both paths see bf16-rounded weights) and the approx softmax reciprocal.
    np.testing.assert_allclose(np.asarray(out), np.asarray(ref_out),
                               rtol=2e-2, atol=2e-2)
    print("KERNEL_OK")
</pallas_src>

<mosaic_0001>
module attributes {stable_mosaic.version = 11 : i64} {
  func.func @_gamenet_kernel(%arg0: i32, %arg1: memref<3x8x128xf32, #tpu.memory_space<vmem>>, %arg2: memref<128x768xbf16, #tpu.memory_space<vmem>>, %arg3: memref<1x768xf32, #tpu.memory_space<vmem>>, %arg4: memref<256x768xbf16, #tpu.memory_space<vmem>>, %arg5: memref<1x768xf32, #tpu.memory_space<vmem>>, %arg6: memref<256x64xbf16, #tpu.memory_space<vmem>>, %arg7: memref<1x64xf32, #tpu.memory_space<vmem>>, %arg8: memref<64x128xf32, #tpu.memory_space<vmem>>, %arg9: memref<128x128xf32, #tpu.memory_space<vmem>>, %arg10: memref<1x128xf32, #tpu.memory_space<vmem>>, %arg11: memref<128x128xf32, #tpu.memory_space<vmem>>, %arg12: memref<1x64xf32, #tpu.memory_space<vmem>>, %arg13: memref<8x2x64xf32, #tpu.memory_space<vmem>>, %arg14: memref<192x128xbf16, #tpu.memory_space<vmem>>, %arg15: memref<1x128xf32, #tpu.memory_space<vmem>>, %arg16: memref<128x64xbf16, #tpu.memory_space<vmem>>, %arg17: memref<1x64xf32, #tpu.memory_space<vmem>>, %arg18: memref<8x64xf32, #tpu.memory_space<vmem>>) attributes {dimension_semantics = [#tpu.dimension_semantics<parallel>], iteration_bounds = array<i64: 2>, scalar_prefetch = 0 : i64, scratch_operands = 0 : i64, tpu.core_type = #tpu.core_type<tc>, window_params = [{transform_indices = @transform_0, window_bounds = array<i64: 3, 8, 128>}, {pipeline_mode = #tpu.pipeline_mode<synchronous>, transform_indices = @transform_1, window_bounds = array<i64: 128, 768>}, {pipeline_mode = #tpu.pipeline_mode<synchronous>, transform_indices = @transform_2, window_bounds = array<i64: 1, 768>}, {pipeline_mode = #tpu.pipeline_mode<synchronous>, transform_indices = @transform_3, window_bounds = array<i64: 256, 768>}, {pipeline_mode = #tpu.pipeline_mode<synchronous>, transform_indices = @transform_4, window_bounds = array<i64: 1, 768>}, {pipeline_mode = #tpu.pipeline_mode<synchronous>, transform_indices = @transform_5, window_bounds = array<i64: 256, 64>}, {pipeline_mode = #tpu.pipeline_mode<synchronous>, transform_indices = @transform_6, window_bounds = array<i64: 1, 64>}, {pipeline_mode = #tpu.pipeline_mode<synchronous>, transform_indices = @transform_7, window_bounds = array<i64: 64, 128>}, {pipeline_mode = #tpu.pipeline_mode<synchronous>, transform_indices = @transform_8, window_bounds = array<i64: 128, 128>}, {pipeline_mode = #tpu.pipeline_mode<synchronous>, transform_indices = @transform_9, window_bounds = array<i64: 1, 128>}, {pipeline_mode = #tpu.pipeline_mode<synchronous>, transform_indices = @transform_10, window_bounds = array<i64: 128, 128>}, {pipeline_mode = #tpu.pipeline_mode<synchronous>, transform_indices = @transform_11, window_bounds = array<i64: 1, 64>}, {transform_indices = @transform_12, window_bounds = array<i64: 8, 2, 64>}, {pipeline_mode = #tpu.pipeline_mode<synchronous>, transform_indices = @transform_13, window_bounds = array<i64: 192, 128>}, {pipeline_mode = #tpu.pipeline_mode<synchronous>, transform_indices = @transform_14, window_bounds = array<i64: 1, 128>}, {pipeline_mode = #tpu.pipeline_mode<synchronous>, transform_indices = @transform_15, window_bounds = array<i64: 128, 64>}, {pipeline_mode = #tpu.pipeline_mode<synchronous>, transform_indices = @transform_16, window_bounds = array<i64: 1, 64>}, {transform_indices = @transform_17, window_bounds = array<i64: 8, 64>}]} {
    %c0 = arith.constant 0 : index
    %c0_0 = arith.constant 0 : index
    %0 = vector.load %arg8[%c0, %c0_0] : memref<64x128xf32, #tpu.memory_space<vmem>>, vector<64x128xf32>
    %c0_1 = arith.constant 0 : index
    %c0_2 = arith.constant 0 : index
    %1 = vector.load %arg9[%c0_1, %c0_2] : memref<128x128xf32, #tpu.memory_space<vmem>>, vector<128x128xf32>
    %cst = arith.constant dense<0.000000e+00> : vector<64x128xf32>
    %2 = tpu.matmul %0, %1, %cst {dimension_numbers = #tpu.dot_dimension_numbers<[1], [0], [0], [1], [0, 0, 1, 1], [], []>} : vector<64x128xf32>, vector<128x128xf32>, vector<64x128xf32> -> vector<64x128xf32>
    %c0_3 = arith.constant 0 : index
    %c0_4 = arith.constant 0 : index
    %3 = vector.load %arg10[%c0_3, %c0_4] : memref<1x128xf32, #tpu.memory_space<vmem>>, vector<1x128xf32>
    %4 = vector.broadcast %3 : vector<1x128xf32> to vector<64x128xf32>
    %5 = arith.addf %2, %4 : vector<64x128xf32>
    %cst_5 = arith.constant 0.000000e+00 : f32
    %6 = vector.broadcast %cst_5 : f32 to vector<64x128xf32>
    %7 = arith.maximumf %5, %6 : vector<64x128xf32>
    %c0_6 = arith.constant 0 : index
    %c0_7 = arith.constant 0 : index
    %8 = vector.load %arg11[%c0_6, %c0_7] : memref<128x128xf32, #tpu.memory_space<vmem>>, vector<128x128xf32>
    %cst_8 = arith.constant dense<0.000000e+00> : vector<64x128xf32>
    %9 = tpu.matmul %7, %8, %cst_8 {dimension_numbers = #tpu.dot_dimension_numbers<[1], [0], [0], [1], [0, 0, 1, 1], [], []>} : vector<64x128xf32>, vector<128x128xf32>, vector<64x128xf32> -> vector<64x128xf32>
    %10 = vector.extract_strided_slice %9 {offsets = [0, 0], sizes = [64, 64], strides = [1, 1]} : vector<64x128xf32> to vector<64x64xf32>
    %11 = vector.extract_strided_slice %9 {offsets = [0, 64], sizes = [64, 64], strides = [1, 1]} : vector<64x128xf32> to vector<64x64xf32>
    %12 = tpu.concatenate %10, %11 in 0 : vector<64x64xf32>, vector<64x64xf32> -> vector<128x64xf32>
    %cst_9 = arith.constant dense<0.000000e+00> : vector<64x64xf32>
    %13 = tpu.matmul %0, %12, %cst_9 {dimension_numbers = #tpu.dot_dimension_numbers<[1], [0], [0], [1], [0, 0, 1, 1], [], []>} : vector<64x128xf32>, vector<128x64xf32>, vector<64x64xf32> -> vector<64x64xf32>
    %c0_10 = arith.constant 0 : index
    %c0_11 = arith.constant 0 : index
    %14 = vector.load %arg12[%c0_10, %c0_11] : memref<1x64xf32, #tpu.memory_space<vmem>>, vector<1x64xf32>
    %15 = vector.broadcast %14 : vector<1x64xf32> to vector<64x64xf32>
    %16 = arith.addf %13, %15 : vector<64x64xf32>
    %c0_12 = arith.constant 0 : index
    %c0_13 = arith.constant 0 : index
    %c0_14 = arith.constant 0 : index
    %17 = vector.load %arg1[%c0_12, %c0_13, %c0_14] : memref<3x8x128xf32, #tpu.memory_space<vmem>>, vector<3x8x128xf32>
    %18 = vector.shape_cast %17 : vector<3x8x128xf32> to vector<24x128xf32>
    %c0_15 = arith.constant 0 : index
    %c0_16 = arith.constant 0 : index
    %19 = vector.load %arg2[%c0_15, %c0_16] : memref<128x768xbf16, #tpu.memory_space<vmem>>, vector<128x768xbf16>
    %20 = arith.extf %19 : vector<128x768xbf16> to vector<128x768xf32>
    %cst_17 = arith.constant dense<0.000000e+00> : vector<24x768xf32>
    %21 = tpu.matmul %18, %20, %cst_17 {dimension_numbers = #tpu.dot_dimension_numbers<[1], [0], [0], [1], [0, 0, 1, 1], [], []>} : vector<24x128xf32>, vector<128x768xf32>, vector<24x768xf32> -> vector<24x768xf32>
    %c0_18 = arith.constant 0 : index
    %c0_19 = arith.constant 0 : index
    %22 = vector.load %arg3[%c0_18, %c0_19] : memref<1x768xf32, #tpu.memory_space<vmem>>, vector<1x768xf32>
    %23 = vector.broadcast %22 : vector<1x768xf32> to vector<24x768xf32>
    %24 = arith.addf %21, %23 : vector<24x768xf32>
    %c0_20 = arith.constant 0 : index
    %c0_21 = arith.constant 0 : index
    %25 = vector.load %arg4[%c0_20, %c0_21] : memref<256x768xbf16, #tpu.memory_space<vmem>>, vector<256x768xbf16>
    %26 = arith.extf %25 : vector<256x768xbf16> to vector<256x768xf32>
    %c0_22 = arith.constant 0 : index
    %c0_23 = arith.constant 0 : index
    %27 = vector.load %arg5[%c0_22, %c0_23] : memref<1x768xf32, #tpu.memory_space<vmem>>, vector<1x768xf32>
    %cst_24 = arith.constant 0.000000e+00 : f32
    %28 = vector.broadcast %cst_24 : f32 to vector<8x256xf32>
    %29 = vector.extract_strided_slice %24 {offsets = [0, 0], sizes = [8, 768], strides = [1, 1]} : vector<24x768xf32> to vector<8x768xf32>
    %cst_25 = arith.constant dense<0.000000e+00> : vector<8x768xf32>
    %30 = tpu.matmul %28, %26, %cst_25 {dimension_numbers = #tpu.dot_dimension_numbers<[1], [0], [0], [1], [0, 0, 1, 1], [], []>} : vector<8x256xf32>, vector<256x768xf32>, vector<8x768xf32> -> vector<8x768xf32>
    %31 = vector.broadcast %27 : vector<1x768xf32> to vector<8x768xf32>
    %32 = arith.addf %30, %31 : vector<8x768xf32>
    %33 = vector.extract_strided_slice %29 {offsets = [0, 0], sizes = [8, 256], strides = [1, 1]} : vector<8x768xf32> to vector<8x256xf32>
    %34 = vector.extract_strided_slice %32 {offsets = [0, 0], sizes = [8, 256], strides = [1, 1]} : vector<8x768xf32> to vector<8x256xf32>
    %35 = arith.addf %33, %34 : vector<8x256xf32>
    %36 = arith.negf %35 : vector<8x256xf32>
    %37 = math.exp %36 : vector<8x256xf32>
    %cst_26 = arith.constant 1.000000e+00 : f32
    %38 = vector.broadcast %cst_26 : f32 to vector<8x256xf32>
    %39 = arith.addf %38, %37 : vector<8x256xf32>
    %40 = arith.divf %38, %39 : vector<8x256xf32>
    %41 = vector.extract_strided_slice %29 {offsets = [0, 256], sizes = [8, 256], strides = [1, 1]} : vector<8x768xf32> to vector<8x256xf32>
    %42 = vector.extract_strided_slice %32 {offsets = [0, 256], sizes = [8, 256], strides = [1, 1]} : vector<8x768xf32> to vector<8x256xf32>
    %43 = arith.addf %41, %42 : vector<8x256xf32>
    %44 = arith.negf %43 : vector<8x256xf32>
    %45 = math.exp %44 : vector<8x256xf32>
    %cst_27 = arith.constant 1.000000e+00 : f32
    %46 = vector.broadcast %cst_27 : f32 to vector<8x256xf32>
    %47 = arith.addf %46, %45 : vector<8x256xf32>
    %48 = arith.divf %46, %47 : vector<8x256xf32>
    %49 = vector.extract_strided_slice %29 {offsets = [0, 512], sizes = [8, 256], strides = [1, 1]} : vector<8x768xf32> to vector<8x256xf32>
    %50 = vector.extract_strided_slice %32 {offsets = [0, 512], sizes = [8, 256], strides = [1, 1]} : vector<8x768xf32> to vector<8x256xf32>
    %51 = arith.mulf %40, %50 : vector<8x256xf32>
    %52 = arith.addf %49, %51 : vector<8x256xf32>
    %53 = math.tanh %52 : vector<8x256xf32>
    %cst_28 = arith.constant 1.000000e+00 : f32
    %54 = vector.broadcast %cst_28 : f32 to vector<8x256xf32>
    %55 = arith.subf %54, %48 : vector<8x256xf32>
    %56 = arith.mulf %55, %53 : vector<8x256xf32>
    %57 = arith.mulf %48, %28 : vector<8x256xf32>
    %58 = arith.addf %56, %57 : vector<8x256xf32>
    %59 = vector.extract_strided_slice %24 {offsets = [8, 0], sizes = [8, 768], strides = [1, 1]} : vector<24x768xf32> to vector<8x768xf32>
    %cst_29 = arith.constant dense<0.000000e+00> : vector<8x768xf32>
    %60 = tpu.matmul %58, %26, %cst_29 {dimension_numbers = #tpu.dot_dimension_numbers<[1], [0], [0], [1], [0, 0, 1, 1], [], []>} : vector<8x256xf32>, vector<256x768xf32>, vector<8x768xf32> -> vector<8x768xf32>
    %61 = vector.broadcast %27 : vector<1x768xf32> to vector<8x768xf32>
    %62 = arith.addf %60, %61 : vector<8x768xf32>
    %63 = vector.extract_strided_slice %59 {offsets = [0, 0], sizes = [8, 256], strides = [1, 1]} : vector<8x768xf32> to vector<8x256xf32>
    %64 = vector.extract_strided_slice %62 {offsets = [0, 0], sizes = [8, 256], strides = [1, 1]} : vector<8x768xf32> to vector<8x256xf32>
    %65 = arith.addf %63, %64 : vector<8x256xf32>
    %66 = arith.negf %65 : vector<8x256xf32>
    %67 = math.exp %66 : vector<8x256xf32>
    %cst_30 = arith.constant 1.000000e+00 : f32
    %68 = vector.broadcast %cst_30 : f32 to vector<8x256xf32>
    %69 = arith.addf %68, %67 : vector<8x256xf32>
    %70 = arith.divf %68, %69 : vector<8x256xf32>
    %71 = vector.extract_strided_slice %59 {offsets = [0, 256], sizes = [8, 256], strides = [1, 1]} : vector<8x768xf32> to vector<8x256xf32>
    %72 = vector.extract_strided_slice %62 {offsets = [0, 256], sizes = [8, 256], strides = [1, 1]} : vector<8x768xf32> to vector<8x256xf32>
    %73 = arith.addf %71, %72 : vector<8x256xf32>
    %74 = arith.negf %73 : vector<8x256xf32>
    %75 = math.exp %74 : vector<8x256xf32>
    %cst_31 = arith.constant 1.000000e+00 : f32
    %76 = vector.broadcast %cst_31 : f32 to vector<8x256xf32>
    %77 = arith.addf %76, %75 : vector<8x256xf32>
    %78 = arith.divf %76, %77 : vector<8x256xf32>
    %79 = vector.extract_strided_slice %59 {offsets = [0, 512], sizes = [8, 256], strides = [1, 1]} : vector<8x768xf32> to vector<8x256xf32>
    %80 = vector.extract_strided_slice %62 {offsets = [0, 512], sizes = [8, 256], strides = [1, 1]} : vector<8x768xf32> to vector<8x256xf32>
    %81 = arith.mulf %70, %80 : vector<8x256xf32>
    %82 = arith.addf %79, %81 : vector<8x256xf32>
    %83 = math.tanh %82 : vector<8x256xf32>
    %cst_32 = arith.constant 1.000000e+00 : f32
    %84 = vector.broadcast %cst_32 : f32 to vector<8x256xf32>
    %85 = arith.subf %84, %78 : vector<8x256xf32>
    %86 = arith.mulf %85, %83 : vector<8x256xf32>
    %87 = arith.mulf %78, %58 : vector<8x256xf32>
    %88 = arith.addf %86, %87 : vector<8x256xf32>
    %89 = vector.extract_strided_slice %24 {offsets = [16, 0], sizes = [8, 768], strides = [1, 1]} : vector<24x768xf32> to vector<8x768xf32>
    %cst_33 = arith.constant dense<0.000000e+00> : vector<8x768xf32>
    %90 = tpu.matmul %88, %26, %cst_33 {dimension_numbers = #tpu.dot_dimension_numbers<[1], [0], [0], [1], [0, 0, 1, 1], [], []>} : vector<8x256xf32>, vector<256x768xf32>, vector<8x768xf32> -> vector<8x768xf32>
    %91 = vector.broadcast %27 : vector<1x768xf32> to vector<8x768xf32>
    %92 = arith.addf %90, %91 : vector<8x768xf32>
    %93 = vector.extract_strided_slice %89 {offsets = [0, 0], sizes = [8, 256], strides = [1, 1]} : vector<8x768xf32> to vector<8x256xf32>
    %94 = vector.extract_strided_slice %92 {offsets = [0, 0], sizes = [8, 256], strides = [1, 1]} : vector<8x768xf32> to vector<8x256xf32>
    %95 = arith.addf %93, %94 : vector<8x256xf32>
    %96 = arith.negf %95 : vector<8x256xf32>
    %97 = math.exp %96 : vector<8x256xf32>
    %cst_34 = arith.constant 1.000000e+00 : f32
    %98 = vector.broadcast %cst_34 : f32 to vector<8x256xf32>
    %99 = arith.addf %98, %97 : vector<8x256xf32>
    %100 = arith.divf %98, %99 : vector<8x256xf32>
    %101 = vector.extract_strided_slice %89 {offsets = [0, 256], sizes = [8, 256], strides = [1, 1]} : vector<8x768xf32> to vector<8x256xf32>
    %102 = vector.extract_strided_slice %92 {offsets = [0, 256], sizes = [8, 256], strides = [1, 1]} : vector<8x768xf32> to vector<8x256xf32>
    %103 = arith.addf %101, %102 : vector<8x256xf32>
    %104 = arith.negf %103 : vector<8x256xf32>
    %105 = math.exp %104 : vector<8x256xf32>
    %cst_35 = arith.constant 1.000000e+00 : f32
    %106 = vector.broadcast %cst_35 : f32 to vector<8x256xf32>
    %107 = arith.addf %106, %105 : vector<8x256xf32>
    %108 = arith.divf %106, %107 : vector<8x256xf32>
    %109 = vector.extract_strided_slice %89 {offsets = [0, 512], sizes = [8, 256], strides = [1, 1]} : vector<8x768xf32> to vector<8x256xf32>
    %110 = vector.extract_strided_slice %92 {offsets = [0, 512], sizes = [8, 256], strides = [1, 1]} : vector<8x768xf32> to vector<8x256xf32>
    %111 = arith.mulf %100, %110 : vector<8x256xf32>
    %112 = arith.addf %109, %111 : vector<8x256xf32>
    %113 = math.tanh %112 : vector<8x256xf32>
    %cst_36 = arith.constant 1.000000e+00 : f32
    %114 = vector.broadcast %cst_36 : f32 to vector<8x256xf32>
    %115 = arith.subf %114, %108 : vector<8x256xf32>
    %116 = arith.mulf %115, %113 : vector<8x256xf32>
    %117 = arith.mulf %108, %88 : vector<8x256xf32>
    %118 = arith.addf %116, %117 : vector<8x256xf32>
    %119 = tpu.concatenate %58, %88, %118 in 0 : vector<8x256xf32>, vector<8x256xf32>, vector<8x256xf32> -> vector<24x256xf32>
    %cst_37 = arith.constant 0.000000e+00 : f32
    %120 = vector.broadcast %cst_37 : f32 to vector<24x256xf32>
    %121 = arith.maximumf %119, %120 : vector<24x256xf32>
    %c0_38 = arith.constant 0 : index
    %c0_39 = arith.constant 0 : index
    %122 = vector.load %arg6[%c0_38, %c0_39] : memref<256x64xbf16, #tpu.memory_space<vmem>>, vector<256x64xbf16>
    %123 = arith.extf %122 : vector<256x64xbf16> to vector<256x64xf32>
    %cst_40 = arith.constant dense<0.000000e+00> : vector<24x64xf32>
    %124 = tpu.matmul %121, %123, %cst_40 {dimension_numbers = #tpu.dot_dimension_numbers<[1], [0], [0], [1], [0, 0, 1, 1], [], []>} : vector<24x256xf32>, vector<256x64xf32>, vector<24x64xf32> -> vector<24x64xf32>
    %c0_41 = arith.constant 0 : index
    %c0_42 = arith.constant 0 : index
    %125 = vector.load %arg7[%c0_41, %c0_42] : memref<1x64xf32, #tpu.memory_space<vmem>>, vector<1x64xf32>
    %126 = vector.broadcast %125 : vector<1x64xf32> to vector<24x64xf32>
    %127 = arith.addf %124, %126 : vector<24x64xf32>
    %128 = vector.extract_strided_slice %127 {offsets = [16, 0], sizes = [8, 64], strides = [1, 1]} : vector<24x64xf32> to vector<8x64xf32>
    %cst_43 = arith.constant dense<0.000000e+00> : vector<8x64xf32>
    %129 = tpu.matmul %128, %16, %cst_43 {dimension_numbers = #tpu.dot_dimension_numbers<[1], [1], [0], [0], [0, 0, 1, 0], [], []>} : vector<8x64xf32>, vector<64x64xf32>, vector<8x64xf32> -> vector<8x64xf32>
    %cst_44 = arith.constant dense<0xFF800000> : vector<8xf32>
    %130 = vector.multi_reduction <maximumf>, %129, %cst_44 [1] : vector<8x64xf32> to vector<8xf32>
    %131 = vector.shape_cast %130 : vector<8xf32> to vector<8x1xf32>
    %132 = vector.broadcast %131 : vector<8x1xf32> to vector<8x64xf32>
    %133 = arith.subf %129, %132 : vector<8x64xf32>
    %134 = math.exp %133 : vector<8x64xf32>
    %cst_45 = arith.constant dense<0.000000e+00> : vector<8xf32>
    %135 = vector.multi_reduction <add>, %134, %cst_45 [1] : vector<8x64xf32> to vector<8xf32>
    %136 = vector.shape_cast %135 : vector<8xf32> to vector<8x1xf32>
    %137 = tpu.reciprocal %136 {approx = true} : vector<8x1xf32> -> vector<8x1xf32>
    %138 = vector.broadcast %137 : vector<8x1xf32> to vector<8x64xf32>
    %139 = arith.mulf %134, %138 : vector<8x64xf32>
    %cst_46 = arith.constant dense<0.000000e+00> : vector<8x64xf32>
    %140 = tpu.matmul %139, %16, %cst_46 {dimension_numbers = #tpu.dot_dimension_numbers<[1], [0], [0], [1], [0, 0, 1, 1], [], []>} : vector<8x64xf32>, vector<64x64xf32>, vector<8x64xf32> -> vector<8x64xf32>
    %141 = vector.extract_strided_slice %127 {offsets = [0, 0], sizes = [8, 64], strides = [1, 1]} : vector<24x64xf32> to vector<8x64xf32>
    %142 = arith.mulf %128, %141 : vector<8x64xf32>
    %cst_47 = arith.constant dense<0.000000e+00> : vector<8xf32>
    %143 = vector.multi_reduction <add>, %142, %cst_47 [1] : vector<8x64xf32> to vector<8xf32>
    %144 = vector.shape_cast %143 : vector<8xf32> to vector<8x1xf32>
    %145 = vector.extract_strided_slice %127 {offsets = [8, 0], sizes = [8, 64], strides = [1, 1]} : vector<24x64xf32> to vector<8x64xf32>
    %146 = arith.mulf %128, %145 : vector<8x64xf32>
    %cst_48 = arith.constant dense<0.000000e+00> : vector<8xf32>
    %147 = vector.multi_reduction <add>, %146, %cst_48 [1] : vector<8x64xf32> to vector<8xf32>
    %148 = vector.shape_cast %147 : vector<8xf32> to vector<8x1xf32>
    %149 = tpu.concatenate %144, %148 in 1 : vector<8x1xf32>, vector<8x1xf32> -> vector<8x2xf32>
    %cst_49 = arith.constant dense<0xFF800000> : vector<8xf32>
    %150 = vector.multi_reduction <maximumf>, %149, %cst_49 [1] : vector<8x2xf32> to vector<8xf32>
    %151 = vector.shape_cast %150 : vector<8xf32> to vector<8x1xf32>
    %152 = vector.broadcast %151 : vector<8x1xf32> to vector<8x2xf32>
    %153 = arith.subf %149, %152 : vector<8x2xf32>
    %154 = math.exp %153 : vector<8x2xf32>
    %cst_50 = arith.constant dense<0.000000e+00> : vector<8xf32>
    %155 = vector.multi_reduction <add>, %154, %cst_50 [1] : vector<8x2xf32> to vector<8xf32>
    %156 = vector.shape_cast %155 : vector<8xf32> to vector<8x1xf32>
    %157 = tpu.reciprocal %156 {approx = true} : vector<8x1xf32> -> vector<8x1xf32>
    %158 = vector.broadcast %157 : vector<8x1xf32> to vector<8x2xf32>
    %159 = arith.mulf %154, %158 : vector<8x2xf32>
    %c0_51 = arith.constant 0 : index
    %c0_52 = arith.constant 0 : index
    %c0_53 = arith.constant 0 : index
    %160 = vector.load %arg13[%c0_51, %c0_52, %c0_53] : memref<8x2x64xf32, #tpu.memory_space<vmem>>, vector<8x2x64xf32>
    %cst_54 = arith.constant 0.000000e+00 : f32
    %161 = vector.broadcast %cst_54 : f32 to vector<8x64xf32>
    %162 = vector.extract_strided_slice %159 {offsets = [0, 0], sizes = [8, 1], strides = [1, 1]} : vector<8x2xf32> to vector<8x1xf32>
    %163 = vector.extract_strided_slice %160 {offsets = [0, 0, 0], sizes = [8, 1, 64], strides = [1, 1, 1]} : vector<8x2x64xf32> to vector<8x1x64xf32>
    %164 = vector.shape_cast %163 : vector<8x1x64xf32> to vector<8x64xf32>
    %165 = vector.broadcast %162 : vector<8x1xf32> to vector<8x64xf32>
    %166 = arith.mulf %165, %164 : vector<8x64xf32>
    %167 = arith.addf %161, %166 : vector<8x64xf32>
    %168 = vector.extract_strided_slice %159 {offsets = [0, 1], sizes = [8, 1], strides = [1, 1]} : vector<8x2xf32> to vector<8x1xf32>
    %169 = vector.extract_strided_slice %160 {offsets = [0, 1, 0], sizes = [8, 1, 64], strides = [1, 1, 1]} : vector<8x2x64xf32> to vector<8x1x64xf32>
    %170 = vector.shape_cast %169 : vector<8x1x64xf32> to vector<8x64xf32>
    %171 = vector.broadcast %168 : vector<8x1xf32> to vector<8x64xf32>
    %172 = arith.mulf %171, %170 : vector<8x64xf32>
    %173 = arith.addf %167, %172 : vector<8x64xf32>
    %cst_55 = arith.constant dense<0.000000e+00> : vector<8x64xf32>
    %174 = tpu.matmul %173, %16, %cst_55 {dimension_numbers = #tpu.dot_dimension_numbers<[1], [0], [0], [1], [0, 0, 1, 1], [], []>} : vector<8x64xf32>, vector<64x64xf32>, vector<8x64xf32> -> vector<8x64xf32>
    %cst_56 = arith.constant 0.000000e+00 : f32
    %175 = vector.broadcast %cst_56 : f32 to vector<8x64xf32>
    %176 = arith.maximumf %128, %175 : vector<8x64xf32>
    %cst_57 = arith.constant 0.000000e+00 : f32
    %177 = vector.broadcast %cst_57 : f32 to vector<8x64xf32>
    %178 = arith.maximumf %140, %177 : vector<8x64xf32>
    %cst_58 = arith.constant 0.000000e+00 : f32
    %179 = vector.broadcast %cst_58 : f32 to vector<8x64xf32>
    %180 = arith.maximumf %174, %179 : vector<8x64xf32>
    %181 = tpu.concatenate %176, %178, %180 in 1 : vector<8x64xf32>, vector<8x64xf32>, vector<8x64xf32> -> vector<8x192xf32>
    %c0_59 = arith.constant 0 : index
    %c0_60 = arith.constant 0 : index
    %182 = vector.load %arg14[%c0_59, %c0_60] : memref<192x128xbf16, #tpu.memory_space<vmem>>, vector<192x128xbf16>
    %183 = arith.extf %182 : vector<192x128xbf16> to vector<192x128xf32>
    %cst_61 = arith.constant dense<0.000000e+00> : vector<8x128xf32>
    %184 = tpu.matmul %181, %183, %cst_61 {dimension_numbers = #tpu.dot_dimension_numbers<[1], [0], [0], [1], [0, 0, 1, 1], [], []>} : vector<8x192xf32>, vector<192x128xf32>, vector<8x128xf32> -> vector<8x128xf32>
    %c0_62 = arith.constant 0 : index
    %c0_63 = arith.constant 0 : index
    %185 = vector.load %arg15[%c0_62, %c0_63] : memref<1x128xf32, #tpu.memory_space<vmem>>, vector<1x128xf32>
    %186 = vector.broadcast %185 : vector<1x128xf32> to vector<8x128xf32>
    %187 = arith.addf %184, %186 : vector<8x128xf32>
    %cst_64 = arith.constant 0.000000e+00 : f32
    %188 = vector.broadcast %cst_64 : f32 to vector<8x128xf32>
    %189 = arith.maximumf %187, %188 : vector<8x128xf32>
    %c0_65 = arith.constant 0 : index
    %c0_66 = arith.constant 0 : index
    %190 = vector.load %arg16[%c0_65, %c0_66] : memref<128x64xbf16, #tpu.memory_space<vmem>>, vector<128x64xbf16>
    %191 = arith.extf %190 : vector<128x64xbf16> to vector<128x64xf32>
    %cst_67 = arith.constant dense<0.000000e+00> : vector<8x64xf32>
    %192 = tpu.matmul %189, %191, %cst_67 {dimension_numbers = #tpu.dot_dimension_numbers<[1], [0], [0], [1], [0, 0, 1, 1], [], []>} : vector<8x128xf32>, vector<128x64xf32>, vector<8x64xf32> -> vector<8x64xf32>
    %c0_68 = arith.constant 0 : index
    %c0_69 = arith.constant 0 : index
    %193 = vector.load %arg17[%c0_68, %c0_69] : memref<1x64xf32, #tpu.memory_space<vmem>>, vector<1x64xf32>
    %194 = vector.broadcast %193 : vector<1x64xf32> to vector<8x64xf32>
    %195 = arith.addf %192, %194 : vector<8x64xf32>
    %c0_70 = arith.constant 0 : index
    %c0_71 = arith.constant 0 : index
    %196 = vector.load %arg18[%c0_70, %c0_71] : memref<8x64xf32, #tpu.memory_space<vmem>>, vector<8x64xf32>
    tpu.vector_store %arg18[%c0_70, %c0_71], %195 {strides = array<i32>} : memref<8x64xf32, #tpu.memory_space<vmem>>, vector<8x64xf32>,
    return
  }
  func.func @transform_0(%arg0: i32) -> (i32, i32, i32) {
    %c0_i32 = arith.constant 0 : i32
    %c0_i32_0 = arith.constant 0 : i32
    %c0_i32_1 = arith.constant 0 : i32
    return %c0_i32, %arg0, %c0_i32_0 : i32, i32, i32
  }
  func.func @transform_1(%arg0: i32) -> (i32, i32) {
    %c0_i32 = arith.constant 0 : i32
    %c0_i32_0 = arith.constant 0 : i32
    %c0_i32_1 = arith.constant 0 : i32
    return %c0_i32, %c0_i32_0 : i32, i32
  }
  func.func @transform_2(%arg0: i32) -> (i32, i32) {
    %c0_i32 = arith.constant 0 : i32
    %c0_i32_0 = arith.constant 0 : i32
    %c0_i32_1 = arith.constant 0 : i32
    return %c0_i32, %c0_i32_0 : i32, i32
  }
  func.func @transform_3(%arg0: i32) -> (i32, i32) {
    %c0_i32 = arith.constant 0 : i32
    %c0_i32_0 = arith.constant 0 : i32
    %c0_i32_1 = arith.constant 0 : i32
    return %c0_i32, %c0_i32_0 : i32, i32
  }
  func.func @transform_4(%arg0: i32) -> (i32, i32) {
    %c0_i32 = arith.constant 0 : i32
    %c0_i32_0 = arith.constant 0 : i32
    %c0_i32_1 = arith.constant 0 : i32
    return %c0_i32, %c0_i32_0 : i32, i32
  }
  func.func @transform_5(%arg0: i32) -> (i32, i32) {
    %c0_i32 = arith.constant 0 : i32
    %c0_i32_0 = arith.constant 0 : i32
    %c0_i32_1 = arith.constant 0 : i32
    return %c0_i32, %c0_i32_0 : i32, i32
  }
  func.func @transform_6(%arg0: i32) -> (i32, i32) {
    %c0_i32 = arith.constant 0 : i32
    %c0_i32_0 = arith.constant 0 : i32
    %c0_i32_1 = arith.constant 0 : i32
    return %c0_i32, %c0_i32_0 : i32, i32
  }
  func.func @transform_7(%arg0: i32) -> (i32, i32) {
    %c0_i32 = arith.constant 0 : i32
    %c0_i32_0 = arith.constant 0 : i32
    %c0_i32_1 = arith.constant 0 : i32
    return %c0_i32, %c0_i32_0 : i32, i32
  }
  func.func @transform_8(%arg0: i32) -> (i32, i32) {
    %c0_i32 = arith.constant 0 : i32
    %c0_i32_0 = arith.constant 0 : i32
    %c0_i32_1 = arith.constant 0 : i32
    return %c0_i32, %c0_i32_0 : i32, i32
  }
  func.func @transform_9(%arg0: i32) -> (i32, i32) {
    %c0_i32 = arith.constant 0 : i32
    %c0_i32_0 = arith.constant 0 : i32
    %c0_i32_1 = arith.constant 0 : i32
    return %c0_i32, %c0_i32_0 : i32, i32
  }
  func.func @transform_10(%arg0: i32) -> (i32, i32) {
    %c0_i32 = arith.constant 0 : i32
    %c0_i32_0 = arith.constant 0 : i32
    %c0_i32_1 = arith.constant 0 : i32
    return %c0_i32, %c0_i32_0 : i32, i32
  }
  func.func @transform_11(%arg0: i32) -> (i32, i32) {
    %c0_i32 = arith.constant 0 : i32
    %c0_i32_0 = arith.constant 0 : i32
    %c0_i32_1 = arith.constant 0 : i32
    return %c0_i32, %c0_i32_0 : i32, i32
  }
  func.func @transform_12(%arg0: i32) -> (i32, i32, i32) {
    %c0_i32 = arith.constant 0 : i32
    %c0_i32_0 = arith.constant 0 : i32
    %c0_i32_1 = arith.constant 0 : i32
    return %arg0, %c0_i32, %c0_i32_0 : i32, i32, i32
  }
  func.func @transform_13(%arg0: i32) -> (i32, i32) {
    %c0_i32 = arith.constant 0 : i32
    %c0_i32_0 = arith.constant 0 : i32
    %c0_i32_1 = arith.constant 0 : i32
    return %c0_i32, %c0_i32_0 : i32, i32
  }
  func.func @transform_14(%arg0: i32) -> (i32, i32) {
    %c0_i32 = arith.constant 0 : i32
    %c0_i32_0 = arith.constant 0 : i32
    %c0_i32_1 = arith.constant 0 : i32
    return %c0_i32, %c0_i32_0 : i32, i32
  }
  func.func @transform_15(%arg0: i32) -> (i32, i32) {
    %c0_i32 = arith.constant 0 : i32
    %c0_i32_0 = arith.constant 0 : i32
    %c0_i32_1 = arith.constant 0 : i32
    return %c0_i32, %c0_i32_0 : i32, i32
  }
  func.func @transform_16(%arg0: i32) -> (i32, i32) {
    %c0_i32 = arith.constant 0 : i32
    %c0_i32_0 = arith.constant 0 : i32
    %c0_i32_1 = arith.constant 0 : i32
    return %c0_i32, %c0_i32_0 : i32, i32
  }
  func.func @transform_17(%arg0: i32) -> (i32, i32) {
    %c0_i32 = arith.constant 0 : i32
    %c0_i32_0 = arith.constant 0 : i32
    return %arg0, %c0_i32 : i32, i32
  }
}

</mosaic_0001>

<llo_original>
// kernel: tpu_custom_call.1
$region0: #{tpu_custom_call.1}
  #allocation0 [shape = 'u32[]', space=smem, size = 0x4, offset = 0x4, fixed_abs, tag = 'smem constant byte address 0x4 - core index']
  #allocation1 [shape = 'u32[144,128]{1,0:T(1,128)}', space=vmem, size = 0x12000, scoped, tag = 'internal scratch']
  %s0 = inlined_call_operand.hbm [shape: f32[3,16,128], index: 0, kind: input, shape index: {}]
  %s1 = inlined_call_operand.hbm [shape: bf16[128,768], index: 1, kind: input, shape index: {}]
  %s2 = inlined_call_operand.hbm [shape: f32[1,768], index: 2, kind: input, shape index: {}]
  %s3 = inlined_call_operand.hbm [shape: bf16[256,768], index: 3, kind: input, shape index: {}]
  %s4 = inlined_call_operand.vmem [shape: f32[1,768], index: 4, kind: input, shape index: {}]
  %s5 = inlined_call_operand.vmem [shape: bf16[256,64], index: 5, kind: input, shape index: {}]
  %s6 = inlined_call_operand.vmem [shape: f32[1,64], index: 6, kind: input, shape index: {}]
  %s7 = inlined_call_operand.hbm [shape: f32[64,128], index: 7, kind: input, shape index: {}]
  %s8 = inlined_call_operand.vmem [shape: f32[128,128], index: 8, kind: input, shape index: {}]
  %s9 = inlined_call_operand.vmem [shape: f32[1,128], index: 9, kind: input, shape index: {}]
  %s10 = inlined_call_operand.vmem [shape: f32[128,128], index: 10, kind: input, shape index: {}]
  %s11 = inlined_call_operand.vmem [shape: f32[1,64], index: 11, kind: input, shape index: {}]
  %s12 = inlined_call_operand.vmem [shape: f32[16,2,64], index: 12, kind: input, shape index: {}]
  %s13 = inlined_call_operand.hbm [shape: bf16[192,128], index: 13, kind: input, shape index: {}]
  %s14 = inlined_call_operand.vmem [shape: f32[1,128], index: 14, kind: input, shape index: {}]
  %s15 = inlined_call_operand.vmem [shape: bf16[128,64], index: 15, kind: input, shape index: {}]
  %s16 = inlined_call_operand.vmem [shape: f32[1,64], index: 16, kind: input, shape index: {}]
  %s17 = inlined_call_operand.hbm [shape: f32[16,64], index: 17, kind: output, shape index: {}]
  %s18 = sld [smem:[#allocation0]]
  $region125: #{tpu_custom_call.1} parent=0
    _
  %s20 = ssub.s32 1, %s18
  %s21 = scalar_select 0, %s20, %s18
  $region1: #{tpu_custom_call.1} parent=0
    #allocation2 [shape = 'u8[24576]{0}', space=vmem, size = 0x6000, scoped, tag = 'input window, operand 0']
    #allocation3 [shape = 's32[2]{0}', space=sflag, size = 0x8, scoped, tag = 'scoped memory for tpu_custom_call.1']
    #allocation4 [shape = 's32[2]{0}', space=sflag, size = 0x8, scoped, tag = 'scoped memory for tpu_custom_call.1']
    #allocation5 [shape = 'u8[196608]{0}', space=vmem, size = 0x30000, scoped, tag = 'input window, operand 1, single buffered']
    #allocation6 [shape = 's32[1]{0}', space=sflag, size = 0x4, scoped, tag = 'scoped memory for tpu_custom_call.1']
    #allocation7 [shape = 'u8[3072]{0}', space=vmem, size = 0xc00, scoped, tag = 'input window, operand 2, single buffered']
    #allocation8 [shape = 'u8[393216]{0}', space=vmem, size = 0x60000, scoped, tag = 'input window, operand 3, single buffered']
    #allocation9 [shape = 's32[1]{0}', space=sflag, size = 0x4, scoped, tag = 'scoped memory for tpu_custom_call.1']
    #allocation10 [shape = 'u8[32768]{0}', space=vmem, size = 0x8000, scoped, tag = 'input window, operand 7, single buffered']
    #allocation11 [shape = 'u8[49152]{0}', space=vmem, size = 0xc000, scoped, tag = 'input window, operand 13, single buffered']
    #allocation12 [shape = 's32[1]{0}', space=sflag, size = 0x4, scoped, tag = 'scoped memory for tpu_custom_call.1']
    #allocation13 [shape = 'u8[8192]{0}', space=vmem, size = 0x2000, scoped, tag = 'output window, operand 0']
    %22 = vsyncpa [#allocation3], 0
    %s23 = scalar_lea.sflag [#allocation3], 1
    %24 = vsyncpa %s23, 0
    %25 = vsyncpa [#allocation6], 0
    %26 = vsyncpa [#allocation9], 0
    %27 = vsyncpa [#allocation12], 0
    %28 = vsyncpa [#allocation4], 0
    %s29 = scalar_lea.sflag [#allocation4], 1
    %30 = vsyncpa %s29, 0
    loop: start=0, step=1, limit=4
    $region2: #{tpu_custom_call.1} parent=1 // loop_pre_header
      _
    $region3: #{tpu_custom_call.1} parent=1 // loop_header
      %s32 = sphi 0, %s36
      %p33 = scmp.ge.s32.totalorder %s32, 4
      %s42 = sphi 0, %s44
      %s45 = sphi 0, %s42
      %s46 = sphi 0, %s45
      %s62 = sphi 0, %s46
      %s66 = sphi 0, %s66
      %s68 = sphi 0, %s66
      %s69 = sphi 0, %s68
      %s83 = sphi 0, %s69
      %s87 = sphi 0, %s87
      %s89 = sphi 0, %s87
      %s90 = sphi 0, %s89
      %s104 = sphi 0, %s90
      %s108 = sphi 0, %s108
      %s110 = sphi 0, %s108
      %s111 = sphi 0, %s110
      %s125 = sphi 0, %s111
      %s129 = sphi 0, %s129
      %s131 = sphi 0, %s129
      %s132 = sphi 0, %s131
      %s146 = sphi 0, %s132
      %s150 = sphi 0, %s150
      %s152 = sphi 0, %s150
      %s153 = sphi 0, %s152
      %s167 = sphi 0, %s153
      %s171 = sphi 0, %s171
      %s173 = sphi 0, %s171
      %s174 = sphi 0, %s173
      %s188 = sphi 0, %s174
      %s192 = sphi 0, %s192
      %s194 = sphi 0, %s192
      %s195 = sphi 0, %s194
      %s209 = sphi 0, %s195
      %s213 = sphi 0, %s213
      %s215 = sphi 0, %s213
      %s216 = sphi 0, %s215
      %s230 = sphi 0, %s216
      %s234 = sphi 0, %s234
      %s236 = sphi 0, %s234
      %s237 = sphi 0, %s236
      %s251 = sphi 0, %s237
      %s255 = sphi 0, %s255
      %s257 = sphi 0, %s255
      %s258 = sphi 0, %s257
      %s272 = sphi 0, %s258
      %s276 = sphi 0, %s276
      %s278 = sphi 0, %s276
      %s279 = sphi 0, %s278
      %s293 = sphi 0, %s279
      %s299 = sphi 0, %s301
      %s302 = sphi 0, %s299
      %s303 = sphi 0, %s302
      %s319 = sphi 0, %s303
      %s323 = sphi 0, %s323
      %s325 = sphi 0, %s323
      %s326 = sphi 0, %s325
      %s340 = sphi 0, %s326
      %s344 = sphi 0, %s344
      %s346 = sphi 0, %s344
      %s347 = sphi 0, %s346
      %s361 = sphi 0, %s347
      %s365 = sphi 0, %s365
      %s367 = sphi 0, %s365
      %s368 = sphi 0, %s367
      %s382 = sphi 0, %s368
      %s386 = sphi 0, %s386
      %s388 = sphi 0, %s386
      %s389 = sphi 0, %s388
      %s403 = sphi 0, %s389
      %s409 = sphi 0, %s411
      %s412 = sphi 0, %s409
      %s413 = sphi 0, %s412
      %s429 = sphi 0, %s413
    $region4: #{tpu_custom_call.1} parent=1 // loop_header_branch
      %35 = sbr.rel (%p33) target = $region8
    $region5: #{tpu_custom_call.1} parent=1 // loop_body
      %s37 = ssub.s32 %s32, 1
      %s38 = ssub.s32 %s32, 2
      %s39 = sadd.s32 %s32, 1
      %s40 = ssub.s32 %s32, %s39
      %p41 = scmp.eq.s32.totalorder %s40, 0
      %s43 = sadd.s32 %s42, 1
      %s44 = scalar_select %p41, %s42, %s43
      %p47 = pneg %p41
      %p48 = scmp.eq.s32.totalorder %s32, 1
      %p49 = por %p47, %p48
      %p50 = scmp.ne.s32.totalorder %s42, %s45
      %p51 = scmp.eq.s32.totalorder %s32, 0
      %p52 = por %p50, %p51
      %p53 = scmp.ne.s32.totalorder %s42, %s45
      %p54 = scmp.eq.s32.totalorder %s37, 1
      %p55 = por %p53, %p54
      %p56 = scmp.ne.s32.totalorder %s45, %s46
      %p57 = scmp.eq.s32.totalorder %s37, 0
      %p58 = por %p56, %p57
      %p59 = scmp.ne.s32.totalorder %s45, %s46
      %p60 = scmp.eq.s32.totalorder %s38, 1
      %p61 = por %p59, %p60
      %p63 = scmp.ne.s32.totalorder %s46, %s62
      %p64 = scmp.eq.s32.totalorder %s38, 0
      %p65 = por %p63, %p64
      %s67 = sadd.s32 %s66, 1
      %p70 = scmp.eq.s32.totalorder %s32, 1
      %p71 = scmp.ne.s32.totalorder %s66, %s68
      %p72 = scmp.eq.s32.totalorder %s32, 0
      %p73 = por %p71, %p72
      %p74 = scmp.ne.s32.totalorder %s66, %s68
      %p75 = scmp.eq.s32.totalorder %s37, 1
      %p76 = por %p74, %p75
      %p77 = scmp.ne.s32.totalorder %s68, %s69
      %p78 = scmp.eq.s32.totalorder %s37, 0
      %p79 = por %p77, %p78
      %p80 = scmp.ne.s32.totalorder %s68, %s69
      %p81 = scmp.eq.s32.totalorder %s38, 1
      %p82 = por %p80, %p81
      %p84 = scmp.ne.s32.totalorder %s69, %s83
      %p85 = scmp.eq.s32.totalorder %s38, 0
      %p86 = por %p84, %p85
      %s88 = sadd.s32 %s87, 1
      %p91 = scmp.eq.s32.totalorder %s32, 1
      %p92 = scmp.ne.s32.totalorder %s87, %s89
      %p93 = scmp.eq.s32.totalorder %s32, 0
      %p94 = por %p92, %p93
      %p95 = scmp.ne.s32.totalorder %s87, %s89
      %p96 = scmp.eq.s32.totalorder %s37, 1
      %p97 = por %p95, %p96
      %p98 = scmp.ne.s32.totalorder %s89, %s90
      %p99 = scmp.eq.s32.totalorder %s37, 0
      %p100 = por %p98, %p99
      %p101 = scmp.ne.s32.totalorder %s89, %s90
      %p102 = scmp.eq.s32.totalorder %s38, 1
      %p103 = por %p101, %p102
      %p105 = scmp.ne.s32.totalorder %s90, %s104
      %p106 = scmp.eq.s32.totalorder %s38, 0
      %p107 = por %p105, %p106
      %s109 = sadd.s32 %s108, 1
      %p112 = scmp.eq.s32.totalorder %s32, 1
      %p113 = scmp.ne.s32.totalorder %s108, %s110
      %p114 = scmp.eq.s32.totalorder %s32, 0
      %p115 = por %p113, %p114
      %p116 = scmp.ne.s32.totalorder %s108, %s110
      %p117 = scmp.eq.s32.totalorder %s37, 1
      %p118 = por %p116, %p117
      %p119 = scmp.ne.s32.totalorder %s110, %s111
      %p120 = scmp.eq.s32.totalorder %s37, 0
      %p121 = por %p119, %p120
      %p122 = scmp.ne.s32.totalorder %s110, %s111
      %p123 = scmp.eq.s32.totalorder %s38, 1
      %p124 = por %p122, %p123
      %p126 = scmp.ne.s32.totalorder %s111, %s125
      %p127 = scmp.eq.s32.totalorder %s38, 0
      %p128 = por %p126, %p127
      %s130 = sadd.s32 %s129, 1
      %p133 = scmp.eq.s32.totalorder %s32, 1
      %p134 = scmp.ne.s32.totalorder %s129, %s131
      %p135 = scmp.eq.s32.totalorder %s32, 0
      %p136 = por %p134, %p135
      %p137 = scmp.ne.s32.totalorder %s129, %s131
      %p138 = scmp.eq.s32.totalorder %s37, 1
      %p139 = por %p137, %p138
      %p140 = scmp.ne.s32.totalorder %s131, %s132
      %p141 = scmp.eq.s32.totalorder %s37, 0
      %p142 = por %p140, %p141
      %p143 = scmp.ne.s32.totalorder %s131, %s132
      %p144 = scmp.eq.s32.totalorder %s38, 1
      %p145 = por %p143, %p144
      %p147 = scmp.ne.s32.totalorder %s132, %s146
      %p148 = scmp.eq.s32.totalorder %s38, 0
      %p149 = por %p147, %p148
      %s151 = sadd.s32 %s150, 1
      %p154 = scmp.eq.s32.totalorder %s32, 1
      %p155 = scmp.ne.s32.totalorder %s150, %s152
      %p156 = scmp.eq.s32.totalorder %s32, 0
      %p157 = por %p155, %p156
      %p158 = scmp.ne.s32.totalorder %s150, %s152
      %p159 = scmp.eq.s32.totalorder %s37, 1
      %p160 = por %p158, %p159
      %p161 = scmp.ne.s32.totalorder %s152, %s153
      %p162 = scmp.eq.s32.totalorder %s37, 0
      %p163 = por %p161, %p162
      %p164 = scmp.ne.s32.totalorder %s152, %s153
      %p165 = scmp.eq.s32.totalorder %s38, 1
      %p166 = por %p164, %p165
      %p168 = scmp.ne.s32.totalorder %s153, %s167
      %p169 = scmp.eq.s32.totalorder %s38, 0
      %p170 = por %p168, %p169
      %s172 = sadd.s32 %s171, 1
      %p175 = scmp.eq.s32.totalorder %s32, 1
      %p176 = scmp.ne.s32.totalorder %s171, %s173
      %p177 = scmp.eq.s32.totalorder %s32, 0
      %p178 = por %p176, %p177
      %p179 = scmp.ne.s32.totalorder %s171, %s173
      %p180 = scmp.eq.s32.totalorder %s37, 1
      %p181 = por %p179, %p180
      %p182 = scmp.ne.s32.totalorder %s173, %s174
      %p183 = scmp.eq.s32.totalorder %s37, 0
      %p184 = por %p182, %p183
      %p185 = scmp.ne.s32.totalorder %s173, %s174
      %p186 = scmp.eq.s32.totalorder %s38, 1
      %p187 = por %p185, %p186
      %p189 = scmp.ne.s32.totalorder %s174, %s188
      %p190 = scmp.eq.s32.totalorder %s38, 0
      %p191 = por %p189, %p190
      %s193 = sadd.s32 %s192, 1
      %p196 = scmp.eq.s32.totalorder %s32, 1
      %p197 = scmp.ne.s32.totalorder %s192, %s194
      %p198 = scmp.eq.s32.totalorder %s32, 0
      %p199 = por %p197, %p198
      %p200 = scmp.ne.s32.totalorder %s192, %s194
      %p201 = scmp.eq.s32.totalorder %s37, 1
      %p202 = por %p200, %p201
      %p203 = scmp.ne.s32.totalorder %s194, %s195
      %p204 = scmp.eq.s32.totalorder %s37, 0
      %p205 = por %p203, %p204
      %p206 = scmp.ne.s32.totalorder %s194, %s195
      %p207 = scmp.eq.s32.totalorder %s38, 1
      %p208 = por %p206, %p207
      %p210 = scmp.ne.s32.totalorder %s195, %s209
      %p211 = scmp.eq.s32.totalorder %s38, 0
      %p212 = por %p210, %p211
      %s214 = sadd.s32 %s213, 1
      %p217 = scmp.eq.s32.totalorder %s32, 1
      %p218 = scmp.ne.s32.totalorder %s213, %s215
      %p219 = scmp.eq.s32.totalorder %s32, 0
      %p220 = por %p218, %p219
      %p221 = scmp.ne.s32.totalorder %s213, %s215
      %p222 = scmp.eq.s32.totalorder %s37, 1
      %p223 = por %p221, %p222
      %p224 = scmp.ne.s32.totalorder %s215, %s216
      %p225 = scmp.eq.s32.totalorder %s37, 0
      %p226 = por %p224, %p225
      %p227 = scmp.ne.s32.totalorder %s215, %s216
      %p228 = scmp.eq.s32.totalorder %s38, 1
      %p229 = por %p227, %p228
      %p231 = scmp.ne.s32.totalorder %s216, %s230
      %p232 = scmp.eq.s32.totalorder %s38, 0
      %p233 = por %p231, %p232
      %s235 = sadd.s32 %s234, 1
      %p238 = scmp.eq.s32.totalorder %s32, 1
      %p239 = scmp.ne.s32.totalorder %s234, %s236
      %p240 = scmp.eq.s32.totalorder %s32, 0
      %p241 = por %p239, %p240
      %p242 = scmp.ne.s32.totalorder %s234, %s236
      %p243 = scmp.eq.s32.totalorder %s37, 1
      %p244 = por %p242, %p243
      %p245 = scmp.ne.s32.totalorder %s236, %s237
      %p246 = scmp.eq.s32.totalorder %s37, 0
      %p247 = por %p245, %p246
      %p248 = scmp.ne.s32.totalorder %s236, %s237
      %p249 = scmp.eq.s32.totalorder %s38, 1
      %p250 = por %p248, %p249
      %p252 = scmp.ne.s32.totalorder %s237, %s251
      %p253 = scmp.eq.s32.totalorder %s38, 0
      %p254 = por %p252, %p253
      %s256 = sadd.s32 %s255, 1
      %p259 = scmp.eq.s32.totalorder %s32, 1
      %p260 = scmp.ne.s32.totalorder %s255, %s257
      %p261 = scmp.eq.s32.totalorder %s32, 0
      %p262 = por %p260, %p261
      %p263 = scmp.ne.s32.totalorder %s255, %s257
      %p264 = scmp.eq.s32.totalorder %s37, 1
      %p265 = por %p263, %p264
      %p266 = scmp.ne.s32.totalorder %s257, %s258
      %p267 = scmp.eq.s32.totalorder %s37, 0
      %p268 = por %p266, %p267
      %p269 = scmp.ne.s32.totalorder %s257, %s258
      %p270 = scmp.eq.s32.totalorder %s38, 1
      %p271 = por %p269, %p270
      %p273 = scmp.ne.s32.totalorder %s258, %s272
      %p274 = scmp.eq.s32.totalorder %s38, 0
      %p275 = por %p273, %p274
      %s277 = sadd.s32 %s276, 1
      %p280 = scmp.eq.s32.totalorder %s32, 1
      %p281 = scmp.ne.s32.totalorder %s276, %s278
      %p282 = scmp.eq.s32.totalorder %s32, 0
      %p283 = por %p281, %p282
      %p284 = scmp.ne.s32.totalorder %s276, %s278
      %p285 = scmp.eq.s32.totalorder %s37, 1
      %p286 = por %p284, %p285
      %p287 = scmp.ne.s32.totalorder %s278, %s279
      %p288 = scmp.eq.s32.totalorder %s37, 0
      %p289 = por %p287, %p288
      %p290 = scmp.ne.s32.totalorder %s278, %s279
      %p291 = scmp.eq.s32.totalorder %s38, 1
      %p292 = por %p290, %p291
      %p294 = scmp.ne.s32.totalorder %s279, %s293
      %p295 = scmp.eq.s32.totalorder %s38, 0
      %p296 = por %p294, %p295
      %s297 = ssub.s32 %s32, %s39
      %p298 = scmp.eq.s32.totalorder %s297, 0
      %s300 = sadd.s32 %s299, 1
      %s301 = scalar_select %p298, %s299, %s300
      %p304 = pneg %p298
      %p305 = scmp.eq.s32.totalorder %s32, 1
      %p306 = por %p304, %p305
      %p307 = scmp.ne.s32.totalorder %s299, %s302
      %p308 = scmp.eq.s32.totalorder %s32, 0
      %p309 = por %p307, %p308
      %p310 = scmp.ne.s32.totalorder %s299, %s302
      %p311 = scmp.eq.s32.totalorder %s37, 1
      %p312 = por %p310, %p311
      %p313 = scmp.ne.s32.totalorder %s302, %s303
      %p314 = scmp.eq.s32.totalorder %s37, 0
      %p315 = por %p313, %p314
      %p316 = scmp.ne.s32.totalorder %s302, %s303
      %p317 = scmp.eq.s32.totalorder %s38, 1
      %p318 = por %p316, %p317
      %p320 = scmp.ne.s32.totalorder %s303, %s319
      %p321 = scmp.eq.s32.totalorder %s38, 0
      %p322 = por %p320, %p321
      %s324 = sadd.s32 %s323, 1
      %p327 = scmp.eq.s32.totalorder %s32, 1
      %p328 = scmp.ne.s32.totalorder %s323, %s325
      %p329 = scmp.eq.s32.totalorder %s32, 0
      %p330 = por %p328, %p329
      %p331 = scmp.ne.s32.totalorder %s323, %s325
      %p332 = scmp.eq.s32.totalorder %s37, 1
      %p333 = por %p331, %p332
      %p334 = scmp.ne.s32.totalorder %s325, %s326
      %p335 = scmp.eq.s32.totalorder %s37, 0
      %p336 = por %p334, %p335
      %p337 = scmp.ne.s32.totalorder %s325, %s326
      %p338 = scmp.eq.s32.totalorder %s38, 1
      %p339 = por %p337, %p338
      %p341 = scmp.ne.s32.totalorder %s326, %s340
      %p342 = scmp.eq.s32.totalorder %s38, 0
      %p343 = por %p341, %p342
      %s345 = sadd.s32 %s344, 1
      %p348 = scmp.eq.s32.totalorder %s32, 1
      %p349 = scmp.ne.s32.totalorder %s344, %s346
      %p350 = scmp.eq.s32.totalorder %s32, 0
      %p351 = por %p349, %p350
      %p352 = scmp.ne.s32.totalorder %s344, %s346
      %p353 = scmp.eq.s32.totalorder %s37, 1
      %p354 = por %p352, %p353
      %p355 = scmp.ne.s32.totalorder %s346, %s347
      %p356 = scmp.eq.s32.totalorder %s37, 0
      %p357 = por %p355, %p356
      %p358 = scmp.ne.s32.totalorder %s346, %s347
      %p359 = scmp.eq.s32.totalorder %s38, 1
      %p360 = por %p358, %p359
      %p362 = scmp.ne.s32.totalorder %s347, %s361
      %p363 = scmp.eq.s32.totalorder %s38, 0
      %p364 = por %p362, %p363
      %s366 = sadd.s32 %s365, 1
      %p369 = scmp.eq.s32.totalorder %s32, 1
      %p370 = scmp.ne.s32.totalorder %s365, %s367
      %p371 = scmp.eq.s32.totalorder %s32, 0
      %p372 = por %p370, %p371
      %p373 = scmp.ne.s32.totalorder %s365, %s367
      %p374 = scmp.eq.s32.totalorder %s37, 1
      %p375 = por %p373, %p374
      %p376 = scmp.ne.s32.totalorder %s367, %s368
      %p377 = scmp.eq.s32.totalorder %s37, 0
      %p378 = por %p376, %p377
      %p379 = scmp.ne.s32.totalorder %s367, %s368
      %p380 = scmp.eq.s32.totalorder %s38, 1
      %p381 = por %p379, %p380
      %p383 = scmp.ne.s32.totalorder %s368, %s382
      %p384 = scmp.eq.s32.totalorder %s38, 0
      %p385 = por %p383, %p384
      %s387 = sadd.s32 %s386, 1
      %p390 = scmp.eq.s32.totalorder %s32, 1
      %p391 = scmp.ne.s32.totalorder %s386, %s388
      %p392 = scmp.eq.s32.totalorder %s32, 0
      %p393 = por %p391, %p392
      %p394 = scmp.ne.s32.totalorder %s386, %s388
      %p395 = scmp.eq.s32.totalorder %s37, 1
      %p396 = por %p394, %p395
      %p397 = scmp.ne.s32.totalorder %s388, %s389
      %p398 = scmp.eq.s32.totalorder %s37, 0
      %p399 = por %p397, %p398
      %p400 = scmp.ne.s32.totalorder %s388, %s389
      %p401 = scmp.eq.s32.totalorder %s38, 1
      %p402 = por %p400, %p401
      %p404 = scmp.ne.s32.totalorder %s389, %s403
      %p405 = scmp.eq.s32.totalorder %s38, 0
      %p406 = por %p404, %p405
      %s407 = ssub.s32 %s32, %s39
      %p408 = scmp.eq.s32.totalorder %s407, 0
      %s410 = sadd.s32 %s409, 1
      %s411 = scalar_select %p408, %s409, %s410
      %p414 = pneg %p408
      %p415 = scmp.eq.s32.totalorder %s32, 1
      %p416 = por %p414, %p415
      %p417 = scmp.ne.s32.totalorder %s409, %s412
      %p418 = scmp.eq.s32.totalorder %s32, 0
      %p419 = por %p417, %p418
      %p420 = scmp.ne.s32.totalorder %s409, %s412
      %p421 = scmp.eq.s32.totalorder %s37, 1
      %p422 = por %p420, %p421
      %p423 = scmp.ne.s32.totalorder %s412, %s413
      %p424 = scmp.eq.s32.totalorder %s37, 0
      %p425 = por %p423, %p424
      %p426 = scmp.ne.s32.totalorder %s412, %s413
      %p427 = scmp.eq.s32.totalorder %s38, 1
      %p428 = por %p426, %p427
      %p430 = scmp.ne.s32.totalorder %s413, %s429
      %p431 = scmp.eq.s32.totalorder %s38, 0
      %p432 = por %p430, %p431
      %p433 = scmp.le.s32.totalorder 1, %s32
      %p434 = scmp.lt.s32.totalorder %s32, 3
      %p435 = pnand %p433, %p434
      %p436 = pneg %p435
      // Predicated region
      $region9: #{tpu_custom_call.1} parent=5 // pred_check
        _
      $region10: #{tpu_custom_call.1} parent=5 // pred_check_branch
        %438 = sbr.rel (%p435) target = $region12
      $region11: #{tpu_custom_call.1} parent=5 // pred_region
        %s439 = ssub.s32 %s32, 1
        // Predicated region
        $region13: #{tpu_custom_call.1} parent=11 // pred_check
          %p440 = pneg %p79
        $region14: #{tpu_custom_call.1} parent=11 // pred_check_branch
          %442 = sbr.rel (%p440) target = $region16
        $region15: #{tpu_custom_call.1} parent=11 // pred_region
          %s444 = ssub.s32 6144, 6144
          %445 = vsyncadd [#allocation6], %s444
          %s446 = sshll.u32 [#allocation5], 4
          %s447 = int_to_ptr.vmem [resolvable:$true] %s446
          %452 = dma.hbm_to_vmem [thread:$0]  %s1, 6144, %s447, [#allocation6], 384, 384, 24
        $region16: #{tpu_custom_call.1} parent=11 // pred_fallthru
          _
        // Predicated region
        $region17: #{tpu_custom_call.1} parent=11 // pred_check
          %p453 = pneg %p100
        $region18: #{tpu_custom_call.1} parent=11 // pred_check_branch
          %455 = sbr.rel (%p453) target = $region20
        $region19: #{tpu_custom_call.1} parent=11 // pred_region
          %s457 = ssub.s32 96, 96
          %458 = vsyncadd [#allocation6], %s457
          %s460 = sshll.u32 [#allocation7], 4
          %s461 = int_to_ptr.vmem [resolvable:$true] %s460
          %463 = dma.hbm_to_vmem [thread:$0]  %s2, 96, %s461, [#allocation6]
        $region20: #{tpu_custom_call.1} parent=11 // pred_fallthru
          _
        // Predicated region
        $region21: #{tpu_custom_call.1} parent=11 // pred_check
          %p464 = pneg %p121
        $region22: #{tpu_custom_call.1} parent=11 // pred_check_branch
          %466 = sbr.rel (%p464) target = $region24
        $region23: #{tpu_custom_call.1} parent=11 // pred_region
          %s468 = ssub.s32 12288, 12288
          %469 = vsyncadd [#allocation9], %s468
          %s470 = sshll.u32 [#allocation8], 4
          %s471 = int_to_ptr.vmem [resolvable:$true] %s470
          %476 = dma.hbm_to_vmem [thread:$0]  %s3, 12288, %s471, [#allocation9], 384, 384, 24
        $region24: #{tpu_custom_call.1} parent=11 // pred_fallthru
          _
        // Predicated region
        $region25: #{tpu_custom_call.1} parent=11 // pred_check
          %p477 = pneg %p142
        $region26: #{tpu_custom_call.1} parent=11 // pred_check_branch
          %479 = sbr.rel (%p477) target = $region28
        $region27: #{tpu_custom_call.1} parent=11 // pred_region
          _
        $region28: #{tpu_custom_call.1} parent=11 // pred_fallthru
          _
        // Predicated region
        $region29: #{tpu_custom_call.1} parent=11 // pred_check
          %p480 = pneg %p163
        $region30: #{tpu_custom_call.1} parent=11 // pred_check_branch
          %482 = sbr.rel (%p480) target = $region32
        $region31: #{tpu_custom_call.1} parent=11 // pred_region
          _
        $region32: #{tpu_custom_call.1} parent=11 // pred_fallthru
          _
        // Predicated region
        $region33: #{tpu_custom_call.1} parent=11 // pred_check
          %p483 = pneg %p184
        $region34: #{tpu_custom_call.1} parent=11 // pred_check_branch
          %485 = sbr.rel (%p483) target = $region36
        $region35: #{tpu_custom_call.1} parent=11 // pred_region
          _
        $region36: #{tpu_custom_call.1} parent=11 // pred_fallthru
          _
        // Predicated region
        $region37: #{tpu_custom_call.1} parent=11 // pred_check
          %p486 = pneg %p205
        $region38: #{tpu_custom_call.1} parent=11 // pred_check_branch
          %488 = sbr.rel (%p486) target = $region40
        $region39: #{tpu_custom_call.1} parent=11 // pred_region
          %s490 = ssub.s32 1024, 1024
          %491 = vsyncadd [#allocation9], %s490
          %s492 = sshll.u32 [#allocation10], 4
          %s493 = int_to_ptr.vmem [resolvable:$true] %s492
          %498 = dma.hbm_to_vmem [thread:$0]  %s7, 1024, %s493, [#allocation9], 128, 128, 8
        $region40: #{tpu_custom_call.1} parent=11 // pred_fallthru
          _
        // Predicated region
        $region41: #{tpu_custom_call.1} parent=11 // pred_check
          %p499 = pneg %p226
        $region42: #{tpu_custom_call.1} parent=11 // pred_check_branch
          %501 = sbr.rel (%p499) target = $region44
        $region43: #{tpu_custom_call.1} parent=11 // pred_region
          _
        $region44: #{tpu_custom_call.1} parent=11 // pred_fallthru
          _
        // Predicated region
        $region45: #{tpu_custom_call.1} parent=11 // pred_check
          %p502 = pneg %p247
        $region46: #{tpu_custom_call.1} parent=11 // pred_check_branch
          %504 = sbr.rel (%p502) target = $region48
        $region47: #{tpu_custom_call.1} parent=11 // pred_region
          _
        $region48: #{tpu_custom_call.1} parent=11 // pred_fallthru
          _
        // Predicated region
        $region49: #{tpu_custom_call.1} parent=11 // pred_check
          %p505 = pneg %p268
        $region50: #{tpu_custom_call.1} parent=11 // pred_check_branch
          %507 = sbr.rel (%p505) target = $region52
        $region51: #{tpu_custom_call.1} parent=11 // pred_region
          _
        $region52: #{tpu_custom_call.1} parent=11 // pred_fallthru
          _
        // Predicated region
        $region53: #{tpu_custom_call.1} parent=11 // pred_check
          %p508 = pneg %p289
        $region54: #{tpu_custom_call.1} parent=11 // pred_check_branch
          %510 = sbr.rel (%p508) target = $region56
        $region55: #{tpu_custom_call.1} parent=11 // pred_region
          _
        $region56: #{tpu_custom_call.1} parent=11 // pred_fallthru
          _
        // Predicated region
        $region57: #{tpu_custom_call.1} parent=11 // pred_check
          %p511 = pneg %p336
        $region58: #{tpu_custom_call.1} parent=11 // pred_check_branch
          %513 = sbr.rel (%p511) target = $region60
        $region59: #{tpu_custom_call.1} parent=11 // pred_region
          %s515 = ssub.s32 1536, 1536
          %516 = vsyncadd [#allocation12], %s515
          %s517 = sshll.u32 [#allocation11], 4
          %s518 = int_to_ptr.vmem [resolvable:$true] %s517
          %523 = dma.hbm_to_vmem [thread:$0]  %s13, 1536, %s518, [#allocation12], 64, 64, 4
        $region60: #{tpu_custom_call.1} parent=11 // pred_fallthru
          _
        // Predicated region
        $region61: #{tpu_custom_call.1} parent=11 // pred_check
          %p524 = pneg %p357
        $region62: #{tpu_custom_call.1} parent=11 // pred_check_branch
          %526 = sbr.rel (%p524) target = $region64
        $region63: #{tpu_custom_call.1} parent=11 // pred_region
          _
        $region64: #{tpu_custom_call.1} parent=11 // pred_fallthru
          _
        // Predicated region
        $region65: #{tpu_custom_call.1} parent=11 // pred_check
          %p527 = pneg %p378
        $region66: #{tpu_custom_call.1} parent=11 // pred_check_branch
          %529 = sbr.rel (%p527) target = $region68
        $region67: #{tpu_custom_call.1} parent=11 // pred_region
          _
        $region68: #{tpu_custom_call.1} parent=11 // pred_fallthru
          _
        // Predicated region
        $region69: #{tpu_custom_call.1} parent=11 // pred_check
          %p530 = pneg %p399
        $region70: #{tpu_custom_call.1} parent=11 // pred_check_branch
          %532 = sbr.rel (%p530) target = $region72
        $region71: #{tpu_custom_call.1} parent=11 // pred_region
          _
        $region72: #{tpu_custom_call.1} parent=11 // pred_fallthru
          _
      $region12: #{tpu_custom_call.1} parent=5 // pred_fallthru
        _
      %p533 = scmp.lt.s32.totalorder %s32, 2
      // Predicated region
      $region73: #{tpu_custom_call.1} parent=5 // pred_check
        %p534 = pneg %p533
      $region74: #{tpu_custom_call.1} parent=5 // pred_check_branch
        %536 = sbr.rel (%p534) target = $region76
      $region75: #{tpu_custom_call.1} parent=5 // pred_region
        // Predicated region
        $region77: #{tpu_custom_call.1} parent=75 // pred_check
          %p537 = pneg %p52
        $region78: #{tpu_custom_call.1} parent=75 // pred_check_branch
          %539 = sbr.rel (%p537) target = $region80
        $region79: #{tpu_custom_call.1} parent=75 // pred_region
          %s540 = sand.u32 %s42, 1
          %s541 = scalar_lea.sflag [#allocation3], %s540
          %s542 = sand.u32 %s42, 1
          %s543 = smul.addr %s542, 24
          %s544 = scalar_lea.vmem [#allocation2], %s543
          %s546 = ssub.s32 384, 384
          %547 = vsyncadd %s541, %s546
          %s548 = smul.addr %s32, 128
          %s549 = scalar_lea.hbm %s0, %s548
          %s550 = sshll.u32 %s544, 4
          %s551 = int_to_ptr.vmem [resolvable:$true] %s550
          %556 = dma.hbm_to_vmem [thread:$0]  %s549, 384, %s551, %s541, 256, 128, 8
        $region80: #{tpu_custom_call.1} parent=75 // pred_fallthru
          _
        // Predicated region
        $region81: #{tpu_custom_call.1} parent=75 // pred_check
          %p557 = pneg %p309
        $region82: #{tpu_custom_call.1} parent=75 // pred_check_branch
          %559 = sbr.rel (%p557) target = $region84
        $region83: #{tpu_custom_call.1} parent=75 // pred_region
          %s560 = smul.u32 8, %s32
          %p561 = scmp.lt.s32.totalorder %s560, 15
          %s562 = scalar_select %p561, %s560, 15
          %s563 = smul.addr %s562, 2
          %s564 = scalar_lea.vmem %s12, %s563
          %s565 = smul.u32 8, %s32
        $region84: #{tpu_custom_call.1} parent=75 // pred_fallthru
          _
      $region76: #{tpu_custom_call.1} parent=5 // pred_fallthru
        _
      %p566 = scmp.le.s32.totalorder 1, %s32
      %p567 = scmp.lt.s32.totalorder %s32, 3
      %p568 = pnand %p566, %p567
      %p569 = pneg %p568
      // Predicated region
      $region85: #{tpu_custom_call.1} parent=5 // pred_check
        _
      $region86: #{tpu_custom_call.1} parent=5 // pred_check_branch
        %571 = sbr.rel (%p568) target = $region88
      $region87: #{tpu_custom_call.1} parent=5 // pred_region
        %s572 = ssub.s32 %s32, 1
        %s573 = sand.u32 %s45, 1
        %s574 = scalar_lea.sflag [#allocation3], %s573
        %s575 = sand.u32 %s45, 1
        %s576 = smul.addr %s575, 24
        %s577 = scalar_lea.vmem [#allocation2], %s576
        // Predicated region
        $region89: #{tpu_custom_call.1} parent=87 // pred_check
          %p578 = pneg %p58
        $region90: #{tpu_custom_call.1} parent=87 // pred_check_branch
          %580 = sbr.rel (%p578) target = $region92
        $region91: #{tpu_custom_call.1} parent=87 // pred_region
          %581 = dma.done %s574, 384
        $region92: #{tpu_custom_call.1} parent=87 // pred_fallthru
          _
        // Predicated region
        $region93: #{tpu_custom_call.1} parent=87 // pred_check
          %p582 = pneg %p79
        $region94: #{tpu_custom_call.1} parent=87 // pred_check_branch
          %584 = sbr.rel (%p582) target = $region96
        $region95: #{tpu_custom_call.1} parent=87 // pred_region
          %585 = dma.done [#allocation6], 6144
        $region96: #{tpu_custom_call.1} parent=87 // pred_fallthru
          _
        // Predicated region
        $region97: #{tpu_custom_call.1} parent=87 // pred_check
          %p586 = pneg %p100
        $region98: #{tpu_custom_call.1} parent=87 // pred_check_branch
          %588 = sbr.rel (%p586) target = $region100
        $region99: #{tpu_custom_call.1} parent=87 // pred_region
          %589 = dma.done [#allocation6], 96
        $region100: #{tpu_custom_call.1} parent=87 // pred_fallthru
          _
        // Predicated region
        $region101: #{tpu_custom_call.1} parent=87 // pred_check
          %p590 = pneg %p121
        $region102: #{tpu_custom_call.1} parent=87 // pred_check_branch
          %592 = sbr.rel (%p590) target = $region104
        $region103: #{tpu_custom_call.1} parent=87 // pred_region
          %593 = dma.done [#allocation9], 12288
        $region104: #{tpu_custom_call.1} parent=87 // pred_fallthru
          _
        // Predicated region
        $region105: #{tpu_custom_call.1} parent=87 // pred_check
          %p594 = pneg %p205
        $region106: #{tpu_custom_call.1} parent=87 // pred_check_branch
          %596 = sbr.rel (%p594) target = $region108
        $region107: #{tpu_custom_call.1} parent=87 // pred_region
          %597 = dma.done [#allocation9], 1024
        $region108: #{tpu_custom_call.1} parent=87 // pred_fallthru
          _
        // Predicated region
        $region109: #{tpu_custom_call.1} parent=87 // pred_check
          %p598 = pneg %p336
        $region110: #{tpu_custom_call.1} parent=87 // pred_check_branch
          %600 = sbr.rel (%p598) target = $region112
        $region111: #{tpu_custom_call.1} parent=87 // pred_region
          %601 = dma.done [#allocation12], 1536
        $region112: #{tpu_custom_call.1} parent=87 // pred_fallthru
          _
        %s602 = sand.u32 %s45, 1
        %s603 = scalar_lea.sflag [#allocation3], %s602
        %s604 = sand.u32 %s45, 1
        %s605 = smul.addr %s604, 24
        %s606 = scalar_lea.vmem [#allocation2], %s605
        %p607 = pneg %p58
        %p608 = pneg %p55
        %p609 = pneg %p79
        %p610 = pneg %p76
        %p611 = pneg %p100
        %p612 = pneg %p97
        %p613 = pneg %p121
        %p614 = pneg %p118
        %p615 = pneg %p142
        %p616 = pneg %p139
        %p617 = pneg %p163
        %p618 = pneg %p160
        %p619 = pneg %p184
        %p620 = pneg %p181
        %p621 = pneg %p205
        %p622 = pneg %p202
        %p623 = pneg %p226
        %p624 = pneg %p223
        %p625 = pneg %p247
        %p626 = pneg %p244
        %p627 = pneg %p268
        %p628 = pneg %p265
        %p629 = pneg %p289
        %p630 = pneg %p286
        %s631 = smul.u32 8, %s37
        %p632 = scmp.lt.s32.totalorder %s631, 15
        %s633 = scalar_select %p632, %s631, 15
        %s634 = smul.addr %s633, 2
        %s635 = scalar_lea.vmem %s12, %s634
        %p636 = pneg %p315
        %p637 = pneg %p312
        %p638 = pneg %p336
        %p639 = pneg %p333
        %p640 = pneg %p357
        %p641 = pneg %p354
        %p642 = pneg %p378
        %p643 = pneg %p375
        %p644 = pneg %p399
        %p645 = pneg %p396
        %p646 = pneg %p425
        %p647 = pneg %p422
        %s648 = sand.u32 %s412, 1
        %s649 = scalar_lea.sflag [#allocation4], %s648
        %s650 = sand.u32 %s412, 1
        %s651 = smul.addr %s650, 8
        %s652 = scalar_lea.vmem [#allocation13], %s651
        %s653 = smul.u32 8, %s37
        %p654 = scmp.lt.s32.totalorder %s653, 15
        %s655 = scalar_select %p654, %s653, 15
        %s656 = smul.addr %s655, 2
        %s657 = scalar_lea.vmem %s12, %s656
        %s658 = smul.u32 8, %s37
        %v659 = vld [vmem:[#allocation10] sm:$0xff]
        %v660 = vld [vmem:[#allocation10 + $0x8] sm:$0xff]
        %v661 = vld [vmem:[#allocation10 + $0x10] sm:$0xff]
        %v662 = vld [vmem:[#allocation10 + $0x18] sm:$0xff]
        %v663 = vld [vmem:[#allocation10 + $0x20] sm:$0xff]
        %v664 = vld [vmem:[#allocation10 + $0x28] sm:$0xff]
        %v665 = vld [vmem:[#allocation10 + $0x30] sm:$0xff]
        %v666 = vld [vmem:[#allocation10 + $0x38] sm:$0xff]
        %v667 = vld [vmem:[%s8] sm:$0xff]
        %v668 = vld [vmem:[%s8 + $0x8] sm:$0xff]
        %v669 = vld [vmem:[%s8 + $0x10] sm:$0xff]
        %v670 = vld [vmem:[%s8 + $0x18] sm:$0xff]
        %v671 = vld [vmem:[%s8 + $0x20] sm:$0xff]
        %v672 = vld [vmem:[%s8 + $0x28] sm:$0xff]
        %v673 = vld [vmem:[%s8 + $0x30] sm:$0xff]
        %v674 = vld [vmem:[%s8 + $0x38] sm:$0xff]
        %v675 = vld [vmem:[%s8 + $0x40] sm:$0xff]
        %v676 = vld [vmem:[%s8 + $0x48] sm:$0xff]
        %v677 = vld [vmem:[%s8 + $0x50] sm:$0xff]
        %v678 = vld [vmem:[%s8 + $0x58] sm:$0xff]
        %v679 = vld [vmem:[%s8 + $0x60] sm:$0xff]
        %v680 = vld [vmem:[%s8 + $0x68] sm:$0xff]
        %v681 = vld [vmem:[%s8 + $0x70] sm:$0xff]
        %v682 = vld [vmem:[%s8 + $0x78] sm:$0xff]
        %v683 = vld [vmem:[%s9] sm:$0x1]
        %v685 = vlaneseq
        %v686 = vshrl.u32 %v685, 7
        %v687 = vsub.s32 0, %v686
        %v688 = vrot.slane %v683, %v687
        %690 = vmatprep.subr.mxu0 0.0
        %691 = vmatpush1.msra.mxu0 %v682
        %692 = vmatprep.subr.mxu0 0.0
        %693 = vmatpush1.msra.mxu0 %v681
        %694 = vmatprep.subr.mxu0 0.0
        %695 = vmatpush1.msra.mxu0 %v680
        %696 = vmatprep.subr.mxu0 0.0
        %697 = vmatpush1.msra.mxu0 %v679
        %698 = vmatprep.subr.mxu0 0.0
        %699 = vmatpush1.msra.mxu0 %v678
        %700 = vmatprep.subr.mxu0 0.0
        %701 = vmatpush1.msra.mxu0 %v677
        %702 = vmatprep.subr.mxu0 0.0
        %703 = vmatpush1.msra.mxu0 %v676
        %704 = vmatprep.subr.mxu0 0.0
        %705 = vmatpush1.msra.mxu0 %v675
        %706 = vmatprep.subr.mxu0 0.0
        %707 = vmatpush1.msra.mxu0 %v674
        %708 = vmatprep.subr.mxu0 0.0
        %709 = vmatpush1.msra.mxu0 %v673
        %710 = vmatprep.subr.mxu0 0.0
        %711 = vmatpush1.msra.mxu0 %v672
        %712 = vmatprep.subr.mxu0 0.0
        %713 = vmatpush1.msra.mxu0 %v671
        %714 = vmatprep.subr.mxu0 0.0
        %715 = vmatpush1.msra.mxu0 %v670
        %716 = vmatprep.subr.mxu0 0.0
        %717 = vmatpush1.msra.mxu0 %v669
        %718 = vmatprep.subr.mxu0 0.0
        %719 = vmatpush1.msra.mxu0 %v668
        %720 = vmatprep.subr.mxu0 0.0
        %721 = vmatpush1.msra.mxu0 %v667
        %722 = vmatprep.subr.mxu0 0.0
        %723 = vmatpush2.msra.mxu0 0.0
        %724 = vmatprep.subr.mxu0 0.0
        %725 = vmatpush2.msra.mxu0 0.0
        %726 = vmatprep.subr.mxu0 0.0
        %727 = vmatpush2.msra.mxu0 0.0
        %728 = vmatprep.subr.mxu0 0.0
        %729 = vmatpush2.msra.mxu0 0.0
        %730 = vmatprep.subr.mxu0 0.0
        %731 = vmatpush2.msra.mxu0 0.0
        %732 = vmatprep.subr.mxu0 0.0
        %733 = vmatpush2.msra.mxu0 0.0
        %734 = vmatprep.subr.mxu0 0.0
        %735 = vmatpush2.msra.mxu0 0.0
        %736 = vmatprep.subr.mxu0 0.0
        %737 = vmatpush2.msra.mxu0 0.0
        %738 = vmatprep.subr.mxu0 0.0
        %739 = vmatpush2.msra.mxu0 0.0
        %740 = vmatprep.subr.mxu0 0.0
        %741 = vmatpush2.msra.mxu0 0.0
        %742 = vmatprep.subr.mxu0 0.0
        %743 = vmatpush2.msra.mxu0 0.0
        %744 = vmatprep.subr.mxu0 0.0
        %745 = vmatpush2.msra.mxu0 0.0
        %746 = vmatprep.subr.mxu0 0.0
        %747 = vmatpush2.msra.mxu0 0.0
        %748 = vmatprep.subr.mxu0 0.0
        %749 = vmatpush2.msra.mxu0 0.0
        %750 = vmatprep.subr.mxu0 0.0
        %751 = vmatpush2.msra.mxu0 0.0
        %752 = vmatprep.subr.mxu0 0.0
        %753 = vmatpush2.msra.mxu0 0.0
        %754 = vmatprep.mubr.f32.mxu0 0.0
        %755 = vmatmul.mubr.f32.gmra.mxu0 %v659
        %v756 = vpop.f32.mrf.mxu0
        %v757 = vadd.f32 %v688, %v756
        %v758 = vpop.f32.mrf.mxu0
        %759 = vmatprep.mubr.f32.mxu0 0.0
        %760 = vmatmul.mubr.f32.gmra.mxu0 %v660
        %v761 = vpop.f32.mrf.mxu0
        %v762 = vadd.f32 %v688, %v761
        %v763 = vpop.f32.mrf.mxu0
        %764 = vmatprep.mubr.f32.mxu0 0.0
        %765 = vmatmul.mubr.f32.gmra.mxu0 %v661
        %v766 = vpop.f32.mrf.mxu0
        %v767 = vadd.f32 %v688, %v766
        %v768 = vpop.f32.mrf.mxu0
        %769 = vmatprep.mubr.f32.mxu0 0.0
        %770 = vmatmul.mubr.f32.gmra.mxu0 %v662
        %v771 = vpop.f32.mrf.mxu0
        %v772 = vadd.f32 %v688, %v771
        %v773 = vpop.f32.mrf.mxu0
        %774 = vmatprep.mubr.f32.mxu0 0.0
        %775 = vmatmul.mubr.f32.gmra.mxu0 %v663
        %v776 = vpop.f32.mrf.mxu0
        %v777 = vadd.f32 %v688, %v776
        %v778 = vpop.f32.mrf.mxu0
        %779 = vmatprep.mubr.f32.mxu0 0.0
        %780 = vmatmul.mubr.f32.gmra.mxu0 %v664
        %v781 = vpop.f32.mrf.mxu0
        %v782 = vadd.f32 %v688, %v781
        %v783 = vpop.f32.mrf.mxu0
        %784 = vmatprep.mubr.f32.mxu0 0.0
        %785 = vmatmul.mubr.f32.gmra.mxu0 %v665
        %v786 = vpop.f32.mrf.mxu0
        %v787 = vadd.f32 %v688, %v786
        %v788 = vpop.f32.mrf.mxu0
        %789 = vmatprep.mubr.f32.mxu0 0.0
        %790 = vmatmul.mubr.f32.gmra.mxu0 %v666
        %v791 = vpop.f32.mrf.mxu0
        %v792 = vadd.f32 %v688, %v791
        %v793 = vpop.f32.mrf.mxu0
        %794 = vdwg.mxu0
        %v795 = vmax.f32 %v757, 0.0
        %v796 = vmax.f32 %v762, 0.0
        %v797 = vmax.f32 %v767, 0.0
        %v798 = vmax.f32 %v772, 0.0
        %v799 = vmax.f32 %v777, 0.0
        %v800 = vmax.f32 %v782, 0.0
        %v801 = vmax.f32 %v787, 0.0
        %v802 = vmax.f32 %v792, 0.0
        %v803 = vld [vmem:[%s10] sm:$0xff]
        %v804 = vld [vmem:[%s10 + $0x8] sm:$0xff]
        %v805 = vld [vmem:[%s10 + $0x10] sm:$0xff]
        %v806 = vld [vmem:[%s10 + $0x18] sm:$0xff]
        %v807 = vld [vmem:[%s10 + $0x20] sm:$0xff]
        %v808 = vld [vmem:[%s10 + $0x28] sm:$0xff]
        %v809 = vld [vmem:[%s10 + $0x30] sm:$0xff]
        %v810 = vld [vmem:[%s10 + $0x38] sm:$0xff]
        %v811 = vld [vmem:[%s10 + $0x40] sm:$0xff]
        %v812 = vld [vmem:[%s10 + $0x48] sm:$0xff]
        %v813 = vld [vmem:[%s10 + $0x50] sm:$0xff]
        %v814 = vld [vmem:[%s10 + $0x58] sm:$0xff]
        %v815 = vld [vmem:[%s10 + $0x60] sm:$0xff]
        %v816 = vld [vmem:[%s10 + $0x68] sm:$0xff]
        %v817 = vld [vmem:[%s10 + $0x70] sm:$0xff]
        %v818 = vld [vmem:[%s10 + $0x78] sm:$0xff]
        %819 = vmatprep.subr.mxu0 0.0
        %820 = vmatpush1.msra.mxu0 %v818
        %821 = vmatprep.subr.mxu0 0.0
        %822 = vmatpush1.msra.mxu0 %v817
        %823 = vmatprep.subr.mxu0 0.0
        %824 = vmatpush1.msra.mxu0 %v816
        %825 = vmatprep.subr.mxu0 0.0
        %826 = vmatpush1.msra.mxu0 %v815
        %827 = vmatprep.subr.mxu0 0.0
        %828 = vmatpush1.msra.mxu0 %v814
        %829 = vmatprep.subr.mxu0 0.0
        %830 = vmatpush1.msra.mxu0 %v813
        %831 = vmatprep.subr.mxu0 0.0
        %832 = vmatpush1.msra.mxu0 %v812
        %833 = vmatprep.subr.mxu0 0.0
        %834 = vmatpush1.msra.mxu0 %v811
        %835 = vmatprep.subr.mxu0 0.0
        %836 = vmatpush1.msra.mxu0 %v810
        %837 = vmatprep.subr.mxu0 0.0
        %838 = vmatpush1.msra.mxu0 %v809
        %839 = vmatprep.subr.mxu0 0.0
        %840 = vmatpush1.msra.mxu0 %v808
        %841 = vmatprep.subr.mxu0 0.0
        %842 = vmatpush1.msra.mxu0 %v807
        %843 = vmatprep.subr.mxu0 0.0
        %844 = vmatpush1.msra.mxu0 %v806
        %845 = vmatprep.subr.mxu0 0.0
        %846 = vmatpush1.msra.mxu0 %v805
        %847 = vmatprep.subr.mxu0 0.0
        %848 = vmatpush1.msra.mxu0 %v804
        %849 = vmatprep.subr.mxu0 0.0
        %850 = vmatpush1.msra.mxu0 %v803
        %851 = vmatprep.subr.mxu0 0.0
        %852 = vmatpush2.msra.mxu0 0.0
        %853 = vmatprep.subr.mxu0 0.0
        %854 = vmatpush2.msra.mxu0 0.0
        %855 = vmatprep.subr.mxu0 0.0
        %856 = vmatpush2.msra.mxu0 0.0
        %857 = vmatprep.subr.mxu0 0.0
        %858 = vmatpush2.msra.mxu0 0.0
        %859 = vmatprep.subr.mxu0 0.0
        %860 = vmatpush2.msra.mxu0 0.0
        %861 = vmatprep.subr.mxu0 0.0
        %862 = vmatpush2.msra.mxu0 0.0
        %863 = vmatprep.subr.mxu0 0.0
        %864 = vmatpush2.msra.mxu0 0.0
        %865 = vmatprep.subr.mxu0 0.0
        %866 = vmatpush2.msra.mxu0 0.0
        %867 = vmatprep.subr.mxu0 0.0
        %868 = vmatpush2.msra.mxu0 0.0
        %869 = vmatprep.subr.mxu0 0.0
        %870 = vmatpush2.msra.mxu0 0.0
        %871 = vmatprep.subr.mxu0 0.0
        %872 = vmatpush2.msra.mxu0 0.0
        %873 = vmatprep.subr.mxu0 0.0
        %874 = vmatpush2.msra.mxu0 0.0
        %875 = vmatprep.subr.mxu0 0.0
        %876 = vmatpush2.msra.mxu0 0.0
        %877 = vmatprep.subr.mxu0 0.0
        %878 = vmatpush2.msra.mxu0 0.0
        %879 = vmatprep.subr.mxu0 0.0
        %880 = vmatpush2.msra.mxu0 0.0
        %881 = vmatprep.subr.mxu0 0.0
        %882 = vmatpush2.msra.mxu0 0.0
        %883 = vmatprep.mubr.f32.mxu0 0.0
        %884 = vmatmul.mubr.f32.gmra.mxu0 %v795
        %v885 = vpop.f32.mrf.mxu0
        %v886 = vadd.f32 0.0, %v885
        %v887 = vpop.f32.mrf.mxu0
        %888 = vmatprep.mubr.f32.mxu0 0.0
        %889 = vmatmul.mubr.f32.gmra.mxu0 %v796
        %v890 = vpop.f32.mrf.mxu0
        %v891 = vadd.f32 0.0, %v890
        %v892 = vpop.f32.mrf.mxu0
        %893 = vmatprep.mubr.f32.mxu0 0.0
        %894 = vmatmul.mubr.f32.gmra.mxu0 %v797
        %v895 = vpop.f32.mrf.mxu0
        %v896 = vadd.f32 0.0, %v895
        %v897 = vpop.f32.mrf.mxu0
        %898 = vmatprep.mubr.f32.mxu0 0.0
        %899 = vmatmul.mubr.f32.gmra.mxu0 %v798
        %v900 = vpop.f32.mrf.mxu0
        %v901 = vadd.f32 0.0, %v900
        %v902 = vpop.f32.mrf.mxu0
        %903 = vmatprep.mubr.f32.mxu0 0.0
        %904 = vmatmul.mubr.f32.gmra.mxu0 %v799
        %v905 = vpop.f32.mrf.mxu0
        %v906 = vadd.f32 0.0, %v905
        %v907 = vpop.f32.mrf.mxu0
        %908 = vmatprep.mubr.f32.mxu0 0.0
        %909 = vmatmul.mubr.f32.gmra.mxu0 %v800
        %v910 = vpop.f32.mrf.mxu0
        %v911 = vadd.f32 0.0, %v910
        %v912 = vpop.f32.mrf.mxu0
        %913 = vmatprep.mubr.f32.mxu0 0.0
        %914 = vmatmul.mubr.f32.gmra.mxu0 %v801
        %v915 = vpop.f32.mrf.mxu0
        %v916 = vadd.f32 0.0, %v915
        %v917 = vpop.f32.mrf.mxu0
        %918 = vmatprep.mubr.f32.mxu0 0.0
        %919 = vmatmul.mubr.f32.gmra.mxu0 %v802
        %v920 = vpop.f32.mrf.mxu0
        %v921 = vadd.f32 0.0, %v920
        %v922 = vpop.f32.mrf.mxu0
        %923 = vdwg.mxu0
        %932 = vrot.lane.b32.xlu0 %v886, 64
        %v933 = vpop.permute.xlu0 %932
        %934 = vrot.lane.b32.xlu0 %v891, 64
        %v935 = vpop.permute.xlu0 %934
        %936 = vrot.lane.b32.xlu0 %v896, 64
        %v937 = vpop.permute.xlu0 %936
        %938 = vrot.lane.b32.xlu0 %v901, 64
        %v939 = vpop.permute.xlu0 %938
        %940 = vrot.lane.b32.xlu0 %v906, 64
        %v941 = vpop.permute.xlu0 %940
        %942 = vrot.lane.b32.xlu0 %v911, 64
        %v943 = vpop.permute.xlu0 %942
        %944 = vrot.lane.b32.xlu0 %v916, 64
        %v945 = vpop.permute.xlu0 %944
        %946 = vrot.lane.b32.xlu0 %v921, 64
        %v947 = vpop.permute.xlu0 %946
        %v956 = vld [vmem:[%s11] sm:$0x1]
        %v958 = vlaneseq
        %v959 = vshrl.u32 %v958, 7
        %v960 = vsub.s32 0, %v959
        %v961 = vrot.slane %v956, %v960
        %963 = vmatprep.subr.mxu0 0.0
        %964 = vmatpush1.msra.mxu0 %v947
        %965 = vmatprep.subr.mxu0 0.0
        %966 = vmatpush1.msra.mxu0 %v945
        %967 = vmatprep.subr.mxu0 0.0
        %968 = vmatpush1.msra.mxu0 %v943
        %969 = vmatprep.subr.mxu0 0.0
        %970 = vmatpush1.msra.mxu0 %v941
        %971 = vmatprep.subr.mxu0 0.0
        %972 = vmatpush1.msra.mxu0 %v939
        %973 = vmatprep.subr.mxu0 0.0
        %974 = vmatpush1.msra.mxu0 %v937
        %975 = vmatprep.subr.mxu0 0.0
        %976 = vmatpush1.msra.mxu0 %v935
        %977 = vmatprep.subr.mxu0 0.0
        %978 = vmatpush1.msra.mxu0 %v933
        %979 = vmatprep.subr.mxu0 0.0
        %980 = vmatpush1.msra.mxu0 %v921
        %981 = vmatprep.subr.mxu0 0.0
        %982 = vmatpush1.msra.mxu0 %v916
        %983 = vmatprep.subr.mxu0 0.0
        %984 = vmatpush1.msra.mxu0 %v911
        %985 = vmatprep.subr.mxu0 0.0
        %986 = vmatpush1.msra.mxu0 %v906
        %987 = vmatprep.subr.mxu0 0.0
        %988 = vmatpush1.msra.mxu0 %v901
        %989 = vmatprep.subr.mxu0 0.0
        %990 = vmatpush1.msra.mxu0 %v896
        %991 = vmatprep.subr.mxu0 0.0
        %992 = vmatpush1.msra.mxu0 %v891
        %993 = vmatprep.subr.mxu0 0.0
        %994 = vmatpush1.msra.mxu0 %v886
        %995 = vmatprep.subr.mxu0 0.0
        %996 = vmatpush2.msra.mxu0 0.0
        %997 = vmatprep.subr.mxu0 0.0
        %998 = vmatpush2.msra.mxu0 0.0
        %999 = vmatprep.subr.mxu0 0.0
        %1000 = vmatpush2.msra.mxu0 0.0
        %1001 = vmatprep.subr.mxu0 0.0
        %1002 = vmatpush2.msra.mxu0 0.0
        %1003 = vmatprep.subr.mxu0 0.0
        %1004 = vmatpush2.msra.mxu0 0.0
        %1005 = vmatprep.subr.mxu0 0.0
        %1006 = vmatpush2.msra.mxu0 0.0
        %1007 = vmatprep.subr.mxu0 0.0
        %1008 = vmatpush2.msra.mxu0 0.0
        %1009 = vmatprep.subr.mxu0 0.0
        %1010 = vmatpush2.msra.mxu0 0.0
        %1011 = vmatprep.subr.mxu0 0.0
        %1012 = vmatpush2.msra.mxu0 0.0
        %1013 = vmatprep.subr.mxu0 0.0
        %1014 = vmatpush2.msra.mxu0 0.0
        %1015 = vmatprep.subr.mxu0 0.0
        %1016 = vmatpush2.msra.mxu0 0.0
        %1017 = vmatprep.subr.mxu0 0.0
        %1018 = vmatpush2.msra.mxu0 0.0
        %1019 = vmatprep.subr.mxu0 0.0
        %1020 = vmatpush2.msra.mxu0 0.0
        %1021 = vmatprep.subr.mxu0 0.0
        %1022 = vmatpush2.msra.mxu0 0.0
        %1023 = vmatprep.subr.mxu0 0.0
        %1024 = vmatpush2.msra.mxu0 0.0
        %1025 = vmatprep.subr.mxu0 0.0
        %1026 = vmatpush2.msra.mxu0 0.0
        %1027 = vmatprep.mubr.f32.mxu0 0.0
        %1028 = vmatmul.mubr.f32.gmra.mxu0 %v659
        %v1029 = vpop.f32.mrf.mxu0
        %v1030 = vadd.f32 %v961, %v1029
        %v1031 = vpop.f32.mrf.mxu0
        %1032 = vmatprep.mubr.f32.mxu0 0.0
        %1033 = vmatmul.mubr.f32.gmra.mxu0 %v660
        %v1034 = vpop.f32.mrf.mxu0
        %v1035 = vadd.f32 %v961, %v1034
        %v1036 = vpop.f32.mrf.mxu0
        %1037 = vmatprep.mubr.f32.mxu0 0.0
        %1038 = vmatmul.mubr.f32.gmra.mxu0 %v661
        %v1039 = vpop.f32.mrf.mxu0
        %v1040 = vadd.f32 %v961, %v1039
        %v1041 = vpop.f32.mrf.mxu0
        %1042 = vmatprep.mubr.f32.mxu0 0.0
        %1043 = vmatmul.mubr.f32.gmra.mxu0 %v662
        %v1044 = vpop.f32.mrf.mxu0
        %v1045 = vadd.f32 %v961, %v1044
        %v1046 = vpop.f32.mrf.mxu0
        %1047 = vmatprep.mubr.f32.mxu0 0.0
        %1048 = vmatmul.mubr.f32.gmra.mxu0 %v663
        %v1049 = vpop.f32.mrf.mxu0
        %v1050 = vadd.f32 %v961, %v1049
        %v1051 = vpop.f32.mrf.mxu0
        %1052 = vmatprep.mubr.f32.mxu0 0.0
        %1053 = vmatmul.mubr.f32.gmra.mxu0 %v664
        %v1054 = vpop.f32.mrf.mxu0
        %v1055 = vadd.f32 %v961, %v1054
        %v1056 = vpop.f32.mrf.mxu0
        %1057 = vmatprep.mubr.f32.mxu0 0.0
        %1058 = vmatmul.mubr.f32.gmra.mxu0 %v665
        %v1059 = vpop.f32.mrf.mxu0
        %v1060 = vadd.f32 %v961, %v1059
        %v1061 = vpop.f32.mrf.mxu0
        %1062 = vmatprep.mubr.f32.mxu0 0.0
        %1063 = vmatmul.mubr.f32.gmra.mxu0 %v666
        %v1064 = vpop.f32.mrf.mxu0
        %v1065 = vadd.f32 %v961, %v1064
        %v1066 = vpop.f32.mrf.mxu0
        %1067 = vdwg.mxu0
        %v1068 = vld [vmem:[%s577] sm:$0xff]
        %v1069 = vld [vmem:[%s577 + $0x8] sm:$0xff]
        %v1070 = vld [vmem:[%s577 + $0x10] sm:$0xff]
        %v1071 = vld [vmem:[#allocation5] sm:$0xff]
        %v1072 = vld [vmem:[#allocation5 + $0x8] sm:$0xff]
        %v1073 = vld [vmem:[#allocation5 + $0x10] sm:$0xff]
        %v1074 = vld [vmem:[#allocation5 + $0x18] sm:$0xff]
        %v1075 = vld [vmem:[#allocation5 + $0x20] sm:$0xff]
        %v1076 = vld [vmem:[#allocation5 + $0x28] sm:$0xff]
        %v1077 = vld [vmem:[#allocation5 + $0x30] sm:$0xff]
        %v1078 = vld [vmem:[#allocation5 + $0x38] sm:$0xff]
        %v1079 = vld [vmem:[#allocation5 + $0x40] sm:$0xff]
        %v1080 = vld [vmem:[#allocation5 + $0x48] sm:$0xff]
        %v1081 = vld [vmem:[#allocation5 + $0x50] sm:$0xff]
        %v1082 = vld [vmem:[#allocation5 + $0x58] sm:$0xff]
        %v1083 = vld [vmem:[#allocation5 + $0x60] sm:$0xff]
        %v1084 = vld [vmem:[#allocation5 + $0x68] sm:$0xff]
        %v1085 = vld [vmem:[#allocation5 + $0x70] sm:$0xff]
        %v1086 = vld [vmem:[#allocation5 + $0x78] sm:$0xff]
        %v1087 = vld [vmem:[#allocation5 + $0x80] sm:$0xff]
        %v1088 = vld [vmem:[#allocation5 + $0x88] sm:$0xff]
        %v1089 = vld [vmem:[#allocation5 + $0x90] sm:$0xff]
        %v1090 = vld [vmem:[#allocation5 + $0x98] sm:$0xff]
        %v1091 = vld [vmem:[#allocation5 + $0xa0] sm:$0xff]
        %v1092 = vld [vmem:[#allocation5 + $0xa8] sm:$0xff]
        %v1093 = vld [vmem:[#allocation5 + $0xb0] sm:$0xff]
        %v1094 = vld [vmem:[#allocation5 + $0xb8] sm:$0xff]
        %v1095 = vld [vmem:[#allocation5 + $0xc0] sm:$0xff]
        %v1096 = vld [vmem:[#allocation5 + $0xc8] sm:$0xff]
        %v1097 = vld [vmem:[#allocation5 + $0xd0] sm:$0xff]
        %v1098 = vld [vmem:[#allocation5 + $0xd8] sm:$0xff]
        %v1099 = vld [vmem:[#allocation5 + $0xe0] sm:$0xff]
        %v1100 = vld [vmem:[#allocation5 + $0xe8] sm:$0xff]
        %v1101 = vld [vmem:[#allocation5 + $0xf0] sm:$0xff]
        %v1102 = vld [vmem:[#allocation5 + $0xf8] sm:$0xff]
        %v1103 = vld [vmem:[#allocation5 + $0x100] sm:$0xff]
        %v1104 = vld [vmem:[#allocation5 + $0x108] sm:$0xff]
        %v1105 = vld [vmem:[#allocation5 + $0x110] sm:$0xff]
        %v1106 = vld [vmem:[#allocation5 + $0x118] sm:$0xff]
        %v1107 = vld [vmem:[#allocation5 + $0x120] sm:$0xff]
        %v1108 = vld [vmem:[#allocation5 + $0x128] sm:$0xff]
        %v1109 = vld [vmem:[#allocation5 + $0x130] sm:$0xff]
        %v1110 = vld [vmem:[#allocation5 + $0x138] sm:$0xff]
        %v1111 = vld [vmem:[#allocation5 + $0x140] sm:$0xff]
        %v1112 = vld [vmem:[#allocation5 + $0x148] sm:$0xff]
        %v1113 = vld [vmem:[#allocation5 + $0x150] sm:$0xff]
        %v1114 = vld [vmem:[#allocation5 + $0x158] sm:$0xff]
        %v1115 = vld [vmem:[#allocation5 + $0x160] sm:$0xff]
        %v1116 = vld [vmem:[#allocation5 + $0x168] sm:$0xff]
        %v1117 = vld [vmem:[#allocation5 + $0x170] sm:$0xff]
        %v1118 = vld [vmem:[#allocation5 + $0x178] sm:$0xff]
        %v1119 = vunpack.c.l.bf16 %v1071
        %v1120 = vunpack.c.h.bf16 %v1071
        %v1121 = vunpack.c.l.bf16 %v1072
        %v1122 = vunpack.c.h.bf16 %v1072
        %v1123 = vunpack.c.l.bf16 %v1073
        %v1124 = vunpack.c.h.bf16 %v1073
        %v1125 = vunpack.c.l.bf16 %v1074
        %v1126 = vunpack.c.h.bf16 %v1074
        %v1127 = vunpack.c.l.bf16 %v1075
        %v1128 = vunpack.c.h.bf16 %v1075
        %v1129 = vunpack.c.l.bf16 %v1076
        %v1130 = vunpack.c.h.bf16 %v1076
        %v1131 = vunpack.c.l.bf16 %v1077
        %v1132 = vunpack.c.h.bf16 %v1077
        %v1133 = vunpack.c.l.bf16 %v1078
        %v1134 = vunpack.c.h.bf16 %v1078
        %v1135 = vunpack.c.l.bf16 %v1079
        %v1136 = vunpack.c.h.bf16 %v1079
        %v1137 = vunpack.c.l.bf16 %v1080
        %v1138 = vunpack.c.h.bf16 %v1080
        %v1139 = vunpack.c.l.bf16 %v1081
        %v1140 = vunpack.c.h.bf16 %v1081
        %v1141 = vunpack.c.l.bf16 %v1082
        %v1142 = vunpack.c.h.bf16 %v1082
        %v1143 = vunpack.c.l.bf16 %v1083
        %v1144 = vunpack.c.h.bf16 %v1083
        %v1145 = vunpack.c.l.bf16 %v1084
        %v1146 = vunpack.c.h.bf16 %v1084
        %v1147 = vunpack.c.l.bf16 %v1085
        %v1148 = vunpack.c.h.bf16 %v1085
        %v1149 = vunpack.c.l.bf16 %v1086
        %v1150 = vunpack.c.h.bf16 %v1086
        %v1151 = vunpack.c.l.bf16 %v1087
        %v1152 = vunpack.c.h.bf16 %v1087
        %v1153 = vunpack.c.l.bf16 %v1088
        %v1154 = vunpack.c.h.bf16 %v1088
        %v1155 = vunpack.c.l.bf16 %v1089
        %v1156 = vunpack.c.h.bf16 %v1089
        %v1157 = vunpack.c.l.bf16 %v1090
        %v1158 = vunpack.c.h.bf16 %v1090
        %v1159 = vunpack.c.l.bf16 %v1091
        %v1160 = vunpack.c.h.bf16 %v1091
        %v1161 = vunpack.c.l.bf16 %v1092
        %v1162 = vunpack.c.h.bf16 %v1092
        %v1163 = vunpack.c.l.bf16 %v1093
        %v1164 = vunpack.c.h.bf16 %v1093
        %v1165 = vunpack.c.l.bf16 %v1094
        %v1166 = vunpack.c.h.bf16 %v1094
        %v1167 = vunpack.c.l.bf16 %v1095
        %v1168 = vunpack.c.h.bf16 %v1095
        %v1169 = vunpack.c.l.bf16 %v1096
        %v1170 = vunpack.c.h.bf16 %v1096
        %v1171 = vunpack.c.l.bf16 %v1097
        %v1172 = vunpack.c.h.bf16 %v1097
        %v1173 = vunpack.c.l.bf16 %v1098
        %v1174 = vunpack.c.h.bf16 %v1098
        %v1175 = vunpack.c.l.bf16 %v1099
        %v1176 = vunpack.c.h.bf16 %v1099
        %v1177 = vunpack.c.l.bf16 %v1100
        %v1178 = vunpack.c.h.bf16 %v1100
        %v1179 = vunpack.c.l.bf16 %v1101
        %v1180 = vunpack.c.h.bf16 %v1101
        %v1181 = vunpack.c.l.bf16 %v1102
        %v1182 = vunpack.c.h.bf16 %v1102
        %v1183 = vunpack.c.l.bf16 %v1103
        %v1184 = vunpack.c.h.bf16 %v1103
        %v1185 = vunpack.c.l.bf16 %v1104
        %v1186 = vunpack.c.h.bf16 %v1104
        %v1187 = vunpack.c.l.bf16 %v1105
        %v1188 = vunpack.c.h.bf16 %v1105
        %v1189 = vunpack.c.l.bf16 %v1106
        %v1190 = vunpack.c.h.bf16 %v1106
        %v1191 = vunpack.c.l.bf16 %v1107
        %v1192 = vunpack.c.h.bf16 %v1107
        %v1193 = vunpack.c.l.bf16 %v1108
        %v1194 = vunpack.c.h.bf16 %v1108
        %v1195 = vunpack.c.l.bf16 %v1109
        %v1196 = vunpack.c.h.bf16 %v1109
        %v1197 = vunpack.c.l.bf16 %v1110
        %v1198 = vunpack.c.h.bf16 %v1110
        %v1199 = vunpack.c.l.bf16 %v1111
        %v1200 = vunpack.c.h.bf16 %v1111
        %v1201 = vunpack.c.l.bf16 %v1112
        %v1202 = vunpack.c.h.bf16 %v1112
        %v1203 = vunpack.c.l.bf16 %v1113
        %v1204 = vunpack.c.h.bf16 %v1113
        %v1205 = vunpack.c.l.bf16 %v1114
        %v1206 = vunpack.c.h.bf16 %v1114
        %v1207 = vunpack.c.l.bf16 %v1115
        %v1208 = vunpack.c.h.bf16 %v1115
        %v1209 = vunpack.c.l.bf16 %v1116
        %v1210 = vunpack.c.h.bf16 %v1116
        %v1211 = vunpack.c.l.bf16 %v1117
        %v1212 = vunpack.c.h.bf16 %v1117
        %v1213 = vunpack.c.l.bf16 %v1118
        %v1214 = vunpack.c.h.bf16 %v1118
        %v1215 = vld [vmem:[#allocation7] sm:$0x3f]
        %v1217 = vlaneseq
        %v1218 = vshrl.u32 %v1217, 7
        %v1219 = vsub.s32 0, %v1218
        %v1220 = vrot.slane %v1215, %v1219
        %v1221 = vlaneseq
        %v1222 = vshrl.u32 %v1221, 7
        %v1223 = vsub.s32 1, %v1222
        %v1224 = vrot.slane %v1215, %v1223
        %v1225 = vlaneseq
        %v1226 = vshrl.u32 %v1225, 7
        %v1227 = vsub.s32 2, %v1226
        %v1228 = vrot.slane %v1215, %v1227
        %v1229 = vlaneseq
        %v1230 = vshrl.u32 %v1229, 7
        %v1231 = vsub.s32 3, %v1230
        %v1232 = vrot.slane %v1215, %v1231
        %v1233 = vlaneseq
        %v1234 = vshrl.u32 %v1233, 7
        %v1235 = vsub.s32 4, %v1234
        %v1236 = vrot.slane %v1215, %v1235
        %v1237 = vlaneseq
        %v1238 = vshrl.u32 %v1237, 7
        %v1239 = vsub.s32 5, %v1238
        %v1240 = vrot.slane %v1215, %v1239
        %1247 = vmatprep.subr.mxu0 %v1210
        %1248 = vmatpush1.msra.mxu0 %v1209
        %1249 = vmatprep.subr.mxu0 %v1204
        %1250 = vmatpush1.msra.mxu0 %v1203
        %1251 = vmatprep.subr.mxu0 %v1198
        %1252 = vmatpush1.msra.mxu0 %v1197
        %1253 = vmatprep.subr.mxu0 %v1192
        %1254 = vmatpush1.msra.mxu0 %v1191
        %1255 = vmatprep.subr.mxu0 %v1186
        %1256 = vmatpush1.msra.mxu0 %v1185
        %1257 = vmatprep.subr.mxu0 %v1180
        %1258 = vmatpush1.msra.mxu0 %v1179
        %1259 = vmatprep.subr.mxu0 %v1174
        %1260 = vmatpush1.msra.mxu0 %v1173
        %1261 = vmatprep.subr.mxu0 %v1168
        %1262 = vmatpush1.msra.mxu0 %v1167
        %1263 = vmatprep.subr.mxu0 %v1162
        %1264 = vmatpush1.msra.mxu0 %v1161
        %1265 = vmatprep.subr.mxu0 %v1156
        %1266 = vmatpush1.msra.mxu0 %v1155
        %1267 = vmatprep.subr.mxu0 %v1150
        %1268 = vmatpush1.msra.mxu0 %v1149
        %1269 = vmatprep.subr.mxu0 %v1144
        %1270 = vmatpush1.msra.mxu0 %v1143
        %1271 = vmatprep.subr.mxu0 %v1138
        %1272 = vmatpush1.msra.mxu0 %v1137
        %1273 = vmatprep.subr.mxu0 %v1132
        %1274 = vmatpush1.msra.mxu0 %v1131
        %1275 = vmatprep.subr.mxu0 %v1126
        %1276 = vmatpush1.msra.mxu0 %v1125
        %1277 = vmatprep.subr.mxu0 %v1120
        %1278 = vmatpush1.msra.mxu0 %v1119
        %1279 = vmatprep.subr.mxu0 0.0
        %1280 = vmatpush2.msra.mxu0 0.0
        %1281 = vmatprep.subr.mxu0 0.0
        %1282 = vmatpush2.msra.mxu0 0.0
        %1283 = vmatprep.subr.mxu0 0.0
        %1284 = vmatpush2.msra.mxu0 0.0
        %1285 = vmatprep.subr.mxu0 0.0
        %1286 = vmatpush2.msra.mxu0 0.0
        %1287 = vmatprep.subr.mxu0 0.0
        %1288 = vmatpush2.msra.mxu0 0.0
        %1289 = vmatprep.subr.mxu0 0.0
        %1290 = vmatpush2.msra.mxu0 0.0
        %1291 = vmatprep.subr.mxu0 0.0
        %1292 = vmatpush2.msra.mxu0 0.0
        %1293 = vmatprep.subr.mxu0 0.0
        %1294 = vmatpush2.msra.mxu0 0.0
        %1295 = vmatprep.subr.mxu0 0.0
        %1296 = vmatpush2.msra.mxu0 0.0
        %1297 = vmatprep.subr.mxu0 0.0
        %1298 = vmatpush2.msra.mxu0 0.0
        %1299 = vmatprep.subr.mxu0 0.0
        %1300 = vmatpush2.msra.mxu0 0.0
        %1301 = vmatprep.subr.mxu0 0.0
        %1302 = vmatpush2.msra.mxu0 0.0
        %1303 = vmatprep.subr.mxu0 0.0
        %1304 = vmatpush2.msra.mxu0 0.0
        %1305 = vmatprep.subr.mxu0 0.0
        %1306 = vmatpush2.msra.mxu0 0.0
        %1307 = vmatprep.subr.mxu0 0.0
        %1308 = vmatpush2.msra.mxu0 0.0
        %1309 = vmatprep.subr.mxu0 0.0
        %1310 = vmatpush2.msra.mxu0 0.0
        %1311 = vmatprep.mubr.f32.mxu0 0.0
        %1312 = vmatmul.mubr.f32.gmra.mxu0 %v1068
        %v1313 = vpop.f32.mrf.mxu0
        %v1314 = vadd.f32 %v1220, %v1313
        %v1315 = vpop.f32.mrf.mxu0
        %v1316 = vadd.f32 %v1224, %v1315
        %1317 = vmatprep.mubr.f32.mxu0 0.0
        %1318 = vmatmul.mubr.f32.gmra.mxu0 %v1069
        %v1319 = vpop.f32.mrf.mxu0
        %v1320 = vadd.f32 %v1220, %v1319
        %v1321 = vpop.f32.mrf.mxu0
        %v1322 = vadd.f32 %v1224, %v1321
        %1323 = vmatprep.mubr.f32.mxu0 0.0
        %1324 = vmatmul.mubr.f32.gmra.mxu0 %v1070
        %v1325 = vpop.f32.mrf.mxu0
        %v1326 = vadd.f32 %v1220, %v1325
        %v1327 = vpop.f32.mrf.mxu0
        %v1328 = vadd.f32 %v1224, %v1327
        %1329 = vdwg.mxu0
        %1330 = vmatprep.subr.mxu0 %v1212
        %1331 = vmatpush1.msra.mxu0 %v1211
        %1332 = vmatprep.subr.mxu0 %v1206
        %1333 = vmatpush1.msra.mxu0 %v1205
        %1334 = vmatprep.subr.mxu0 %v1200
        %1335 = vmatpush1.msra.mxu0 %v1199
        %1336 = vmatprep.subr.mxu0 %v1194
        %1337 = vmatpush1.msra.mxu0 %v1193
        %1338 = vmatprep.subr.mxu0 %v1188
        %1339 = vmatpush1.msra.mxu0 %v1187
        %1340 = vmatprep.subr.mxu0 %v1182
        %1341 = vmatpush1.msra.mxu0 %v1181
        %1342 = vmatprep.subr.mxu0 %v1176
        %1343 = vmatpush1.msra.mxu0 %v1175
        %1344 = vmatprep.subr.mxu0 %v1170
        %1345 = vmatpush1.msra.mxu0 %v1169
        %1346 = vmatprep.subr.mxu0 %v1164
        %1347 = vmatpush1.msra.mxu0 %v1163
        %1348 = vmatprep.subr.mxu0 %v1158
        %1349 = vmatpush1.msra.mxu0 %v1157
        %1350 = vmatprep.subr.mxu0 %v1152
        %1351 = vmatpush1.msra.mxu0 %v1151
        %1352 = vmatprep.subr.mxu0 %v1146
        %1353 = vmatpush1.msra.mxu0 %v1145
        %1354 = vmatprep.subr.mxu0 %v1140
        %1355 = vmatpush1.msra.mxu0 %v1139
        %1356 = vmatprep.subr.mxu0 %v1134
        %1357 = vmatpush1.msra.mxu0 %v1133
        %1358 = vmatprep.subr.mxu0 %v1128
        %1359 = vmatpush1.msra.mxu0 %v1127
        %1360 = vmatprep.subr.mxu0 %v1122
        %1361 = vmatpush1.msra.mxu0 %v1121
        %1362 = vmatprep.subr.mxu0 0.0
        %1363 = vmatpush2.msra.mxu0 0.0
        %1364 = vmatprep.subr.mxu0 0.0
        %1365 = vmatpush2.msra.mxu0 0.0
        %1366 = vmatprep.subr.mxu0 0.0
        %1367 = vmatpush2.msra.mxu0 0.0
        %1368 = vmatprep.subr.mxu0 0.0
        %1369 = vmatpush2.msra.mxu0 0.0
        %1370 = vmatprep.subr.mxu0 0.0
        %1371 = vmatpush2.msra.mxu0 0.0
        %1372 = vmatprep.subr.mxu0 0.0
        %1373 = vmatpush2.msra.mxu0 0.0
        %1374 = vmatprep.subr.mxu0 0.0
        %1375 = vmatpush2.msra.mxu0 0.0
        %1376 = vmatprep.subr.mxu0 0.0
        %1377 = vmatpush2.msra.mxu0 0.0
        %1378 = vmatprep.subr.mxu0 0.0
        %1379 = vmatpush2.msra.mxu0 0.0
        %1380 = vmatprep.subr.mxu0 0.0
        %1381 = vmatpush2.msra.mxu0 0.0
        %1382 = vmatprep.subr.mxu0 0.0
        %1383 = vmatpush2.msra.mxu0 0.0
        %1384 = vmatprep.subr.mxu0 0.0
        %1385 = vmatpush2.msra.mxu0 0.0
        %1386 = vmatprep.subr.mxu0 0.0
        %1387 = vmatpush2.msra.mxu0 0.0
        %1388 = vmatprep.subr.mxu0 0.0
        %1389 = vmatpush2.msra.mxu0 0.0
        %1390 = vmatprep.subr.mxu0 0.0
        %1391 = vmatpush2.msra.mxu0 0.0
        %1392 = vmatprep.subr.mxu0 0.0
        %1393 = vmatpush2.msra.mxu0 0.0
        %1394 = vmatprep.mubr.f32.mxu0 0.0
        %1395 = vmatmul.mubr.f32.gmra.mxu0 %v1068
        %v1396 = vpop.f32.mrf.mxu0
        %v1397 = vadd.f32 %v1228, %v1396
        %v1398 = vpop.f32.mrf.mxu0
        %v1399 = vadd.f32 %v1232, %v1398
        %1400 = vmatprep.mubr.f32.mxu0 0.0
        %1401 = vmatmul.mubr.f32.gmra.mxu0 %v1069
        %v1402 = vpop.f32.mrf.mxu0
        %v1403 = vadd.f32 %v1228, %v1402
        %v1404 = vpop.f32.mrf.mxu0
        %v1405 = vadd.f32 %v1232, %v1404
        %1406 = vmatprep.mubr.f32.mxu0 0.0
        %1407 = vmatmul.mubr.f32.gmra.mxu0 %v1070
        %v1408 = vpop.f32.mrf.mxu0
        %v1409 = vadd.f32 %v1228, %v1408
        %v1410 = vpop.f32.mrf.mxu0
        %v1411 = vadd.f32 %v1232, %v1410
        %1412 = vdwg.mxu0
        %1413 = vmatprep.subr.mxu0 %v1214
        %1414 = vmatpush1.msra.mxu0 %v1213
        %1415 = vmatprep.subr.mxu0 %v1208
        %1416 = vmatpush1.msra.mxu0 %v1207
        %1417 = vmatprep.subr.mxu0 %v1202
        %1418 = vmatpush1.msra.mxu0 %v1201
        %1419 = vmatprep.subr.mxu0 %v1196
        %1420 = vmatpush1.msra.mxu0 %v1195
        %1421 = vmatprep.subr.mxu0 %v1190
        %1422 = vmatpush1.msra.mxu0 %v1189
        %1423 = vmatprep.subr.mxu0 %v1184
        %1424 = vmatpush1.msra.mxu0 %v1183
        %1425 = vmatprep.subr.mxu0 %v1178
        %1426 = vmatpush1.msra.mxu0 %v1177
        %1427 = vmatprep.subr.mxu0 %v1172
        %1428 = vmatpush1.msra.mxu0 %v1171
        %1429 = vmatprep.subr.mxu0 %v1166
        %1430 = vmatpush1.msra.mxu0 %v1165
        %1431 = vmatprep.subr.mxu0 %v1160
        %1432 = vmatpush1.msra.mxu0 %v1159
        %1433 = vmatprep.subr.mxu0 %v1154
        %1434 = vmatpush1.msra.mxu0 %v1153
        %1435 = vmatprep.subr.mxu0 %v1148
        %1436 = vmatpush1.msra.mxu0 %v1147
        %1437 = vmatprep.subr.mxu0 %v1142
        %1438 = vmatpush1.msra.mxu0 %v1141
        %1439 = vmatprep.subr.mxu0 %v1136
        %1440 = vmatpush1.msra.mxu0 %v1135
        %1441 = vmatprep.subr.mxu0 %v1130
        %1442 = vmatpush1.msra.mxu0 %v1129
        %1443 = vmatprep.subr.mxu0 %v1124
        %1444 = vmatpush1.msra.mxu0 %v1123
        %1445 = vmatprep.subr.mxu0 0.0
        %1446 = vmatpush2.msra.mxu0 0.0
        %1447 = vmatprep.subr.mxu0 0.0
        %1448 = vmatpush2.msra.mxu0 0.0
        %1449 = vmatprep.subr.mxu0 0.0
        %1450 = vmatpush2.msra.mxu0 0.0
        %1451 = vmatprep.subr.mxu0 0.0
        %1452 = vmatpush2.msra.mxu0 0.0
        %1453 = vmatprep.subr.mxu0 0.0
        %1454 = vmatpush2.msra.mxu0 0.0
        %1455 = vmatprep.subr.mxu0 0.0
        %1456 = vmatpush2.msra.mxu0 0.0
        %1457 = vmatprep.subr.mxu0 0.0
        %1458 = vmatpush2.msra.mxu0 0.0
        %1459 = vmatprep.subr.mxu0 0.0
        %1460 = vmatpush2.msra.mxu0 0.0
        %1461 = vmatprep.subr.mxu0 0.0
        %1462 = vmatpush2.msra.mxu0 0.0
        %1463 = vmatprep.subr.mxu0 0.0
        %1464 = vmatpush2.msra.mxu0 0.0
        %1465 = vmatprep.subr.mxu0 0.0
        %1466 = vmatpush2.msra.mxu0 0.0
        %1467 = vmatprep.subr.mxu0 0.0
        %1468 = vmatpush2.msra.mxu0 0.0
        %1469 = vmatprep.subr.mxu0 0.0
        %1470 = vmatpush2.msra.mxu0 0.0
        %1471 = vmatprep.subr.mxu0 0.0
        %1472 = vmatpush2.msra.mxu0 0.0
        %1473 = vmatprep.subr.mxu0 0.0
        %1474 = vmatpush2.msra.mxu0 0.0
        %1475 = vmatprep.subr.mxu0 0.0
        %1476 = vmatpush2.msra.mxu0 0.0
        %1477 = vmatprep.mubr.f32.mxu0 0.0
        %1478 = vmatmul.mubr.f32.gmra.mxu0 %v1068
        %v1479 = vpop.f32.mrf.mxu0
        %v1480 = vadd.f32 %v1236, %v1479
        %v1481 = vpop.f32.mrf.mxu0
        %v1482 = vadd.f32 %v1240, %v1481
        %1483 = vmatprep.mubr.f32.mxu0 0.0
        %1484 = vmatmul.mubr.f32.gmra.mxu0 %v1069
        %v1485 = vpop.f32.mrf.mxu0
        %v1486 = vadd.f32 %v1236, %v1485
        %v1487 = vpop.f32.mrf.mxu0
        %v1488 = vadd.f32 %v1240, %v1487
        %1489 = vmatprep.mubr.f32.mxu0 0.0
        %1490 = vmatmul.mubr.f32.gmra.mxu0 %v1070
        %v1491 = vpop.f32.mrf.mxu0
        %v1492 = vadd.f32 %v1236, %v1491
        %v1493 = vpop.f32.mrf.mxu0
        %v1494 = vadd.f32 %v1240, %v1493
        %1495 = vdwg.mxu0
        %v1496 = vld [vmem:[#allocation8] sm:$0xff]
        %v1497 = vld [vmem:[#allocation8 + $0x8] sm:$0xff]
        %v1498 = vld [vmem:[#allocation8 + $0x10] sm:$0xff]
        %v1499 = vld [vmem:[#allocation8 + $0x18] sm:$0xff]
        %v1500 = vld [vmem:[#allocation8 + $0x20] sm:$0xff]
        %v1501 = vld [vmem:[#allocation8 + $0x28] sm:$0xff]
        %v1502 = vld [vmem:[#allocation8 + $0x30] sm:$0xff]
        %v1503 = vld [vmem:[#allocation8 + $0x38] sm:$0xff]
        %v1504 = vld [vmem:[#allocation8 + $0x40] sm:$0xff]
        %v1505 = vld [vmem:[#allocation8 + $0x48] sm:$0xff]
        %v1506 = vld [vmem:[#allocation8 + $0x50] sm:$0xff]
        %v1507 = vld [vmem:[#allocation8 + $0x58] sm:$0xff]
        %v1508 = vld [vmem:[#allocation8 + $0x60] sm:$0xff]
        %v1509 = vld [vmem:[#allocation8 + $0x68] sm:$0xff]
        %v1510 = vld [vmem:[#allocation8 + $0x70] sm:$0xff]
        %v1511 = vld [vmem:[#allocation8 + $0x78] sm:$0xff]
        %v1512 = vld [vmem:[#allocation8 + $0x80] sm:$0xff]
        %v1513 = vld [vmem:[#allocation8 + $0x88] sm:$0xff]
        %v1514 = vld [vmem:[#allocation8 + $0x90] sm:$0xff]
        %v1515 = vld [vmem:[#allocation8 + $0x98] sm:$0xff]
        %v1516 = vld [vmem:[#allocation8 + $0xa0] sm:$0xff]
        %v1517 = vld [vmem:[#allocation8 + $0xa8] sm:$0xff]
        %v1518 = vld [vmem:[#allocation8 + $0xb0] sm:$0xff]
        %v1519 = vld [vmem:[#allocation8 + $0xb8] sm:$0xff]
        %v1520 = vld [vmem:[#allocation8 + $0xc0] sm:$0xff]
        %v1521 = vld [vmem:[#allocation8 + $0xc8] sm:$0xff]
        %v1522 = vld [vmem:[#allocation8 + $0xd0] sm:$0xff]
        %v1523 = vld [vmem:[#allocation8 + $0xd8] sm:$0xff]
        %v1524 = vld [vmem:[#allocation8 + $0xe0] sm:$0xff]
        %v1525 = vld [vmem:[#allocation8 + $0xe8] sm:$0xff]
        %v1526 = vld [vmem:[#allocation8 + $0xf0] sm:$0xff]
        %v1527 = vld [vmem:[#allocation8 + $0xf8] sm:$0xff]
        %v1528 = vld [vmem:[#allocation8 + $0x100] sm:$0xff]
        %v1529 = vld [vmem:[#allocation8 + $0x108] sm:$0xff]
        %v1530 = vld [vmem:[#allocation8 + $0x110] sm:$0xff]
        %v1531 = vld [vmem:[#allocation8 + $0x118] sm:$0xff]
        %v1532 = vld [vmem:[#allocation8 + $0x120] sm:$0xff]
        %v1533 = vld [vmem:[#allocation8 + $0x128] sm:$0xff]
        %v1534 = vld [vmem:[#allocation8 + $0x130] sm:$0xff]
        %v1535 = vld [vmem:[#allocation8 + $0x138] sm:$0xff]
        %v1536 = vld [vmem:[#allocation8 + $0x140] sm:$0xff]
        %v1537 = vld [vmem:[#allocation8 + $0x148] sm:$0xff]
        %v1538 = vld [vmem:[#allocation8 + $0x150] sm:$0xff]
        %v1539 = vld [vmem:[#allocation8 + $0x158] sm:$0xff]
        %v1540 = vld [vmem:[#allocation8 + $0x160] sm:$0xff]
        %v1541 = vld [vmem:[#allocation8 + $0x168] sm:$0xff]
        %v1542 = vld [vmem:[#allocation8 + $0x170] sm:$0xff]
        %v1543 = vld [vmem:[#allocation8 + $0x178] sm:$0xff]
        %v1544 = vld [vmem:[#allocation8 + $0x180] sm:$0xff]
        %v1545 = vld [vmem:[#allocation8 + $0x188] sm:$0xff]
        %v1546 = vld [vmem:[#allocation8 + $0x190] sm:$0xff]
        %v1547 = vld [vmem:[#allocation8 + $0x198] sm:$0xff]
        %v1548 = vld [vmem:[#allocation8 + $0x1a0] sm:$0xff]
        %v1549 = vld [vmem:[#allocation8 + $0x1a8] sm:$0xff]
        %v1550 = vld [vmem:[#allocation8 + $0x1b0] sm:$0xff]
        %v1551 = vld [vmem:[#allocation8 + $0x1b8] sm:$0xff]
        %v1552 = vld [vmem:[#allocation8 + $0x1c0] sm:$0xff]
        %v1553 = vld [vmem:[#allocation8 + $0x1c8] sm:$0xff]
        %v1554 = vld [vmem:[#allocation8 + $0x1d0] sm:$0xff]
        %v1555 = vld [vmem:[#allocation8 + $0x1d8] sm:$0xff]
        %v1556 = vld [vmem:[#allocation8 + $0x1e0] sm:$0xff]
        %v1557 = vld [vmem:[#allocation8 + $0x1e8] sm:$0xff]
        %v1558 = vld [vmem:[#allocation8 + $0x1f0] sm:$0xff]
        %v1559 = vld [vmem:[#allocation8 + $0x1f8] sm:$0xff]
        %v1560 = vld [vmem:[#allocation8 + $0x200] sm:$0xff]
        %v1561 = vld [vmem:[#allocation8 + $0x208] sm:$0xff]
        %v1562 = vld [vmem:[#allocation8 + $0x210] sm:$0xff]
        %v1563 = vld [vmem:[#allocation8 + $0x218] sm:$0xff]
        %v1564 = vld [vmem:[#allocation8 + $0x220] sm:$0xff]
        %v1565 = vld [vmem:[#allocation8 + $0x228] sm:$0xff]
        %v1566 = vld [vmem:[#allocation8 + $0x230] sm:$0xff]
        %v1567 = vld [vmem:[#allocation8 + $0x238] sm:$0xff]
        %v1568 = vld [vmem:[#allocation8 + $0x240] sm:$0xff]
        %v1569 = vld [vmem:[#allocation8 + $0x248] sm:$0xff]
        %v1570 = vld [vmem:[#allocation8 + $0x250] sm:$0xff]
        %v1571 = vld [vmem:[#allocation8 + $0x258] sm:$0xff]
        %v1572 = vld [vmem:[#allocation8 + $0x260] sm:$0xff]
        %v1573 = vld [vmem:[#allocation8 + $0x268] sm:$0xff]
        %v1574 = vld [vmem:[#allocation8 + $0x270] sm:$0xff]
        %v1575 = vld [vmem:[#allocation8 + $0x278] sm:$0xff]
        %v1576 = vld [vmem:[#allocation8 + $0x280] sm:$0xff]
        %v1577 = vld [vmem:[#allocation8 + $0x288] sm:$0xff]
        %v1578 = vld [vmem:[#allocation8 + $0x290] sm:$0xff]
        %v1579 = vld [vmem:[#allocation8 + $0x298] sm:$0xff]
        %v1580 = vld [vmem:[#allocation8 + $0x2a0] sm:$0xff]
        %v1581 = vld [vmem:[#allocation8 + $0x2a8] sm:$0xff]
        %v1582 = vld [vmem:[#allocation8 + $0x2b0] sm:$0xff]
        %v1583 = vld [vmem:[#allocation8 + $0x2b8] sm:$0xff]
        %v1584 = vld [vmem:[#allocation8 + $0x2c0] sm:$0xff]
        %v1585 = vld [vmem:[#allocation8 + $0x2c8] sm:$0xff]
        %v1586 = vld [vmem:[#allocation8 + $0x2d0] sm:$0xff]
        %v1587 = vld [vmem:[#allocation8 + $0x2d8] sm:$0xff]
        %v1588 = vld [vmem:[#allocation8 + $0x2e0] sm:$0xff]
        %v1589 = vld [vmem:[#allocation8 + $0x2e8] sm:$0xff]
        %v1590 = vld [vmem:[#allocation8 + $0x2f0] sm:$0xff]
        %v1591 = vld [vmem:[#allocation8 + $0x2f8] sm:$0xff]
        %v1592 = vunpack.c.l.bf16 %v1496
        %v1593 = vunpack.c.h.bf16 %v1496
        %v1594 = vunpack.c.l.bf16 %v1497
        %v1595 = vunpack.c.h.bf16 %v1497
        %v1596 = vunpack.c.l.bf16 %v1498
        %v1597 = vunpack.c.h.bf16 %v1498
        %v1598 = vunpack.c.l.bf16 %v1499
        %v1599 = vunpack.c.h.bf16 %v1499
        %v1600 = vunpack.c.l.bf16 %v1500
        %v1601 = vunpack.c.h.bf16 %v1500
        %v1602 = vunpack.c.l.bf16 %v1501
        %v1603 = vunpack.c.h.bf16 %v1501
        %v1604 = vunpack.c.l.bf16 %v1502
        %v1605 = vunpack.c.h.bf16 %v1502
        %v1606 = vunpack.c.l.bf16 %v1503
        %v1607 = vunpack.c.h.bf16 %v1503
        %v1608 = vunpack.c.l.bf16 %v1504
        %v1609 = vunpack.c.h.bf16 %v1504
        %v1610 = vunpack.c.l.bf16 %v1505
        %v1611 = vunpack.c.h.bf16 %v1505
        %v1612 = vunpack.c.l.bf16 %v1506
        %v1613 = vunpack.c.h.bf16 %v1506
        %v1614 = vunpack.c.l.bf16 %v1507
        %v1615 = vunpack.c.h.bf16 %v1507
        %v1616 = vunpack.c.l.bf16 %v1508
        %v1617 = vunpack.c.h.bf16 %v1508
        %v1618 = vunpack.c.l.bf16 %v1509
        %v1619 = vunpack.c.h.bf16 %v1509
        %v1620 = vunpack.c.l.bf16 %v1510
        %v1621 = vunpack.c.h.bf16 %v1510
        %v1622 = vunpack.c.l.bf16 %v1511
        %v1623 = vunpack.c.h.bf16 %v1511
        %v1624 = vunpack.c.l.bf16 %v1512
        %v1625 = vunpack.c.h.bf16 %v1512
        %v1626 = vunpack.c.l.bf16 %v1513
        %v1627 = vunpack.c.h.bf16 %v1513
        %v1628 = vunpack.c.l.bf16 %v1514
        %v1629 = vunpack.c.h.bf16 %v1514
        %v1630 = vunpack.c.l.bf16 %v1515
        %v1631 = vunpack.c.h.bf16 %v1515
        %v1632 = vunpack.c.l.bf16 %v1516
        %v1633 = vunpack.c.h.bf16 %v1516
        %v1634 = vunpack.c.l.bf16 %v1517
        %v1635 = vunpack.c.h.bf16 %v1517
        %v1636 = vunpack.c.l.bf16 %v1518
        %v1637 = vunpack.c.h.bf16 %v1518
        %v1638 = vunpack.c.l.bf16 %v1519
        %v1639 = vunpack.c.h.bf16 %v1519
        %v1640 = vunpack.c.l.bf16 %v1520
        %v1641 = vunpack.c.h.bf16 %v1520
        %v1642 = vunpack.c.l.bf16 %v1521
        %v1643 = vunpack.c.h.bf16 %v1521
        %v1644 = vunpack.c.l.bf16 %v1522
        %v1645 = vunpack.c.h.bf16 %v1522
        %v1646 = vunpack.c.l.bf16 %v1523
        %v1647 = vunpack.c.h.bf16 %v1523
        %v1648 = vunpack.c.l.bf16 %v1524
        %v1649 = vunpack.c.h.bf16 %v1524
        %v1650 = vunpack.c.l.bf16 %v1525
        %v1651 = vunpack.c.h.bf16 %v1525
        %v1652 = vunpack.c.l.bf16 %v1526
        %v1653 = vunpack.c.h.bf16 %v1526
        %v1654 = vunpack.c.l.bf16 %v1527
        %v1655 = vunpack.c.h.bf16 %v1527
        %v1656 = vunpack.c.l.bf16 %v1528
        %v1657 = vunpack.c.h.bf16 %v1528
        %v1658 = vunpack.c.l.bf16 %v1529
        %v1659 = vunpack.c.h.bf16 %v1529
        %v1660 = vunpack.c.l.bf16 %v1530
        %v1661 = vunpack.c.h.bf16 %v1530
        %v1662 = vunpack.c.l.bf16 %v1531
        %v1663 = vunpack.c.h.bf16 %v1531
        %v1664 = vunpack.c.l.bf16 %v1532
        %v1665 = vunpack.c.h.bf16 %v1532
        %v1666 = vunpack.c.l.bf16 %v1533
        %v1667 = vunpack.c.h.bf16 %v1533
        %v1668 = vunpack.c.l.bf16 %v1534
        %v1669 = vunpack.c.h.bf16 %v1534
        %v1670 = vunpack.c.l.bf16 %v1535
        %v1671 = vunpack.c.h.bf16 %v1535
        %v1672 = vunpack.c.l.bf16 %v1536
        %v1673 = vunpack.c.h.bf16 %v1536
        %v1674 = vunpack.c.l.bf16 %v1537
        %v1675 = vunpack.c.h.bf16 %v1537
        %v1676 = vunpack.c.l.bf16 %v1538
        %v1677 = vunpack.c.h.bf16 %v1538
        %v1678 = vunpack.c.l.bf16 %v1539
        %v1679 = vunpack.c.h.bf16 %v1539
        %v1680 = vunpack.c.l.bf16 %v1540
        %v1681 = vunpack.c.h.bf16 %v1540
        %v1682 = vunpack.c.l.bf16 %v1541
        %v1683 = vunpack.c.h.bf16 %v1541
        %v1684 = vunpack.c.l.bf16 %v1542
        %v1685 = vunpack.c.h.bf16 %v1542
        %v1686 = vunpack.c.l.bf16 %v1543
        %v1687 = vunpack.c.h.bf16 %v1543
        %v1688 = vunpack.c.l.bf16 %v1544
        %v1689 = vunpack.c.h.bf16 %v1544
        %v1690 = vunpack.c.l.bf16 %v1545
        %v1691 = vunpack.c.h.bf16 %v1545
        %v1692 = vunpack.c.l.bf16 %v1546
        %v1693 = vunpack.c.h.bf16 %v1546
        %v1694 = vunpack.c.l.bf16 %v1547
        %v1695 = vunpack.c.h.bf16 %v1547
        %v1696 = vunpack.c.l.bf16 %v1548
        %v1697 = vunpack.c.h.bf16 %v1548
        %v1698 = vunpack.c.l.bf16 %v1549
        %v1699 = vunpack.c.h.bf16 %v1549
        %v1700 = vunpack.c.l.bf16 %v1550
        %v1701 = vunpack.c.h.bf16 %v1550
        %v1702 = vunpack.c.l.bf16 %v1551
        %v1703 = vunpack.c.h.bf16 %v1551
        %v1704 = vunpack.c.l.bf16 %v1552
        %v1705 = vunpack.c.h.bf16 %v1552
        %v1706 = vunpack.c.l.bf16 %v1553
        %v1707 = vunpack.c.h.bf16 %v1553
        %v1708 = vunpack.c.l.bf16 %v1554
        %v1709 = vunpack.c.h.bf16 %v1554
        %v1710 = vunpack.c.l.bf16 %v1555
        %v1711 = vunpack.c.h.bf16 %v1555
        %v1712 = vunpack.c.l.bf16 %v1556
        %v1713 = vunpack.c.h.bf16 %v1556
        %v1714 = vunpack.c.l.bf16 %v1557
        %v1715 = vunpack.c.h.bf16 %v1557
        %v1716 = vunpack.c.l.bf16 %v1558
        %v1717 = vunpack.c.h.bf16 %v1558
        %v1718 = vunpack.c.l.bf16 %v1559
        %v1719 = vunpack.c.h.bf16 %v1559
        %v1720 = vunpack.c.l.bf16 %v1560
        %v1721 = vunpack.c.h.bf16 %v1560
        %v1722 = vunpack.c.l.bf16 %v1561
        %v1723 = vunpack.c.h.bf16 %v1561
        %v1724 = vunpack.c.l.bf16 %v1562
        %v1725 = vunpack.c.h.bf16 %v1562
        %v1726 = vunpack.c.l.bf16 %v1563
        %v1727 = vunpack.c.h.bf16 %v1563
        %v1728 = vunpack.c.l.bf16 %v1564
        %v1729 = vunpack.c.h.bf16 %v1564
        %v1730 = vunpack.c.l.bf16 %v1565
        %v1731 = vunpack.c.h.bf16 %v1565
        %v1732 = vunpack.c.l.bf16 %v1566
        %v1733 = vunpack.c.h.bf16 %v1566
        %v1734 = vunpack.c.l.bf16 %v1567
        %v1735 = vunpack.c.h.bf16 %v1567
        %v1736 = vunpack.c.l.bf16 %v1568
        %v1737 = vunpack.c.h.bf16 %v1568
        %v1738 = vunpack.c.l.bf16 %v1569
        %v1739 = vunpack.c.h.bf16 %v1569
        %v1740 = vunpack.c.l.bf16 %v1570
        %v1741 = vunpack.c.h.bf16 %v1570
        %v1742 = vunpack.c.l.bf16 %v1571
        %v1743 = vunpack.c.h.bf16 %v1571
        %v1744 = vunpack.c.l.bf16 %v1572
        %v1745 = vunpack.c.h.bf16 %v1572
        %v1746 = vunpack.c.l.bf16 %v1573
        %v1747 = vunpack.c.h.bf16 %v1573
        %v1748 = vunpack.c.l.bf16 %v1574
        %v1749 = vunpack.c.h.bf16 %v1574
        %v1750 = vunpack.c.l.bf16 %v1575
        %v1751 = vunpack.c.h.bf16 %v1575
        %v1752 = vunpack.c.l.bf16 %v1576
        %v1753 = vunpack.c.h.bf16 %v1576
        %v1754 = vunpack.c.l.bf16 %v1577
        %v1755 = vunpack.c.h.bf16 %v1577
        %v1756 = vunpack.c.l.bf16 %v1578
        %v1757 = vunpack.c.h.bf16 %v1578
        %v1758 = vunpack.c.l.bf16 %v1579
        %v1759 = vunpack.c.h.bf16 %v1579
        %v1760 = vunpack.c.l.bf16 %v1580
        %v1761 = vunpack.c.h.bf16 %v1580
        %v1762 = vunpack.c.l.bf16 %v1581
        %v1763 = vunpack.c.h.bf16 %v1581
        %v1764 = vunpack.c.l.bf16 %v1582
        %v1765 = vunpack.c.h.bf16 %v1582
        %v1766 = vunpack.c.l.bf16 %v1583
        %v1767 = vunpack.c.h.bf16 %v1583
        %v1768 = vunpack.c.l.bf16 %v1584
        %v1769 = vunpack.c.h.bf16 %v1584
        %v1770 = vunpack.c.l.bf16 %v1585
        %v1771 = vunpack.c.h.bf16 %v1585
        %v1772 = vunpack.c.l.bf16 %v1586
        %v1773 = vunpack.c.h.bf16 %v1586
        %v1774 = vunpack.c.l.bf16 %v1587
        %v1775 = vunpack.c.h.bf16 %v1587
        %v1776 = vunpack.c.l.bf16 %v1588
        %v1777 = vunpack.c.h.bf16 %v1588
        %v1778 = vunpack.c.l.bf16 %v1589
        %v1779 = vunpack.c.h.bf16 %v1589
        %v1780 = vunpack.c.l.bf16 %v1590
        %v1781 = vunpack.c.h.bf16 %v1590
        %v1782 = vunpack.c.l.bf16 %v1591
        %v1783 = vunpack.c.h.bf16 %v1591
        %v1784 = vld [vmem:[%s4] sm:$0x3f]
        %v1786 = vlaneseq
        %v1787 = vshrl.u32 %v1786, 7
        %v1788 = vsub.s32 0, %v1787
        %v1789 = vrot.slane %v1784, %v1788
        %v1790 = vlaneseq
        %v1791 = vshrl.u32 %v1790, 7
        %v1792 = vsub.s32 1, %v1791
        %v1793 = vrot.slane %v1784, %v1792
        %v1794 = vlaneseq
        %v1795 = vshrl.u32 %v1794, 7
        %v1796 = vsub.s32 2, %v1795
        %v1797 = vrot.slane %v1784, %v1796
        %v1798 = vlaneseq
        %v1799 = vshrl.u32 %v1798, 7
        %v1800 = vsub.s32 3, %v1799
        %v1801 = vrot.slane %v1784, %v1800
        %v1802 = vlaneseq
        %v1803 = vshrl.u32 %v1802, 7
        %v1804 = vsub.s32 4, %v1803
        %v1805 = vrot.slane %v1784, %v1804
        %v1806 = vlaneseq
        %v1807 = vshrl.u32 %v1806, 7
        %v1808 = vsub.s32 5, %v1807
        %v1809 = vrot.slane %v1784, %v1808
        %1816 = vmatprep.subr.mxu0 %v1683
        %1817 = vmatpush1.msra.mxu0 %v1682
        %1818 = vmatprep.subr.mxu0 %v1677
        %1819 = vmatpush1.msra.mxu0 %v1676
        %1820 = vmatprep.subr.mxu0 %v1671
        %1821 = vmatpush1.msra.mxu0 %v1670
        %1822 = vmatprep.subr.mxu0 %v1665
        %1823 = vmatpush1.msra.mxu0 %v1664
        %1824 = vmatprep.subr.mxu0 %v1659
        %1825 = vmatpush1.msra.mxu0 %v1658
        %1826 = vmatprep.subr.mxu0 %v1653
        %1827 = vmatpush1.msra.mxu0 %v1652
        %1828 = vmatprep.subr.mxu0 %v1647
        %1829 = vmatpush1.msra.mxu0 %v1646
        %1830 = vmatprep.subr.mxu0 %v1641
        %1831 = vmatpush1.msra.mxu0 %v1640
        %1832 = vmatprep.subr.mxu0 %v1635
        %1833 = vmatpush1.msra.mxu0 %v1634
        %1834 = vmatprep.subr.mxu0 %v1629
        %1835 = vmatpush1.msra.mxu0 %v1628
        %1836 = vmatprep.subr.mxu0 %v1623
        %1837 = vmatpush1.msra.mxu0 %v1622
        %1838 = vmatprep.subr.mxu0 %v1617
        %1839 = vmatpush1.msra.mxu0 %v1616
        %1840 = vmatprep.subr.mxu0 %v1611
        %1841 = vmatpush1.msra.mxu0 %v1610
        %1842 = vmatprep.subr.mxu0 %v1605
        %1843 = vmatpush1.msra.mxu0 %v1604
        %1844 = vmatprep.subr.mxu0 %v1599
        %1845 = vmatpush1.msra.mxu0 %v1598
        %1846 = vmatprep.subr.mxu0 %v1593
        %1847 = vmatpush1.msra.mxu0 %v1592
        %1848 = vmatprep.subr.mxu0 %v1779
        %1849 = vmatpush2.msra.mxu0 %v1778
        %1850 = vmatprep.subr.mxu0 %v1773
        %1851 = vmatpush2.msra.mxu0 %v1772
        %1852 = vmatprep.subr.mxu0 %v1767
        %1853 = vmatpush2.msra.mxu0 %v1766
        %1854 = vmatprep.subr.mxu0 %v1761
        %1855 = vmatpush2.msra.mxu0 %v1760
        %1856 = vmatprep.subr.mxu0 %v1755
        %1857 = vmatpush2.msra.mxu0 %v1754
        %1858 = vmatprep.subr.mxu0 %v1749
        %1859 = vmatpush2.msra.mxu0 %v1748
        %1860 = vmatprep.subr.mxu0 %v1743
        %1861 = vmatpush2.msra.mxu0 %v1742
        %1862 = vmatprep.subr.mxu0 %v1737
        %1863 = vmatpush2.msra.mxu0 %v1736
        %1864 = vmatprep.subr.mxu0 %v1731
        %1865 = vmatpush2.msra.mxu0 %v1730
        %1866 = vmatprep.subr.mxu0 %v1725
        %1867 = vmatpush2.msra.mxu0 %v1724
        %1868 = vmatprep.subr.mxu0 %v1719
        %1869 = vmatpush2.msra.mxu0 %v1718
        %1870 = vmatprep.subr.mxu0 %v1713
        %1871 = vmatpush2.msra.mxu0 %v1712
        %1872 = vmatprep.subr.mxu0 %v1707
        %1873 = vmatpush2.msra.mxu0 %v1706
        %1874 = vmatprep.subr.mxu0 %v1701
        %1875 = vmatpush2.msra.mxu0 %v1700
        %1876 = vmatprep.subr.mxu0 %v1695
        %1877 = vmatpush2.msra.mxu0 %v1694
        %1878 = vmatprep.subr.mxu0 %v1689
        %1879 = vmatpush2.msra.mxu0 %v1688
        %1880 = vmatprep.mubr.f32.mxu0 0.0
        %1881 = vmatmul.mubr.f32.gmra.mxu0 0.0
        %v1882 = vpop.f32.mrf.mxu0
        %v1883 = vadd.f32 %v1789, %v1882
        %v1884 = vpop.f32.mrf.mxu0
        %v1885 = vadd.f32 %v1793, %v1884
        %1886 = vdwg.mxu0
        %1887 = vmatprep.subr.mxu0 %v1685
        %1888 = vmatpush1.msra.mxu0 %v1684
        %1889 = vmatprep.subr.mxu0 %v1679
        %1890 = vmatpush1.msra.mxu0 %v1678
        %1891 = vmatprep.subr.mxu0 %v1673
        %1892 = vmatpush1.msra.mxu0 %v1672
        %1893 = vmatprep.subr.mxu0 %v1667
        %1894 = vmatpush1.msra.mxu0 %v1666
        %1895 = vmatprep.subr.mxu0 %v1661
        %1896 = vmatpush1.msra.mxu0 %v1660
        %1897 = vmatprep.subr.mxu0 %v1655
        %1898 = vmatpush1.msra.mxu0 %v1654
        %1899 = vmatprep.subr.mxu0 %v1649
        %1900 = vmatpush1.msra.mxu0 %v1648
        %1901 = vmatprep.subr.mxu0 %v1643
        %1902 = vmatpush1.msra.mxu0 %v1642
        %1903 = vmatprep.subr.mxu0 %v1637
        %1904 = vmatpush1.msra.mxu0 %v1636
        %1905 = vmatprep.subr.mxu0 %v1631
        %1906 = vmatpush1.msra.mxu0 %v1630
        %1907 = vmatprep.subr.mxu0 %v1625
        %1908 = vmatpush1.msra.mxu0 %v1624
        %1909 = vmatprep.subr.mxu0 %v1619
        %1910 = vmatpush1.msra.mxu0 %v1618
        %1911 = vmatprep.subr.mxu0 %v1613
        %1912 = vmatpush1.msra.mxu0 %v1612
        %1913 = vmatprep.subr.mxu0 %v1607
        %1914 = vmatpush1.msra.mxu0 %v1606
        %1915 = vmatprep.subr.mxu0 %v1601
        %1916 = vmatpush1.msra.mxu0 %v1600
        %1917 = vmatprep.subr.mxu0 %v1595
        %1918 = vmatpush1.msra.mxu0 %v1594
        %1919 = vmatprep.subr.mxu0 %v1781
        %1920 = vmatpush2.msra.mxu0 %v1780
        %1921 = vmatprep.subr.mxu0 %v1775
        %1922 = vmatpush2.msra.mxu0 %v1774
        %1923 = vmatprep.subr.mxu0 %v1769
        %1924 = vmatpush2.msra.mxu0 %v1768
        %1925 = vmatprep.subr.mxu0 %v1763
        %1926 = vmatpush2.msra.mxu0 %v1762
        %1927 = vmatprep.subr.mxu0 %v1757
        %1928 = vmatpush2.msra.mxu0 %v1756
        %1929 = vmatprep.subr.mxu0 %v1751
        %1930 = vmatpush2.msra.mxu0 %v1750
        %1931 = vmatprep.subr.mxu0 %v1745
        %1932 = vmatpush2.msra.mxu0 %v1744
        %1933 = vmatprep.subr.mxu0 %v1739
        %1934 = vmatpush2.msra.mxu0 %v1738
        %1935 = vmatprep.subr.mxu0 %v1733
        %1936 = vmatpush2.msra.mxu0 %v1732
        %1937 = vmatprep.subr.mxu0 %v1727
        %1938 = vmatpush2.msra.mxu0 %v1726
        %1939 = vmatprep.subr.mxu0 %v1721
        %1940 = vmatpush2.msra.mxu0 %v1720
        %1941 = vmatprep.subr.mxu0 %v1715
        %1942 = vmatpush2.msra.mxu0 %v1714
        %1943 = vmatprep.subr.mxu0 %v1709
        %1944 = vmatpush2.msra.mxu0 %v1708
        %1945 = vmatprep.subr.mxu0 %v1703
        %1946 = vmatpush2.msra.mxu0 %v1702
        %1947 = vmatprep.subr.mxu0 %v1697
        %1948 = vmatpush2.msra.mxu0 %v1696
        %1949 = vmatprep.subr.mxu0 %v1691
        %1950 = vmatpush2.msra.mxu0 %v1690
        %1951 = vmatprep.mubr.f32.mxu0 0.0
        %1952 = vmatmul.mubr.f32.gmra.mxu0 0.0
        %v1953 = vpop.f32.mrf.mxu0
        %v1954 = vadd.f32 %v1797, %v1953
        %v1955 = vpop.f32.mrf.mxu0
        %v1956 = vadd.f32 %v1801, %v1955
        %1957 = vdwg.mxu0
        %1958 = vmatprep.subr.mxu0 %v1687
        %1959 = vmatpush1.msra.mxu0 %v1686
        %1960 = vmatprep.subr.mxu0 %v1681
        %1961 = vmatpush1.msra.mxu0 %v1680
        %1962 = vmatprep.subr.mxu0 %v1675
        %1963 = vmatpush1.msra.mxu0 %v1674
        %1964 = vmatprep.subr.mxu0 %v1669
        %1965 = vmatpush1.msra.mxu0 %v1668
        %1966 = vmatprep.subr.mxu0 %v1663
        %1967 = vmatpush1.msra.mxu0 %v1662
        %1968 = vmatprep.subr.mxu0 %v1657
        %1969 = vmatpush1.msra.mxu0 %v1656
        %1970 = vmatprep.subr.mxu0 %v1651
        %1971 = vmatpush1.msra.mxu0 %v1650
        %1972 = vmatprep.subr.mxu0 %v1645
        %1973 = vmatpush1.msra.mxu0 %v1644
        %1974 = vmatprep.subr.mxu0 %v1639
        %1975 = vmatpush1.msra.mxu0 %v1638
        %1976 = vmatprep.subr.mxu0 %v1633
        %1977 = vmatpush1.msra.mxu0 %v1632
        %1978 = vmatprep.subr.mxu0 %v1627
        %1979 = vmatpush1.msra.mxu0 %v1626
        %1980 = vmatprep.subr.mxu0 %v1621
        %1981 = vmatpush1.msra.mxu0 %v1620
        %1982 = vmatprep.subr.mxu0 %v1615
        %1983 = vmatpush1.msra.mxu0 %v1614
        %1984 = vmatprep.subr.mxu0 %v1609
        %1985 = vmatpush1.msra.mxu0 %v1608
        %1986 = vmatprep.subr.mxu0 %v1603
        %1987 = vmatpush1.msra.mxu0 %v1602
        %1988 = vmatprep.subr.mxu0 %v1597
        %1989 = vmatpush1.msra.mxu0 %v1596
        %1990 = vmatprep.subr.mxu0 %v1783
        %1991 = vmatpush2.msra.mxu0 %v1782
        %1992 = vmatprep.subr.mxu0 %v1777
        %1993 = vmatpush2.msra.mxu0 %v1776
        %1994 = vmatprep.subr.mxu0 %v1771
        %1995 = vmatpush2.msra.mxu0 %v1770
        %1996 = vmatprep.subr.mxu0 %v1765
        %1997 = vmatpush2.msra.mxu0 %v1764
        %1998 = vmatprep.subr.mxu0 %v1759
        %1999 = vmatpush2.msra.mxu0 %v1758
        %2000 = vmatprep.subr.mxu0 %v1753
        %2001 = vmatpush2.msra.mxu0 %v1752
        %2002 = vmatprep.subr.mxu0 %v1747
        %2003 = vmatpush2.msra.mxu0 %v1746
        %2004 = vmatprep.subr.mxu0 %v1741
        %2005 = vmatpush2.msra.mxu0 %v1740
        %2006 = vmatprep.subr.mxu0 %v1735
        %2007 = vmatpush2.msra.mxu0 %v1734
        %2008 = vmatprep.subr.mxu0 %v1729
        %2009 = vmatpush2.msra.mxu0 %v1728
        %2010 = vmatprep.subr.mxu0 %v1723
        %2011 = vmatpush2.msra.mxu0 %v1722
        %2012 = vmatprep.subr.mxu0 %v1717
        %2013 = vmatpush2.msra.mxu0 %v1716
        %2014 = vmatprep.subr.mxu0 %v1711
        %2015 = vmatpush2.msra.mxu0 %v1710
        %2016 = vmatprep.subr.mxu0 %v1705
        %2017 = vmatpush2.msra.mxu0 %v1704
        %2018 = vmatprep.subr.mxu0 %v1699
        %2019 = vmatpush2.msra.mxu0 %v1698
        %2020 = vmatprep.subr.mxu0 %v1693
        %2021 = vmatpush2.msra.mxu0 %v1692
        %2022 = vmatprep.mubr.f32.mxu0 0.0
        %2023 = vmatmul.mubr.f32.gmra.mxu0 0.0
        %v2024 = vpop.f32.mrf.mxu0
        %v2025 = vadd.f32 %v1805, %v2024
        %v2026 = vpop.f32.mrf.mxu0
        %v2027 = vadd.f32 %v1809, %v2026
        %2028 = vdwg.mxu0
        %v2029 = vadd.f32 %v1314, %v1883
        %v2030 = vadd.f32 %v1316, %v1885
        %v2031 = vxor.u32 %v2029, 2147483648
        %v2032 = vxor.u32 %v2030, 2147483648
        %v2033 = vmul.f32 %v2031, 1.442695
        %v2034 = vpow.pop %v2033
        %v2035 = vmul.f32 %v2032, 1.442695
        %v2036 = vpow.pop %v2035
        %v2037 = vadd.f32 %v2034, 1.0
        %v2038 = vadd.f32 %v2036, 1.0
        %v2039 = vrcp.pop %v2037
        %v2040 = vmul.f32 1.0, %v2039
        %v2041 = vrcp.pop %v2038
        %v2042 = vmul.f32 1.0, %v2041
        %v2043 = vadd.f32 %v1397, %v1954
        %v2044 = vadd.f32 %v1399, %v1956
        %v2045 = vxor.u32 %v2043, 2147483648
        %v2046 = vxor.u32 %v2044, 2147483648
        %v2047 = vmul.f32 %v2045, 1.442695
        %v2048 = vpow.pop %v2047
        %v2049 = vmul.f32 %v2046, 1.442695
        %v2050 = vpow.pop %v2049
        %v2051 = vadd.f32 %v2048, 1.0
        %v2052 = vadd.f32 %v2050, 1.0
        %v2053 = vrcp.pop %v2051
        %v2054 = vmul.f32 1.0, %v2053
        %v2055 = vrcp.pop %v2052
        %v2056 = vmul.f32 1.0, %v2055
        %v2057 = vmul.f32 %v2040, %v2025
        %v2058 = vmul.f32 %v2042, %v2027
        %v2059 = vadd.f32 %v1480, %v2057
        %v2060 = vadd.f32 %v1482, %v2058
        %v2061 = vtanh.pop %v2059
        %v2062 = vtanh.pop %v2060
        %v2063 = vsub.f32 1.0, %v2054
        %v2064 = vsub.f32 1.0, %v2056
        %v2065 = vmul.f32 %v2063, %v2061
        %v2066 = vmul.f32 %v2064, %v2062
        %v2067 = vmul.f32 %v2054, 0.0
        %v2068 = vmul.f32 %v2056, 0.0
        %v2069 = vadd.f32 %v2065, %v2067
        %v2070 = vadd.f32 %v2066, %v2068
        %2071 = vmatprep.subr.mxu0 %v1683
        %2072 = vmatpush1.msra.mxu0 %v1682
        %2073 = vmatprep.subr.mxu0 %v1677
        %2074 = vmatpush1.msra.mxu0 %v1676
        %2075 = vmatprep.subr.mxu0 %v1671
        %2076 = vmatpush1.msra.mxu0 %v1670
        %2077 = vmatprep.subr.mxu0 %v1665
        %2078 = vmatpush1.msra.mxu0 %v1664
        %2079 = vmatprep.subr.mxu0 %v1659
        %2080 = vmatpush1.msra.mxu0 %v1658
        %2081 = vmatprep.subr.mxu0 %v1653
        %2082 = vmatpush1.msra.mxu0 %v1652
        %2083 = vmatprep.subr.mxu0 %v1647
        %2084 = vmatpush1.msra.mxu0 %v1646
        %2085 = vmatprep.subr.mxu0 %v1641
        %2086 = vmatpush1.msra.mxu0 %v1640
        %2087 = vmatprep.subr.mxu0 %v1635
        %2088 = vmatpush1.msra.mxu0 %v1634
        %2089 = vmatprep.subr.mxu0 %v1629
        %2090 = vmatpush1.msra.mxu0 %v1628
        %2091 = vmatprep.subr.mxu0 %v1623
        %2092 = vmatpush1.msra.mxu0 %v1622
        %2093 = vmatprep.subr.mxu0 %v1617
        %2094 = vmatpush1.msra.mxu0 %v1616
        %2095 = vmatprep.subr.mxu0 %v1611
        %2096 = vmatpush1.msra.mxu0 %v1610
        %2097 = vmatprep.subr.mxu0 %v1605
        %2098 = vmatpush1.msra.mxu0 %v1604
        %2099 = vmatprep.subr.mxu0 %v1599
        %2100 = vmatpush1.msra.mxu0 %v1598
        %2101 = vmatprep.subr.mxu0 %v1593
        %2102 = vmatpush1.msra.mxu0 %v1592
        %2103 = vmatprep.subr.mxu0 %v1779
        %2104 = vmatpush2.msra.mxu0 %v1778
        %2105 = vmatprep.subr.mxu0 %v1773
        %2106 = vmatpush2.msra.mxu0 %v1772
        %2107 = vmatprep.subr.mxu0 %v1767
        %2108 = vmatpush2.msra.mxu0 %v1766
        %2109 = vmatprep.subr.mxu0 %v1761
        %2110 = vmatpush2.msra.mxu0 %v1760
        %2111 = vmatprep.subr.mxu0 %v1755
        %2112 = vmatpush2.msra.mxu0 %v1754
        %2113 = vmatprep.subr.mxu0 %v1749
        %2114 = vmatpush2.msra.mxu0 %v1748
        %2115 = vmatprep.subr.mxu0 %v1743
        %2116 = vmatpush2.msra.mxu0 %v1742
        %2117 = vmatprep.subr.mxu0 %v1737
        %2118 = vmatpush2.msra.mxu0 %v1736
        %2119 = vmatprep.subr.mxu0 %v1731
        %2120 = vmatpush2.msra.mxu0 %v1730
        %2121 = vmatprep.subr.mxu0 %v1725
        %2122 = vmatpush2.msra.mxu0 %v1724
        %2123 = vmatprep.subr.mxu0 %v1719
        %2124 = vmatpush2.msra.mxu0 %v1718
        %2125 = vmatprep.subr.mxu0 %v1713
        %2126 = vmatpush2.msra.mxu0 %v1712
        %2127 = vmatprep.subr.mxu0 %v1707
        %2128 = vmatpush2.msra.mxu0 %v1706
        %2129 = vmatprep.subr.mxu0 %v1701
        %2130 = vmatpush2.msra.mxu0 %v1700
        %2131 = vmatprep.subr.mxu0 %v1695
        %2132 = vmatpush2.msra.mxu0 %v1694
        %2133 = vmatprep.subr.mxu0 %v1689
        %2134 = vmatpush2.msra.mxu0 %v1688
        %2135 = vmatprep.mubr.f32.mxu0 %v2070
        %2136 = vmatmul.mubr.f32.gmra.mxu0 %v2069
        %v2137 = vpop.f32.mrf.mxu0
        %v2138 = vadd.f32 %v1789, %v2137
        %v2139 = vpop.f32.mrf.mxu0
        %v2140 = vadd.f32 %v1793, %v2139
        %2141 = vdwg.mxu0
        %2142 = vmatprep.subr.mxu0 %v1685
        %2143 = vmatpush1.msra.mxu0 %v1684
        %2144 = vmatprep.subr.mxu0 %v1679
        %2145 = vmatpush1.msra.mxu0 %v1678
        %2146 = vmatprep.subr.mxu0 %v1673
        %2147 = vmatpush1.msra.mxu0 %v1672
        %2148 = vmatprep.subr.mxu0 %v1667
        %2149 = vmatpush1.msra.mxu0 %v1666
        %2150 = vmatprep.subr.mxu0 %v1661
        %2151 = vmatpush1.msra.mxu0 %v1660
        %2152 = vmatprep.subr.mxu0 %v1655
        %2153 = vmatpush1.msra.mxu0 %v1654
        %2154 = vmatprep.subr.mxu0 %v1649
        %2155 = vmatpush1.msra.mxu0 %v1648
        %2156 = vmatprep.subr.mxu0 %v1643
        %2157 = vmatpush1.msra.mxu0 %v1642
        %2158 = vmatprep.subr.mxu0 %v1637
        %2159 = vmatpush1.msra.mxu0 %v1636
        %2160 = vmatprep.subr.mxu0 %v1631
        %2161 = vmatpush1.msra.mxu0 %v1630
        %2162 = vmatprep.subr.mxu0 %v1625
        %2163 = vmatpush1.msra.mxu0 %v1624
        %2164 = vmatprep.subr.mxu0 %v1619
        %2165 = vmatpush1.msra.mxu0 %v1618
        %2166 = vmatprep.subr.mxu0 %v1613
        %2167 = vmatpush1.msra.mxu0 %v1612
        %2168 = vmatprep.subr.mxu0 %v1607
        %2169 = vmatpush1.msra.mxu0 %v1606
        %2170 = vmatprep.subr.mxu0 %v1601
        %2171 = vmatpush1.msra.mxu0 %v1600
        %2172 = vmatprep.subr.mxu0 %v1595
        %2173 = vmatpush1.msra.mxu0 %v1594
        %2174 = vmatprep.subr.mxu0 %v1781
        %2175 = vmatpush2.msra.mxu0 %v1780
        %2176 = vmatprep.subr.mxu0 %v1775
        %2177 = vmatpush2.msra.mxu0 %v1774
        %2178 = vmatprep.subr.mxu0 %v1769
        %2179 = vmatpush2.msra.mxu0 %v1768
        %2180 = vmatprep.subr.mxu0 %v1763
        %2181 = vmatpush2.msra.mxu0 %v1762
        %2182 = vmatprep.subr.mxu0 %v1757
        %2183 = vmatpush2.msra.mxu0 %v1756
        %2184 = vmatprep.subr.mxu0 %v1751
        %2185 = vmatpush2.msra.mxu0 %v1750
        %2186 = vmatprep.subr.mxu0 %v1745
        %2187 = vmatpush2.msra.mxu0 %v1744
        %2188 = vmatprep.subr.mxu0 %v1739
        %2189 = vmatpush2.msra.mxu0 %v1738
        %2190 = vmatprep.subr.mxu0 %v1733
        %2191 = vmatpush2.msra.mxu0 %v1732
        %2192 = vmatprep.subr.mxu0 %v1727
        %2193 = vmatpush2.msra.mxu0 %v1726
        %2194 = vmatprep.subr.mxu0 %v1721
        %2195 = vmatpush2.msra.mxu0 %v1720
        %2196 = vmatprep.subr.mxu0 %v1715
        %2197 = vmatpush2.msra.mxu0 %v1714
        %2198 = vmatprep.subr.mxu0 %v1709
        %2199 = vmatpush2.msra.mxu0 %v1708
        %2200 = vmatprep.subr.mxu0 %v1703
        %2201 = vmatpush2.msra.mxu0 %v1702
        %2202 = vmatprep.subr.mxu0 %v1697
        %2203 = vmatpush2.msra.mxu0 %v1696
        %2204 = vmatprep.subr.mxu0 %v1691
        %2205 = vmatpush2.msra.mxu0 %v1690
        %2206 = vmatprep.mubr.f32.mxu0 %v2070
        %2207 = vmatmul.mubr.f32.gmra.mxu0 %v2069
        %v2208 = vpop.f32.mrf.mxu0
        %v2209 = vadd.f32 %v1797, %v2208
        %v2210 = vpop.f32.mrf.mxu0
        %v2211 = vadd.f32 %v1801, %v2210
        %2212 = vdwg.mxu0
        %2213 = vmatprep.subr.mxu0 %v1687
        %2214 = vmatpush1.msra.mxu0 %v1686
        %2215 = vmatprep.subr.mxu0 %v1681
        %2216 = vmatpush1.msra.mxu0 %v1680
        %2217 = vmatprep.subr.mxu0 %v1675
        %2218 = vmatpush1.msra.mxu0 %v1674
        %2219 = vmatprep.subr.mxu0 %v1669
        %2220 = vmatpush1.msra.mxu0 %v1668
        %2221 = vmatprep.subr.mxu0 %v1663
        %2222 = vmatpush1.msra.mxu0 %v1662
        %2223 = vmatprep.subr.mxu0 %v1657
        %2224 = vmatpush1.msra.mxu0 %v1656
        %2225 = vmatprep.subr.mxu0 %v1651
        %2226 = vmatpush1.msra.mxu0 %v1650
        %2227 = vmatprep.subr.mxu0 %v1645
        %2228 = vmatpush1.msra.mxu0 %v1644
        %2229 = vmatprep.subr.mxu0 %v1639
        %2230 = vmatpush1.msra.mxu0 %v1638
        %2231 = vmatprep.subr.mxu0 %v1633
        %2232 = vmatpush1.msra.mxu0 %v1632
        %2233 = vmatprep.subr.mxu0 %v1627
        %2234 = vmatpush1.msra.mxu0 %v1626
        %2235 = vmatprep.subr.mxu0 %v1621
        %2236 = vmatpush1.msra.mxu0 %v1620
        %2237 = vmatprep.subr.mxu0 %v1615
        %2238 = vmatpush1.msra.mxu0 %v1614
        %2239 = vmatprep.subr.mxu0 %v1609
        %2240 = vmatpush1.msra.mxu0 %v1608
        %2241 = vmatprep.subr.mxu0 %v1603
        %2242 = vmatpush1.msra.mxu0 %v1602
        %2243 = vmatprep.subr.mxu0 %v1597
        %2244 = vmatpush1.msra.mxu0 %v1596
        %2245 = vmatprep.subr.mxu0 %v1783
        %2246 = vmatpush2.msra.mxu0 %v1782
        %2247 = vmatprep.subr.mxu0 %v1777
        %2248 = vmatpush2.msra.mxu0 %v1776
        %2249 = vmatprep.subr.mxu0 %v1771
        %2250 = vmatpush2.msra.mxu0 %v1770
        %2251 = vmatprep.subr.mxu0 %v1765
        %2252 = vmatpush2.msra.mxu0 %v1764
        %2253 = vmatprep.subr.mxu0 %v1759
        %2254 = vmatpush2.msra.mxu0 %v1758
        %2255 = vmatprep.subr.mxu0 %v1753
        %2256 = vmatpush2.msra.mxu0 %v1752
        %2257 = vmatprep.subr.mxu0 %v1747
        %2258 = vmatpush2.msra.mxu0 %v1746
        %2259 = vmatprep.subr.mxu0 %v1741
        %2260 = vmatpush2.msra.mxu0 %v1740
        %2261 = vmatprep.subr.mxu0 %v1735
        %2262 = vmatpush2.msra.mxu0 %v1734
        %2263 = vmatprep.subr.mxu0 %v1729
        %2264 = vmatpush2.msra.mxu0 %v1728
        %2265 = vmatprep.subr.mxu0 %v1723
        %2266 = vmatpush2.msra.mxu0 %v1722
        %2267 = vmatprep.subr.mxu0 %v1717
        %2268 = vmatpush2.msra.mxu0 %v1716
        %2269 = vmatprep.subr.mxu0 %v1711
        %2270 = vmatpush2.msra.mxu0 %v1710
        %2271 = vmatprep.subr.mxu0 %v1705
        %2272 = vmatpush2.msra.mxu0 %v1704
        %2273 = vmatprep.subr.mxu0 %v1699
        %2274 = vmatpush2.msra.mxu0 %v1698
        %2275 = vmatprep.subr.mxu0 %v1693
        %2276 = vmatpush2.msra.mxu0 %v1692
        %2277 = vmatprep.mubr.f32.mxu0 %v2070
        %2278 = vmatmul.mubr.f32.gmra.mxu0 %v2069
        %v2279 = vpop.f32.mrf.mxu0
        %v2280 = vadd.f32 %v1805, %v2279
        %v2281 = vpop.f32.mrf.mxu0
        %v2282 = vadd.f32 %v1809, %v2281
        %2283 = vdwg.mxu0
        %v2284 = vadd.f32 %v1320, %v2138
        %v2285 = vadd.f32 %v1322, %v2140
        %v2286 = vxor.u32 %v2284, 2147483648
        %v2287 = vxor.u32 %v2285, 2147483648
        %v2288 = vmul.f32 %v2286, 1.442695
        %v2289 = vpow.pop %v2288
        %v2290 = vmul.f32 %v2287, 1.442695
        %v2291 = vpow.pop %v2290
        %v2292 = vadd.f32 %v2289, 1.0
        %v2293 = vadd.f32 %v2291, 1.0
        %v2294 = vrcp.pop %v2292
        %v2295 = vmul.f32 1.0, %v2294
        %v2296 = vrcp.pop %v2293
        %v2297 = vmul.f32 1.0, %v2296
        %v2298 = vadd.f32 %v1403, %v2209
        %v2299 = vadd.f32 %v1405, %v2211
        %v2300 = vxor.u32 %v2298, 2147483648
        %v2301 = vxor.u32 %v2299, 2147483648
        %v2302 = vmul.f32 %v2300, 1.442695
        %v2303 = vpow.pop %v2302
        %v2304 = vmul.f32 %v2301, 1.442695
        %v2305 = vpow.pop %v2304
        %v2306 = vadd.f32 %v2303, 1.0
        %v2307 = vadd.f32 %v2305, 1.0
        %v2308 = vrcp.pop %v2306
        %v2309 = vmul.f32 1.0, %v2308
        %v2310 = vrcp.pop %v2307
        %v2311 = vmul.f32 1.0, %v2310
        %v2312 = vmul.f32 %v2295, %v2280
        %v2313 = vmul.f32 %v2297, %v2282
        %v2314 = vadd.f32 %v1486, %v2312
        %v2315 = vadd.f32 %v1488, %v2313
        %v2316 = vtanh.pop %v2314
        %v2317 = vtanh.pop %v2315
        %v2318 = vsub.f32 1.0, %v2309
        %v2319 = vsub.f32 1.0, %v2311
        %v2320 = vmul.f32 %v2318, %v2316
        %v2321 = vmul.f32 %v2319, %v2317
        %v2322 = vmul.f32 %v2309, %v2069
        %v2323 = vmul.f32 %v2311, %v2070
        %v2324 = vadd.f32 %v2320, %v2322
        %v2325 = vadd.f32 %v2321, %v2323
        %2326 = vmatprep.subr.mxu0 %v1683
        %2327 = vmatpush1.msra.mxu0 %v1682
        %2328 = vmatprep.subr.mxu0 %v1677
        %2329 = vmatpush1.msra.mxu0 %v1676
        %2330 = vmatprep.subr.mxu0 %v1671
        %2331 = vmatpush1.msra.mxu0 %v1670
        %2332 = vmatprep.subr.mxu0 %v1665
        %2333 = vmatpush1.msra.mxu0 %v1664
        %2334 = vmatprep.subr.mxu0 %v1659
        %2335 = vmatpush1.msra.mxu0 %v1658
        %2336 = vmatprep.subr.mxu0 %v1653
        %2337 = vmatpush1.msra.mxu0 %v1652
        %2338 = vmatprep.subr.mxu0 %v1647
        %2339 = vmatpush1.msra.mxu0 %v1646
        %2340 = vmatprep.subr.mxu0 %v1641
        %2341 = vmatpush1.msra.mxu0 %v1640
        %2342 = vmatprep.subr.mxu0 %v1635
        %2343 = vmatpush1.msra.mxu0 %v1634
        %2344 = vmatprep.subr.mxu0 %v1629
        %2345 = vmatpush1.msra.mxu0 %v1628
        %2346 = vmatprep.subr.mxu0 %v1623
        %2347 = vmatpush1.msra.mxu0 %v1622
        %2348 = vmatprep.subr.mxu0 %v1617
        %2349 = vmatpush1.msra.mxu0 %v1616
        %2350 = vmatprep.subr.mxu0 %v1611
        %2351 = vmatpush1.msra.mxu0 %v1610
        %2352 = vmatprep.subr.mxu0 %v1605
        %2353 = vmatpush1.msra.mxu0 %v1604
        %2354 = vmatprep.subr.mxu0 %v1599
        %2355 = vmatpush1.msra.mxu0 %v1598
        %2356 = vmatprep.subr.mxu0 %v1593
        %2357 = vmatpush1.msra.mxu0 %v1592
        %2358 = vmatprep.subr.mxu0 %v1779
        %2359 = vmatpush2.msra.mxu0 %v1778
        %2360 = vmatprep.subr.mxu0 %v1773
        %2361 = vmatpush2.msra.mxu0 %v1772
        %2362 = vmatprep.subr.mxu0 %v1767
        %2363 = vmatpush2.msra.mxu0 %v1766
        %2364 = vmatprep.subr.mxu0 %v1761
        %2365 = vmatpush2.msra.mxu0 %v1760
        %2366 = vmatprep.subr.mxu0 %v1755
        %2367 = vmatpush2.msra.mxu0 %v1754
        %2368 = vmatprep.subr.mxu0 %v1749
        %2369 = vmatpush2.msra.mxu0 %v1748
        %2370 = vmatprep.subr.mxu0 %v1743
        %2371 = vmatpush2.msra.mxu0 %v1742
        %2372 = vmatprep.subr.mxu0 %v1737
        %2373 = vmatpush2.msra.mxu0 %v1736
        %2374 = vmatprep.subr.mxu0 %v1731
        %2375 = vmatpush2.msra.mxu0 %v1730
        %2376 = vmatprep.subr.mxu0 %v1725
        %2377 = vmatpush2.msra.mxu0 %v1724
        %2378 = vmatprep.subr.mxu0 %v1719
        %2379 = vmatpush2.msra.mxu0 %v1718
        %2380 = vmatprep.subr.mxu0 %v1713
        %2381 = vmatpush2.msra.mxu0 %v1712
        %2382 = vmatprep.subr.mxu0 %v1707
        %2383 = vmatpush2.msra.mxu0 %v1706
        %2384 = vmatprep.subr.mxu0 %v1701
        %2385 = vmatpush2.msra.mxu0 %v1700
        %2386 = vmatprep.subr.mxu0 %v1695
        %2387 = vmatpush2.msra.mxu0 %v1694
        %2388 = vmatprep.subr.mxu0 %v1689
        %2389 = vmatpush2.msra.mxu0 %v1688
        %2390 = vmatprep.mubr.f32.mxu0 %v2325
        %2391 = vmatmul.mubr.f32.gmra.mxu0 %v2324
        %v2392 = vpop.f32.mrf.mxu0
        %v2393 = vadd.f32 %v1789, %v2392
        %v2394 = vpop.f32.mrf.mxu0
        %v2395 = vadd.f32 %v1793, %v2394
        %2396 = vdwg.mxu0
        %2397 = vmatprep.subr.mxu0 %v1685
        %2398 = vmatpush1.msra.mxu0 %v1684
        %2399 = vmatprep.subr.mxu0 %v1679
        %2400 = vmatpush1.msra.mxu0 %v1678
        %2401 = vmatprep.subr.mxu0 %v1673
        %2402 = vmatpush1.msra.mxu0 %v1672
        %2403 = vmatprep.subr.mxu0 %v1667
        %2404 = vmatpush1.msra.mxu0 %v1666
        %2405 = vmatprep.subr.mxu0 %v1661
        %2406 = vmatpush1.msra.mxu0 %v1660
        %2407 = vmatprep.subr.mxu0 %v1655
        %2408 = vmatpush1.msra.mxu0 %v1654
        %2409 = vmatprep.subr.mxu0 %v1649
        %2410 = vmatpush1.msra.mxu0 %v1648
        %2411 = vmatprep.subr.mxu0 %v1643
        %2412 = vmatpush1.msra.mxu0 %v1642
        %2413 = vmatprep.subr.mxu0 %v1637
        %2414 = vmatpush1.msra.mxu0 %v1636
        %2415 = vmatprep.subr.mxu0 %v1631
        %2416 = vmatpush1.msra.mxu0 %v1630
        %2417 = vmatprep.subr.mxu0 %v1625
        %2418 = vmatpush1.msra.mxu0 %v1624
        %2419 = vmatprep.subr.mxu0 %v1619
        %2420 = vmatpush1.msra.mxu0 %v1618
        %2421 = vmatprep.subr.mxu0 %v1613
        %2422 = vmatpush1.msra.mxu0 %v1612
        %2423 = vmatprep.subr.mxu0 %v1607
        %2424 = vmatpush1.msra.mxu0 %v1606
        %2425 = vmatprep.subr.mxu0 %v1601
        %2426 = vmatpush1.msra.mxu0 %v1600
        %2427 = vmatprep.subr.mxu0 %v1595
        %2428 = vmatpush1.msra.mxu0 %v1594
        %2429 = vmatprep.subr.mxu0 %v1781
        %2430 = vmatpush2.msra.mxu0 %v1780
        %2431 = vmatprep.subr.mxu0 %v1775
        %2432 = vmatpush2.msra.mxu0 %v1774
        %2433 = vmatprep.subr.mxu0 %v1769
        %2434 = vmatpush2.msra.mxu0 %v1768
        %2435 = vmatprep.subr.mxu0 %v1763
        %2436 = vmatpush2.msra.mxu0 %v1762
        %2437 = vmatprep.subr.mxu0 %v1757
        %2438 = vmatpush2.msra.mxu0 %v1756
        %2439 = vmatprep.subr.mxu0 %v1751
        %2440 = vmatpush2.msra.mxu0 %v1750
        %2441 = vmatprep.subr.mxu0 %v1745
        %2442 = vmatpush2.msra.mxu0 %v1744
        %2443 = vmatprep.subr.mxu0 %v1739
        %2444 = vmatpush2.msra.mxu0 %v1738
        %2445 = vmatprep.subr.mxu0 %v1733
        %2446 = vmatpush2.msra.mxu0 %v1732
        %2447 = vmatprep.subr.mxu0 %v1727
        %2448 = vmatpush2.msra.mxu0 %v1726
        %2449 = vmatprep.subr.mxu0 %v1721
        %2450 = vmatpush2.msra.mxu0 %v1720
        %2451 = vmatprep.subr.mxu0 %v1715
        %2452 = vmatpush2.msra.mxu0 %v1714
        %2453 = vmatprep.subr.mxu0 %v1709
        %2454 = vmatpush2.msra.mxu0 %v1708
        %2455 = vmatprep.subr.mxu0 %v1703
        %2456 = vmatpush2.msra.mxu0 %v1702
        %2457 = vmatprep.subr.mxu0 %v1697
        %2458 = vmatpush2.msra.mxu0 %v1696
        %2459 = vmatprep.subr.mxu0 %v1691
        %2460 = vmatpush2.msra.mxu0 %v1690
        %2461 = vmatprep.mubr.f32.mxu0 %v2325
        %2462 = vmatmul.mubr.f32.gmra.mxu0 %v2324
        %v2463 = vpop.f32.mrf.mxu0
        %v2464 = vadd.f32 %v1797, %v2463
        %v2465 = vpop.f32.mrf.mxu0
        %v2466 = vadd.f32 %v1801, %v2465
        %2467 = vdwg.mxu0
        %2468 = vmatprep.subr.mxu0 %v1687
        %2469 = vmatpush1.msra.mxu0 %v1686
        %2470 = vmatprep.subr.mxu0 %v1681
        %2471 = vmatpush1.msra.mxu0 %v1680
        %2472 = vmatprep.subr.mxu0 %v1675
        %2473 = vmatpush1.msra.mxu0 %v1674
        %2474 = vmatprep.subr.mxu0 %v1669
        %2475 = vmatpush1.msra.mxu0 %v1668
        %2476 = vmatprep.subr.mxu0 %v1663
        %2477 = vmatpush1.msra.mxu0 %v1662
        %2478 = vmatprep.subr.mxu0 %v1657
        %2479 = vmatpush1.msra.mxu0 %v1656
        %2480 = vmatprep.subr.mxu0 %v1651
        %2481 = vmatpush1.msra.mxu0 %v1650
        %2482 = vmatprep.subr.mxu0 %v1645
        %2483 = vmatpush1.msra.mxu0 %v1644
        %2484 = vmatprep.subr.mxu0 %v1639
        %2485 = vmatpush1.msra.mxu0 %v1638
        %2486 = vmatprep.subr.mxu0 %v1633
        %2487 = vmatpush1.msra.mxu0 %v1632
        %2488 = vmatprep.subr.mxu0 %v1627
        %2489 = vmatpush1.msra.mxu0 %v1626
        %2490 = vmatprep.subr.mxu0 %v1621
        %2491 = vmatpush1.msra.mxu0 %v1620
        %2492 = vmatprep.subr.mxu0 %v1615
        %2493 = vmatpush1.msra.mxu0 %v1614
        %2494 = vmatprep.subr.mxu0 %v1609
        %2495 = vmatpush1.msra.mxu0 %v1608
        %2496 = vmatprep.subr.mxu0 %v1603
        %2497 = vmatpush1.msra.mxu0 %v1602
        %2498 = vmatprep.subr.mxu0 %v1597
        %2499 = vmatpush1.msra.mxu0 %v1596
        %2500 = vmatprep.subr.mxu0 %v1783
        %2501 = vmatpush2.msra.mxu0 %v1782
        %2502 = vmatprep.subr.mxu0 %v1777
        %2503 = vmatpush2.msra.mxu0 %v1776
        %2504 = vmatprep.subr.mxu0 %v1771
        %2505 = vmatpush2.msra.mxu0 %v1770
        %2506 = vmatprep.subr.mxu0 %v1765
        %2507 = vmatpush2.msra.mxu0 %v1764
        %2508 = vmatprep.subr.mxu0 %v1759
        %2509 = vmatpush2.msra.mxu0 %v1758
        %2510 = vmatprep.subr.mxu0 %v1753
        %2511 = vmatpush2.msra.mxu0 %v1752
        %2512 = vmatprep.subr.mxu0 %v1747
        %2513 = vmatpush2.msra.mxu0 %v1746
        %2514 = vmatprep.subr.mxu0 %v1741
        %2515 = vmatpush2.msra.mxu0 %v1740
        %2516 = vmatprep.subr.mxu0 %v1735
        %2517 = vmatpush2.msra.mxu0 %v1734
        %2518 = vmatprep.subr.mxu0 %v1729
        %2519 = vmatpush2.msra.mxu0 %v1728
        %2520 = vmatprep.subr.mxu0 %v1723
        %2521 = vmatpush2.msra.mxu0 %v1722
        %2522 = vmatprep.subr.mxu0 %v1717
        %2523 = vmatpush2.msra.mxu0 %v1716
        %2524 = vmatprep.subr.mxu0 %v1711
        %2525 = vmatpush2.msra.mxu0 %v1710
        %2526 = vmatprep.subr.mxu0 %v1705
        %2527 = vmatpush2.msra.mxu0 %v1704
        %2528 = vmatprep.subr.mxu0 %v1699
        %2529 = vmatpush2.msra.mxu0 %v1698
        %2530 = vmatprep.subr.mxu0 %v1693
        %2531 = vmatpush2.msra.mxu0 %v1692
        %2532 = vmatprep.mubr.f32.mxu0 %v2325
        %2533 = vmatmul.mubr.f32.gmra.mxu0 %v2324
        %v2534 = vpop.f32.mrf.mxu0
        %v2535 = vadd.f32 %v1805, %v2534
        %v2536 = vpop.f32.mrf.mxu0
        %v2537 = vadd.f32 %v1809, %v2536
        %2538 = vdwg.mxu0
        %v2539 = vadd.f32 %v1326, %v2393
        %v2540 = vadd.f32 %v1328, %v2395
        %v2541 = vxor.u32 %v2539, 2147483648
        %v2542 = vxor.u32 %v2540, 2147483648
        %v2543 = vmul.f32 %v2541, 1.442695
        %v2544 = vpow.pop %v2543
        %v2545 = vmul.f32 %v2542, 1.442695
        %v2546 = vpow.pop %v2545
        %v2547 = vadd.f32 %v2544, 1.0
        %v2548 = vadd.f32 %v2546, 1.0
        %v2549 = vrcp.pop %v2547
        %v2550 = vmul.f32 1.0, %v2549
        %v2551 = vrcp.pop %v2548
        %v2552 = vmul.f32 1.0, %v2551
        %v2553 = vadd.f32 %v1409, %v2464
        %v2554 = vadd.f32 %v1411, %v2466
        %v2555 = vxor.u32 %v2553, 2147483648
        %v2556 = vxor.u32 %v2554, 2147483648
        %v2557 = vmul.f32 %v2555, 1.442695
        %v2558 = vpow.pop %v2557
        %v2559 = vmul.f32 %v2556, 1.442695
        %v2560 = vpow.pop %v2559
        %v2561 = vadd.f32 %v2558, 1.0
        %v2562 = vadd.f32 %v2560, 1.0
        %v2563 = vrcp.pop %v2561
        %v2564 = vmul.f32 1.0, %v2563
        %v2565 = vrcp.pop %v2562
        %v2566 = vmul.f32 1.0, %v2565
        %v2567 = vmul.f32 %v2550, %v2535
        %v2568 = vmul.f32 %v2552, %v2537
        %v2569 = vadd.f32 %v1492, %v2567
        %v2570 = vadd.f32 %v1494, %v2568
        %v2571 = vtanh.pop %v2569
        %v2572 = vtanh.pop %v2570
        %v2573 = vsub.f32 1.0, %v2564
        %v2574 = vsub.f32 1.0, %v2566
        %v2575 = vmul.f32 %v2573, %v2571
        %v2576 = vmul.f32 %v2574, %v2572
        %v2577 = vmul.f32 %v2564, %v2324
        %v2578 = vmul.f32 %v2566, %v2325
        %v2579 = vadd.f32 %v2575, %v2577
        %v2580 = vadd.f32 %v2576, %v2578
        %v2581 = vmax.f32 %v2069, 0.0
        %v2582 = vmax.f32 %v2070, 0.0
        %v2583 = vmax.f32 %v2324, 0.0
        %v2584 = vmax.f32 %v2325, 0.0
        %v2585 = vmax.f32 %v2579, 0.0
        %v2586 = vmax.f32 %v2580, 0.0
        %v2587 = vld [vmem:[%s5] sm:$0xf]
        %v2588 = vld [vmem:[%s5 + $0x4] sm:$0xf]
        %v2589 = vld [vmem:[%s5 + $0x8] sm:$0xf]
        %v2590 = vld [vmem:[%s5 + $0xc] sm:$0xf]
        %v2591 = vld [vmem:[%s5 + $0x10] sm:$0xf]
        %v2592 = vld [vmem:[%s5 + $0x14] sm:$0xf]
        %v2593 = vld [vmem:[%s5 + $0x18] sm:$0xf]
        %v2594 = vld [vmem:[%s5 + $0x1c] sm:$0xf]
        %v2595 = vld [vmem:[%s5 + $0x20] sm:$0xf]
        %v2596 = vld [vmem:[%s5 + $0x24] sm:$0xf]
        %v2597 = vld [vmem:[%s5 + $0x28] sm:$0xf]
        %v2598 = vld [vmem:[%s5 + $0x2c] sm:$0xf]
        %v2599 = vld [vmem:[%s5 + $0x30] sm:$0xf]
        %v2600 = vld [vmem:[%s5 + $0x34] sm:$0xf]
        %v2601 = vld [vmem:[%s5 + $0x38] sm:$0xf]
        %v2602 = vld [vmem:[%s5 + $0x3c] sm:$0xf]
        %v2603 = vld [vmem:[%s5 + $0x40] sm:$0xf]
        %v2604 = vld [vmem:[%s5 + $0x44] sm:$0xf]
        %v2605 = vld [vmem:[%s5 + $0x48] sm:$0xf]
        %v2606 = vld [vmem:[%s5 + $0x4c] sm:$0xf]
        %v2607 = vld [vmem:[%s5 + $0x50] sm:$0xf]
        %v2608 = vld [vmem:[%s5 + $0x54] sm:$0xf]
        %v2609 = vld [vmem:[%s5 + $0x58] sm:$0xf]
        %v2610 = vld [vmem:[%s5 + $0x5c] sm:$0xf]
        %v2611 = vld [vmem:[%s5 + $0x60] sm:$0xf]
        %v2612 = vld [vmem:[%s5 + $0x64] sm:$0xf]
        %v2613 = vld [vmem:[%s5 + $0x68] sm:$0xf]
        %v2614 = vld [vmem:[%s5 + $0x6c] sm:$0xf]
        %v2615 = vld [vmem:[%s5 + $0x70] sm:$0xf]
        %v2616 = vld [vmem:[%s5 + $0x74] sm:$0xf]
        %v2617 = vld [vmem:[%s5 + $0x78] sm:$0xf]
        %v2618 = vld [vmem:[%s5 + $0x7c] sm:$0xf]
        %v2619 = vunpack.c.l.bf16 %v2587
        %v2620 = vunpack.c.l.bf16 %v2588
        %v2621 = vunpack.c.l.bf16 %v2589
        %v2622 = vunpack.c.l.bf16 %v2590
        %v2623 = vunpack.c.l.bf16 %v2591
        %v2624 = vunpack.c.l.bf16 %v2592
        %v2625 = vunpack.c.l.bf16 %v2593
        %v2626 = vunpack.c.l.bf16 %v2594
        %v2627 = vunpack.c.l.bf16 %v2595
        %v2628 = vunpack.c.l.bf16 %v2596
        %v2629 = vunpack.c.l.bf16 %v2597
        %v2630 = vunpack.c.l.bf16 %v2598
        %v2631 = vunpack.c.l.bf16 %v2599
        %v2632 = vunpack.c.l.bf16 %v2600
        %v2633 = vunpack.c.l.bf16 %v2601
        %v2634 = vunpack.c.l.bf16 %v2602
        %v2635 = vunpack.c.l.bf16 %v2603
        %v2636 = vunpack.c.l.bf16 %v2604
        %v2637 = vunpack.c.l.bf16 %v2605
        %v2638 = vunpack.c.l.bf16 %v2606
        %v2639 = vunpack.c.l.bf16 %v2607
        %v2640 = vunpack.c.l.bf16 %v2608
        %v2641 = vunpack.c.l.bf16 %v2609
        %v2642 = vunpack.c.l.bf16 %v2610
        %v2643 = vunpack.c.l.bf16 %v2611
        %v2644 = vunpack.c.l.bf16 %v2612
        %v2645 = vunpack.c.l.bf16 %v2613
        %v2646 = vunpack.c.l.bf16 %v2614
        %v2647 = vunpack.c.l.bf16 %v2615
        %v2648 = vunpack.c.l.bf16 %v2616
        %v2649 = vunpack.c.l.bf16 %v2617
        %v2650 = vunpack.c.l.bf16 %v2618
        %v2651 = vld [vmem:[%s6] sm:$0x1]
        %v2653 = vlaneseq
        %v2654 = vshrl.u32 %v2653, 7
        %v2655 = vsub.s32 0, %v2654
        %v2656 = vrot.slane %v2651, %v2655
        %2658 = vmatprep.subr.mxu0 0.0
        %2659 = vmatpush1.msra.mxu0 %v2634
        %2660 = vmatprep.subr.mxu0 0.0
        %2661 = vmatpush1.msra.mxu0 %v2633
        %2662 = vmatprep.subr.mxu0 0.0
        %2663 = vmatpush1.msra.mxu0 %v2632
        %2664 = vmatprep.subr.mxu0 0.0
        %2665 = vmatpush1.msra.mxu0 %v2631
        %2666 = vmatprep.subr.mxu0 0.0
        %2667 = vmatpush1.msra.mxu0 %v2630
        %2668 = vmatprep.subr.mxu0 0.0
        %2669 = vmatpush1.msra.mxu0 %v2629
        %2670 = vmatprep.subr.mxu0 0.0
        %2671 = vmatpush1.msra.mxu0 %v2628
        %2672 = vmatprep.subr.mxu0 0.0
        %2673 = vmatpush1.msra.mxu0 %v2627
        %2674 = vmatprep.subr.mxu0 0.0
        %2675 = vmatpush1.msra.mxu0 %v2626
        %2676 = vmatprep.subr.mxu0 0.0
        %2677 = vmatpush1.msra.mxu0 %v2625
        %2678 = vmatprep.subr.mxu0 0.0
        %2679 = vmatpush1.msra.mxu0 %v2624
        %2680 = vmatprep.subr.mxu0 0.0
        %2681 = vmatpush1.msra.mxu0 %v2623
        %2682 = vmatprep.subr.mxu0 0.0
        %2683 = vmatpush1.msra.mxu0 %v2622
        %2684 = vmatprep.subr.mxu0 0.0
        %2685 = vmatpush1.msra.mxu0 %v2621
        %2686 = vmatprep.subr.mxu0 0.0
        %2687 = vmatpush1.msra.mxu0 %v2620
        %2688 = vmatprep.subr.mxu0 0.0
        %2689 = vmatpush1.msra.mxu0 %v2619
        %2690 = vmatprep.subr.mxu0 0.0
        %2691 = vmatpush2.msra.mxu0 %v2650
        %2692 = vmatprep.subr.mxu0 0.0
        %2693 = vmatpush2.msra.mxu0 %v2649
        %2694 = vmatprep.subr.mxu0 0.0
        %2695 = vmatpush2.msra.mxu0 %v2648
        %2696 = vmatprep.subr.mxu0 0.0
        %2697 = vmatpush2.msra.mxu0 %v2647
        %2698 = vmatprep.subr.mxu0 0.0
        %2699 = vmatpush2.msra.mxu0 %v2646
        %2700 = vmatprep.subr.mxu0 0.0
        %2701 = vmatpush2.msra.mxu0 %v2645
        %2702 = vmatprep.subr.mxu0 0.0
        %2703 = vmatpush2.msra.mxu0 %v2644
        %2704 = vmatprep.subr.mxu0 0.0
        %2705 = vmatpush2.msra.mxu0 %v2643
        %2706 = vmatprep.subr.mxu0 0.0
        %2707 = vmatpush2.msra.mxu0 %v2642
        %2708 = vmatprep.subr.mxu0 0.0
        %2709 = vmatpush2.msra.mxu0 %v2641
        %2710 = vmatprep.subr.mxu0 0.0
        %2711 = vmatpush2.msra.mxu0 %v2640
        %2712 = vmatprep.subr.mxu0 0.0
        %2713 = vmatpush2.msra.mxu0 %v2639
        %2714 = vmatprep.subr.mxu0 0.0
        %2715 = vmatpush2.msra.mxu0 %v2638
        %2716 = vmatprep.subr.mxu0 0.0
        %2717 = vmatpush2.msra.mxu0 %v2637
        %2718 = vmatprep.subr.mxu0 0.0
        %2719 = vmatpush2.msra.mxu0 %v2636
        %2720 = vmatprep.subr.mxu0 0.0
        %2721 = vmatpush2.msra.mxu0 %v2635
        %2722 = vmatprep.mubr.f32.mxu0 %v2582
        %2723 = vmatmul.mubr.f32.gmra.mxu0 %v2581
        %v2724 = vpop.f32.mrf.mxu0
        %v2725 = vadd.f32 %v2656, %v2724
        %v2726 = vpop.f32.mrf.mxu0
        %2727 = vmatprep.mubr.f32.mxu0 %v2584
        %2728 = vmatmul.mubr.f32.gmra.mxu0 %v2583
        %v2729 = vpop.f32.mrf.mxu0
        %v2730 = vadd.f32 %v2656, %v2729
        %v2731 = vpop.f32.mrf.mxu0
        %2732 = vmatprep.mubr.f32.mxu0 %v2586
        %2733 = vmatmul.mubr.f32.gmra.mxu0 %v2585
        %v2734 = vpop.f32.mrf.mxu0
        %v2735 = vadd.f32 %v2656, %v2734
        %v2736 = vpop.f32.mrf.mxu0
        %2737 = vdwg.mxu0
        %vm2738 = vcmask 523264
        %v2740 = vsel %vm2738, %v2735, 0
        %v2743 = vsel %vm2738, %v1030, 0
        %v2746 = vsel %vm2738, %v1035, 0
        %v2749 = vsel %vm2738, %v1040, 0
        %v2752 = vsel %vm2738, %v1045, 0
        %v2755 = vsel %vm2738, %v1050, 0
        %v2758 = vsel %vm2738, %v1055, 0
        %v2761 = vsel %vm2738, %v1060, 0
        %v2764 = vsel %vm2738, %v1065, 0
        %2766 = vmatprep.subr.mxu0 0.0
        %2767 = vmatpush1.xpose.msra.mxu0 0.0
        %2768 = vmatprep.subr.mxu0 0.0
        %2769 = vmatpush1.xpose.msra.mxu0 0.0
        %2770 = vmatprep.subr.mxu0 0.0
        %2771 = vmatpush1.xpose.msra.mxu0 0.0
        %2772 = vmatprep.subr.mxu0 0.0
        %2773 = vmatpush1.xpose.msra.mxu0 0.0
        %2774 = vmatprep.subr.mxu0 0.0
        %2775 = vmatpush1.xpose.msra.mxu0 0.0
        %2776 = vmatprep.subr.mxu0 0.0
        %2777 = vmatpush1.xpose.msra.mxu0 0.0
        %2778 = vmatprep.subr.mxu0 0.0
        %2779 = vmatpush1.xpose.msra.mxu0 0.0
        %2780 = vmatprep.subr.mxu0 0.0
        %2781 = vmatpush1.xpose.msra.mxu0 0.0
        %2782 = vmatprep.subr.mxu0 0.0
        %2783 = vmatpush1.xpose.msra.mxu0 %v2764
        %2784 = vmatprep.subr.mxu0 0.0
        %2785 = vmatpush1.xpose.msra.mxu0 %v2761
        %2786 = vmatprep.subr.mxu0 0.0
        %2787 = vmatpush1.xpose.msra.mxu0 %v2758
        %2788 = vmatprep.subr.mxu0 0.0
        %2789 = vmatpush1.xpose.msra.mxu0 %v2755
        %2790 = vmatprep.subr.mxu0 0.0
        %2791 = vmatpush1.xpose.msra.mxu0 %v2752
        %2792 = vmatprep.subr.mxu0 0.0
        %2793 = vmatpush1.xpose.msra.mxu0 %v2749
        %2794 = vmatprep.subr.mxu0 0.0
        %2795 = vmatpush1.xpose.msra.mxu0 %v2746
        %2796 = vmatprep.subr.mxu0 0.0
        %2797 = vmatpush1.xpose.msra.mxu0 %v2743
        %2798 = vmatprep.subr.mxu0 0.0
        %2799 = vmatpush2.xpose.msra.mxu0 0.0
        %2800 = vmatprep.subr.mxu0 0.0
        %2801 = vmatpush2.xpose.msra.mxu0 0.0
        %2802 = vmatprep.subr.mxu0 0.0
        %2803 = vmatpush2.xpose.msra.mxu0 0.0
        %2804 = vmatprep.subr.mxu0 0.0
        %2805 = vmatpush2.xpose.msra.mxu0 0.0
        %2806 = vmatprep.subr.mxu0 0.0
        %2807 = vmatpush2.xpose.msra.mxu0 0.0
        %2808 = vmatprep.subr.mxu0 0.0
        %2809 = vmatpush2.xpose.msra.mxu0 0.0
        %2810 = vmatprep.subr.mxu0 0.0
        %2811 = vmatpush2.xpose.msra.mxu0 0.0
        %2812 = vmatprep.subr.mxu0 0.0
        %2813 = vmatpush2.xpose.msra.mxu0 0.0
        %2814 = vmatprep.subr.mxu0 0.0
        %2815 = vmatpush2.xpose.msra.mxu0 0.0
        %2816 = vmatprep.subr.mxu0 0.0
        %2817 = vmatpush2.xpose.msra.mxu0 0.0
        %2818 = vmatprep.subr.mxu0 0.0
        %2819 = vmatpush2.xpose.msra.mxu0 0.0
        %2820 = vmatprep.subr.mxu0 0.0
        %2821 = vmatpush2.xpose.msra.mxu0 0.0
        %2822 = vmatprep.subr.mxu0 0.0
        %2823 = vmatpush2.xpose.msra.mxu0 0.0
        %2824 = vmatprep.subr.mxu0 0.0
        %2825 = vmatpush2.xpose.msra.mxu0 0.0
        %2826 = vmatprep.subr.mxu0 0.0
        %2827 = vmatpush2.xpose.msra.mxu0 0.0
        %2828 = vmatprep.subr.mxu0 0.0
        %2829 = vmatpush2.xpose.msra.mxu0 0.0
        %2830 = vmatprep.mubr.f32.mxu0 0.0
        %2831 = vmatmul.mubr.f32.gmra.mxu0 %v2740
        %v2832 = vpop.f32.mrf.mxu0
        %v2833 = vadd.f32 0.0, %v2832
        %v2834 = vpop.f32.mrf.mxu0
        %2835 = vdwg.mxu0
        %v2836 = vsel %vm2738, %v2833, -inf
        %2837 = vmax.xlane.f32.xlu0 %v2836
        %v2838 = vpop.xlane.xlu0 %2837
        %v2839 = vsub.f32 %v2833, %v2838
        %v2840 = vmul.f32 %v2839, 1.442695
        %v2841 = vpow.pop %v2840
        %v2842 = vsel %vm2738, %v2841, 0.0
        %2843 = vadd.xlane.f32.xlu0 %v2842
        %v2844 = vpop.xlane.xlu0 %2843
        %v2845 = vrcp.pop %v2844
        %v2846 = vmul.f32 %v2841, %v2845
        %v2848 = vsel %vm2738, %v2846, 0
        %2850 = vmatprep.subr.mxu0 0.0
        %2851 = vmatpush1.msra.mxu0 0.0
        %2852 = vmatprep.subr.mxu0 0.0
        %2853 = vmatpush1.msra.mxu0 0.0
        %2854 = vmatprep.subr.mxu0 0.0
        %2855 = vmatpush1.msra.mxu0 0.0
        %2856 = vmatprep.subr.mxu0 0.0
        %2857 = vmatpush1.msra.mxu0 0.0
        %2858 = vmatprep.subr.mxu0 0.0
        %2859 = vmatpush1.msra.mxu0 0.0
        %2860 = vmatprep.subr.mxu0 0.0
        %2861 = vmatpush1.msra.mxu0 0.0
        %2862 = vmatprep.subr.mxu0 0.0
        %2863 = vmatpush1.msra.mxu0 0.0
        %2864 = vmatprep.subr.mxu0 0.0
        %2865 = vmatpush1.msra.mxu0 0.0
        %2866 = vmatprep.subr.mxu0 0.0
        %2867 = vmatpush1.msra.mxu0 %v1065
        %2868 = vmatprep.subr.mxu0 0.0
        %2869 = vmatpush1.msra.mxu0 %v1060
        %2870 = vmatprep.subr.mxu0 0.0
        %2871 = vmatpush1.msra.mxu0 %v1055
        %2872 = vmatprep.subr.mxu0 0.0
        %2873 = vmatpush1.msra.mxu0 %v1050
        %2874 = vmatprep.subr.mxu0 0.0
        %2875 = vmatpush1.msra.mxu0 %v1045
        %2876 = vmatprep.subr.mxu0 0.0
        %2877 = vmatpush1.msra.mxu0 %v1040
        %2878 = vmatprep.subr.mxu0 0.0
        %2879 = vmatpush1.msra.mxu0 %v1035
        %2880 = vmatprep.subr.mxu0 0.0
        %2881 = vmatpush1.msra.mxu0 %v1030
        %2882 = vmatprep.subr.mxu0 0.0
        %2883 = vmatpush2.msra.mxu0 0.0
        %2884 = vmatprep.subr.mxu0 0.0
        %2885 = vmatpush2.msra.mxu0 0.0
        %2886 = vmatprep.subr.mxu0 0.0
        %2887 = vmatpush2.msra.mxu0 0.0
        %2888 = vmatprep.subr.mxu0 0.0
        %2889 = vmatpush2.msra.mxu0 0.0
        %2890 = vmatprep.subr.mxu0 0.0
        %2891 = vmatpush2.msra.mxu0 0.0
        %2892 = vmatprep.subr.mxu0 0.0
        %2893 = vmatpush2.msra.mxu0 0.0
        %2894 = vmatprep.subr.mxu0 0.0
        %2895 = vmatpush2.msra.mxu0 0.0
        %2896 = vmatprep.subr.mxu0 0.0
        %2897 = vmatpush2.msra.mxu0 0.0
        %2898 = vmatprep.subr.mxu0 0.0
        %2899 = vmatpush2.msra.mxu0 0.0
        %2900 = vmatprep.subr.mxu0 0.0
        %2901 = vmatpush2.msra.mxu0 0.0
        %2902 = vmatprep.subr.mxu0 0.0
        %2903 = vmatpush2.msra.mxu0 0.0
        %2904 = vmatprep.subr.mxu0 0.0
        %2905 = vmatpush2.msra.mxu0 0.0
        %2906 = vmatprep.subr.mxu0 0.0
        %2907 = vmatpush2.msra.mxu0 0.0
        %2908 = vmatprep.subr.mxu0 0.0
        %2909 = vmatpush2.msra.mxu0 0.0
        %2910 = vmatprep.subr.mxu0 0.0
        %2911 = vmatpush2.msra.mxu0 0.0
        %2912 = vmatprep.subr.mxu0 0.0
        %2913 = vmatpush2.msra.mxu0 0.0
        %2914 = vmatprep.mubr.f32.mxu0 0.0
        %2915 = vmatmul.mubr.f32.gmra.mxu0 %v2848
        %v2916 = vpop.f32.mrf.mxu0
        %v2917 = vadd.f32 0.0, %v2916
        %v2918 = vpop.f32.mrf.mxu0
        %2919 = vdwg.mxu0
        %v2920 = vmul.f32 %v2735, %v2725
        %v2921 = vsel %vm2738, %v2920, 0.0
        %2922 = vadd.xlane.f32.xlu0 %v2921
        %v2923 = vpop.xlane.xlu0 %2922
        %v2924 = vmul.f32 %v2735, %v2730
        %v2925 = vsel %vm2738, %v2924, 0.0
        %2926 = vadd.xlane.f32.xlu0 %v2925
        %v2927 = vpop.xlane.xlu0 %2926
        %vm2928 = vcmask 7168
        %v2929 = vsel %vm2928, %v2923, %v2927
        %vm2930 = vcmask 15360
        %v2931 = vsel %vm2930, %v2929, -inf
        %2932 = vmax.xlane.f32.xlu0 %v2931
        %v2933 = vpop.xlane.xlu0 %2932
        %v2934 = vsub.f32 %v2929, %v2933
        %v2935 = vmul.f32 %v2934, 1.442695
        %v2936 = vpow.pop %v2935
        %v2937 = vsel %vm2930, %v2936, 0.0
        %2938 = vadd.xlane.f32.xlu0 %v2937
        %v2939 = vpop.xlane.xlu0 %2938
        %v2940 = vrcp.pop %v2939
        %v2941 = vmul.f32 %v2936, %v2940
        %v2942 = vld [vmem:[%s657] sm:$0x3]
        %v2943 = vld [vmem:[%s657 + $0x2] sm:$0x3]
        %v2944 = vld [vmem:[%s657 + $0x4] sm:$0x3]
        %v2945 = vld [vmem:[%s657 + $0x6] sm:$0x3]
        %v2946 = vld [vmem:[%s657 + $0x8] sm:$0x3]
        %v2947 = vld [vmem:[%s657 + $0xa] sm:$0x3]
        %v2948 = vld [vmem:[%s657 + $0xc] sm:$0x3]
        %v2949 = vld [vmem:[%s657 + $0xe] sm:$0x3]
        %2951 = vset.pattern.permute.xlu0 0
        %2952 = vperm.xlu0 %2951, %v2941
        %v2953 = vpop.permute.xlu0 %2952
        %v2963 = vrot.slane %v2943, 7
        %vm2964 = vcmask 1041409
        %v2965 = vsel %vm2964, %v2963, %v2942
        %v2966 = vrot.slane %v2944, 6
        %vm2967 = vcmask 1042434
        %v2968 = vsel %vm2967, %v2966, %v2965
        %v2969 = vrot.slane %v2945, 5
        %vm2970 = vcmask 1043459
        %v2971 = vsel %vm2970, %v2969, %v2968
        %v2972 = vrot.slane %v2946, 4
        %vm2973 = vcmask 1044484
        %v2974 = vsel %vm2973, %v2972, %v2971
        %v2975 = vrot.slane %v2947, 3
        %vm2976 = vcmask 1045509
        %v2977 = vsel %vm2976, %v2975, %v2974
        %v2978 = vrot.slane %v2948, 2
        %vm2979 = vcmask 1046534
        %v2980 = vsel %vm2979, %v2978, %v2977
        %v2981 = vrot.slane %v2949, 1
        %vm2982 = vcmask 1047559
        %v2983 = vsel %vm2982, %v2981, %v2980
        %v2985 = vmul.f32 %v2953, %v2983
        %v2986 = vadd.f32 %v2985, 0.0
        %2987 = vset.pattern.permute.xlu0 1
        %2988 = vperm.xlu0 %2987, %v2941
        %v2989 = vpop.permute.xlu0 %2988
        %v2991 = vrot.slane %v2942, 1
        %v2992 = vsel %vm2964, %v2943, %v2991
        %v2993 = vrot.slane %v2944, 7
        %v2994 = vsel %vm2967, %v2993, %v2992
        %v2995 = vrot.slane %v2945, 6
        %v2996 = vsel %vm2970, %v2995, %v2994
        %v2997 = vrot.slane %v2946, 5
        %v2998 = vsel %vm2973, %v2997, %v2996
        %v2999 = vrot.slane %v2947, 4
        %v3000 = vsel %vm2976, %v2999, %v2998
        %v3001 = vrot.slane %v2948, 3
        %v3002 = vsel %vm2979, %v3001, %v3000
        %v3003 = vrot.slane %v2949, 2
        %v3004 = vsel %vm2982, %v3003, %v3002
        %v3006 = vmul.f32 %v2989, %v3004
        %v3007 = vadd.f32 %v2986, %v3006
        %v3009 = vsel %vm2738, %v3007, 0
        %3011 = vmatprep.subr.mxu0 0.0
        %3012 = vmatpush1.msra.mxu0 0.0
        %3013 = vmatprep.subr.mxu0 0.0
        %3014 = vmatpush1.msra.mxu0 0.0
        %3015 = vmatprep.subr.mxu0 0.0
        %3016 = vmatpush1.msra.mxu0 0.0
        %3017 = vmatprep.subr.mxu0 0.0
        %3018 = vmatpush1.msra.mxu0 0.0
        %3019 = vmatprep.subr.mxu0 0.0
        %3020 = vmatpush1.msra.mxu0 0.0
        %3021 = vmatprep.subr.mxu0 0.0
        %3022 = vmatpush1.msra.mxu0 0.0
        %3023 = vmatprep.subr.mxu0 0.0
        %3024 = vmatpush1.msra.mxu0 0.0
        %3025 = vmatprep.subr.mxu0 0.0
        %3026 = vmatpush1.msra.mxu0 0.0
        %3027 = vmatprep.subr.mxu0 0.0
        %3028 = vmatpush1.msra.mxu0 %v1065
        %3029 = vmatprep.subr.mxu0 0.0
        %3030 = vmatpush1.msra.mxu0 %v1060
        %3031 = vmatprep.subr.mxu0 0.0
        %3032 = vmatpush1.msra.mxu0 %v1055
        %3033 = vmatprep.subr.mxu0 0.0
        %3034 = vmatpush1.msra.mxu0 %v1050
        %3035 = vmatprep.subr.mxu0 0.0
        %3036 = vmatpush1.msra.mxu0 %v1045
        %3037 = vmatprep.subr.mxu0 0.0
        %3038 = vmatpush1.msra.mxu0 %v1040
        %3039 = vmatprep.subr.mxu0 0.0
        %3040 = vmatpush1.msra.mxu0 %v1035
        %3041 = vmatprep.subr.mxu0 0.0
        %3042 = vmatpush1.msra.mxu0 %v1030
        %3043 = vmatprep.subr.mxu0 0.0
        %3044 = vmatpush2.msra.mxu0 0.0
        %3045 = vmatprep.subr.mxu0 0.0
        %3046 = vmatpush2.msra.mxu0 0.0
        %3047 = vmatprep.subr.mxu0 0.0
        %3048 = vmatpush2.msra.mxu0 0.0
        %3049 = vmatprep.subr.mxu0 0.0
        %3050 = vmatpush2.msra.mxu0 0.0
        %3051 = vmatprep.subr.mxu0 0.0
        %3052 = vmatpush2.msra.mxu0 0.0
        %3053 = vmatprep.subr.mxu0 0.0
        %3054 = vmatpush2.msra.mxu0 0.0
        %3055 = vmatprep.subr.mxu0 0.0
        %3056 = vmatpush2.msra.mxu0 0.0
        %3057 = vmatprep.subr.mxu0 0.0
        %3058 = vmatpush2.msra.mxu0 0.0
        %3059 = vmatprep.subr.mxu0 0.0
        %3060 = vmatpush2.msra.mxu0 0.0
        %3061 = vmatprep.subr.mxu0 0.0
        %3062 = vmatpush2.msra.mxu0 0.0
        %3063 = vmatprep.subr.mxu0 0.0
        %3064 = vmatpush2.msra.mxu0 0.0
        %3065 = vmatprep.subr.mxu0 0.0
        %3066 = vmatpush2.msra.mxu0 0.0
        %3067 = vmatprep.subr.mxu0 0.0
        %3068 = vmatpush2.msra.mxu0 0.0
        %3069 = vmatprep.subr.mxu0 0.0
        %3070 = vmatpush2.msra.mxu0 0.0
        %3071 = vmatprep.subr.mxu0 0.0
        %3072 = vmatpush2.msra.mxu0 0.0
        %3073 = vmatprep.subr.mxu0 0.0
        %3074 = vmatpush2.msra.mxu0 0.0
        %3075 = vmatprep.mubr.f32.mxu0 0.0
        %3076 = vmatmul.mubr.f32.gmra.mxu0 %v3009
        %v3077 = vpop.f32.mrf.mxu0
        %v3078 = vadd.f32 0.0, %v3077
        %v3079 = vpop.f32.mrf.mxu0
        %3080 = vdwg.mxu0
        %v3081 = vmax.f32 %v2735, 0.0
        %v3082 = vmax.f32 %v2917, 0.0
        %v3083 = vmax.f32 %v3078, 0.0
        %3085 = vrot.lane.b32.xlu0 %v3082, 64
        %v3086 = vpop.permute.xlu0 %3085
        %v3088 = vsel %vm2738, %v3081, %v3086
        %v3089 = vld [vmem:[#allocation11] sm:$0xf]
        %v3090 = vld [vmem:[#allocation11 + $0x4] sm:$0xf]
        %v3091 = vld [vmem:[#allocation11 + $0x8] sm:$0xf]
        %v3092 = vld [vmem:[#allocation11 + $0xc] sm:$0xf]
        %v3093 = vld [vmem:[#allocation11 + $0x10] sm:$0xf]
        %v3094 = vld [vmem:[#allocation11 + $0x14] sm:$0xf]
        %v3095 = vld [vmem:[#allocation11 + $0x18] sm:$0xf]
        %v3096 = vld [vmem:[#allocation11 + $0x1c] sm:$0xf]
        %v3097 = vld [vmem:[#allocation11 + $0x20] sm:$0xf]
        %v3098 = vld [vmem:[#allocation11 + $0x24] sm:$0xf]
        %v3099 = vld [vmem:[#allocation11 + $0x28] sm:$0xf]
        %v3100 = vld [vmem:[#allocation11 + $0x2c] sm:$0xf]
        %v3101 = vld [vmem:[#allocation11 + $0x30] sm:$0xf]
        %v3102 = vld [vmem:[#allocation11 + $0x34] sm:$0xf]
        %v3103 = vld [vmem:[#allocation11 + $0x38] sm:$0xf]
        %v3104 = vld [vmem:[#allocation11 + $0x3c] sm:$0xf]
        %v3105 = vld [vmem:[#allocation11 + $0x40] sm:$0xf]
        %v3106 = vld [vmem:[#allocation11 + $0x44] sm:$0xf]
        %v3107 = vld [vmem:[#allocation11 + $0x48] sm:$0xf]
        %v3108 = vld [vmem:[#allocation11 + $0x4c] sm:$0xf]
        %v3109 = vld [vmem:[#allocation11 + $0x50] sm:$0xf]
        %v3110 = vld [vmem:[#allocation11 + $0x54] sm:$0xf]
        %v3111 = vld [vmem:[#allocation11 + $0x58] sm:$0xf]
        %v3112 = vld [vmem:[#allocation11 + $0x5c] sm:$0xf]
        %v3113 = vunpack.c.l.bf16 %v3089
        %v3114 = vunpack.c.l.bf16 %v3090
        %v3115 = vunpack.c.l.bf16 %v3091
        %v3116 = vunpack.c.l.bf16 %v3092
        %v3117 = vunpack.c.l.bf16 %v3093
        %v3118 = vunpack.c.l.bf16 %v3094
        %v3119 = vunpack.c.l.bf16 %v3095
        %v3120 = vunpack.c.l.bf16 %v3096
        %v3121 = vunpack.c.l.bf16 %v3097
        %v3122 = vunpack.c.l.bf16 %v3098
        %v3123 = vunpack.c.l.bf16 %v3099
        %v3124 = vunpack.c.l.bf16 %v3100
        %v3125 = vunpack.c.l.bf16 %v3101
        %v3126 = vunpack.c.l.bf16 %v3102
        %v3127 = vunpack.c.l.bf16 %v3103
        %v3128 = vunpack.c.l.bf16 %v3104
        %v3129 = vunpack.c.l.bf16 %v3105
        %v3130 = vunpack.c.l.bf16 %v3106
        %v3131 = vunpack.c.l.bf16 %v3107
        %v3132 = vunpack.c.l.bf16 %v3108
        %v3133 = vunpack.c.l.bf16 %v3109
        %v3134 = vunpack.c.l.bf16 %v3110
        %v3135 = vunpack.c.l.bf16 %v3111
        %v3136 = vunpack.c.l.bf16 %v3112
        %v3137 = vld [vmem:[%s14] sm:$0x1]
        %v3139 = vlaneseq
        %v3140 = vshrl.u32 %v3139, 7
        %v3141 = vsub.s32 0, %v3140
        %v3142 = vrot.slane %v3137, %v3141
        %v3145 = vsel %vm2738, %v3083, 0
        %3147 = vmatprep.subr.mxu0 0.0
        %3148 = vmatpush1.msra.mxu0 %v3128
        %3149 = vmatprep.subr.mxu0 0.0
        %3150 = vmatpush1.msra.mxu0 %v3127
        %3151 = vmatprep.subr.mxu0 0.0
        %3152 = vmatpush1.msra.mxu0 %v3126
        %3153 = vmatprep.subr.mxu0 0.0
        %3154 = vmatpush1.msra.mxu0 %v3125
        %3155 = vmatprep.subr.mxu0 0.0
        %3156 = vmatpush1.msra.mxu0 %v3124
        %3157 = vmatprep.subr.mxu0 0.0
        %3158 = vmatpush1.msra.mxu0 %v3123
        %3159 = vmatprep.subr.mxu0 0.0
        %3160 = vmatpush1.msra.mxu0 %v3122
        %3161 = vmatprep.subr.mxu0 0.0
        %3162 = vmatpush1.msra.mxu0 %v3121
        %3163 = vmatprep.subr.mxu0 0.0
        %3164 = vmatpush1.msra.mxu0 %v3120
        %3165 = vmatprep.subr.mxu0 0.0
        %3166 = vmatpush1.msra.mxu0 %v3119
        %3167 = vmatprep.subr.mxu0 0.0
        %3168 = vmatpush1.msra.mxu0 %v3118
        %3169 = vmatprep.subr.mxu0 0.0
        %3170 = vmatpush1.msra.mxu0 %v3117
        %3171 = vmatprep.subr.mxu0 0.0
        %3172 = vmatpush1.msra.mxu0 %v3116
        %3173 = vmatprep.subr.mxu0 0.0
        %3174 = vmatpush1.msra.mxu0 %v3115
        %3175 = vmatprep.subr.mxu0 0.0
        %3176 = vmatpush1.msra.mxu0 %v3114
        %3177 = vmatprep.subr.mxu0 0.0
        %3178 = vmatpush1.msra.mxu0 %v3113
        %3179 = vmatprep.subr.mxu0 0.0
        %3180 = vmatpush2.msra.mxu0 0.0
        %3181 = vmatprep.subr.mxu0 0.0
        %3182 = vmatpush2.msra.mxu0 0.0
        %3183 = vmatprep.subr.mxu0 0.0
        %3184 = vmatpush2.msra.mxu0 0.0
        %3185 = vmatprep.subr.mxu0 0.0
        %3186 = vmatpush2.msra.mxu0 0.0
        %3187 = vmatprep.subr.mxu0 0.0
        %3188 = vmatpush2.msra.mxu0 0.0
        %3189 = vmatprep.subr.mxu0 0.0
        %3190 = vmatpush2.msra.mxu0 0.0
        %3191 = vmatprep.subr.mxu0 0.0
        %3192 = vmatpush2.msra.mxu0 0.0
        %3193 = vmatprep.subr.mxu0 0.0
        %3194 = vmatpush2.msra.mxu0 0.0
        %3195 = vmatprep.subr.mxu0 0.0
        %3196 = vmatpush2.msra.mxu0 %v3136
        %3197 = vmatprep.subr.mxu0 0.0
        %3198 = vmatpush2.msra.mxu0 %v3135
        %3199 = vmatprep.subr.mxu0 0.0
        %3200 = vmatpush2.msra.mxu0 %v3134
        %3201 = vmatprep.subr.mxu0 0.0
        %3202 = vmatpush2.msra.mxu0 %v3133
        %3203 = vmatprep.subr.mxu0 0.0
        %3204 = vmatpush2.msra.mxu0 %v3132
        %3205 = vmatprep.subr.mxu0 0.0
        %3206 = vmatpush2.msra.mxu0 %v3131
        %3207 = vmatprep.subr.mxu0 0.0
        %3208 = vmatpush2.msra.mxu0 %v3130
        %3209 = vmatprep.subr.mxu0 0.0
        %3210 = vmatpush2.msra.mxu0 %v3129
        %3211 = vmatprep.mubr.f32.mxu0 %v3145
        %3212 = vmatmul.mubr.f32.gmra.mxu0 %v3088
        %v3213 = vpop.f32.mrf.mxu0
        %v3214 = vadd.f32 %v3142, %v3213
        %v3215 = vpop.f32.mrf.mxu0
        %3216 = vdwg.mxu0
        %v3217 = vmax.f32 %v3214, 0.0
        %v3218 = vld [vmem:[%s15] sm:$0xf]
        %v3219 = vld [vmem:[%s15 + $0x4] sm:$0xf]
        %v3220 = vld [vmem:[%s15 + $0x8] sm:$0xf]
        %v3221 = vld [vmem:[%s15 + $0xc] sm:$0xf]
        %v3222 = vld [vmem:[%s15 + $0x10] sm:$0xf]
        %v3223 = vld [vmem:[%s15 + $0x14] sm:$0xf]
        %v3224 = vld [vmem:[%s15 + $0x18] sm:$0xf]
        %v3225 = vld [vmem:[%s15 + $0x1c] sm:$0xf]
        %v3226 = vld [vmem:[%s15 + $0x20] sm:$0xf]
        %v3227 = vld [vmem:[%s15 + $0x24] sm:$0xf]
        %v3228 = vld [vmem:[%s15 + $0x28] sm:$0xf]
        %v3229 = vld [vmem:[%s15 + $0x2c] sm:$0xf]
        %v3230 = vld [vmem:[%s15 + $0x30] sm:$0xf]
        %v3231 = vld [vmem:[%s15 + $0x34] sm:$0xf]
        %v3232 = vld [vmem:[%s15 + $0x38] sm:$0xf]
        %v3233 = vld [vmem:[%s15 + $0x3c] sm:$0xf]
        %v3234 = vunpack.c.l.bf16 %v3218
        %v3235 = vunpack.c.l.bf16 %v3219
        %v3236 = vunpack.c.l.bf16 %v3220
        %v3237 = vunpack.c.l.bf16 %v3221
        %v3238 = vunpack.c.l.bf16 %v3222
        %v3239 = vunpack.c.l.bf16 %v3223
        %v3240 = vunpack.c.l.bf16 %v3224
        %v3241 = vunpack.c.l.bf16 %v3225
        %v3242 = vunpack.c.l.bf16 %v3226
        %v3243 = vunpack.c.l.bf16 %v3227
        %v3244 = vunpack.c.l.bf16 %v3228
        %v3245 = vunpack.c.l.bf16 %v3229
        %v3246 = vunpack.c.l.bf16 %v3230
        %v3247 = vunpack.c.l.bf16 %v3231
        %v3248 = vunpack.c.l.bf16 %v3232
        %v3249 = vunpack.c.l.bf16 %v3233
        %v3250 = vld [vmem:[%s16] sm:$0x1]
        %v3252 = vlaneseq
        %v3253 = vshrl.u32 %v3252, 7
        %v3254 = vsub.s32 0, %v3253
        %v3255 = vrot.slane %v3250, %v3254
        %3257 = vmatprep.subr.mxu0 0.0
        %3258 = vmatpush1.msra.mxu0 %v3249
        %3259 = vmatprep.subr.mxu0 0.0
        %3260 = vmatpush1.msra.mxu0 %v3248
        %3261 = vmatprep.subr.mxu0 0.0
        %3262 = vmatpush1.msra.mxu0 %v3247
        %3263 = vmatprep.subr.mxu0 0.0
        %3264 = vmatpush1.msra.mxu0 %v3246
        %3265 = vmatprep.subr.mxu0 0.0
        %3266 = vmatpush1.msra.mxu0 %v3245
        %3267 = vmatprep.subr.mxu0 0.0
        %3268 = vmatpush1.msra.mxu0 %v3244
        %3269 = vmatprep.subr.mxu0 0.0
        %3270 = vmatpush1.msra.mxu0 %v3243
        %3271 = vmatprep.subr.mxu0 0.0
        %3272 = vmatpush1.msra.mxu0 %v3242
        %3273 = vmatprep.subr.mxu0 0.0
        %3274 = vmatpush1.msra.mxu0 %v3241
        %3275 = vmatprep.subr.mxu0 0.0
        %3276 = vmatpush1.msra.mxu0 %v3240
        %3277 = vmatprep.subr.mxu0 0.0
        %3278 = vmatpush1.msra.mxu0 %v3239
        %3279 = vmatprep.subr.mxu0 0.0
        %3280 = vmatpush1.msra.mxu0 %v3238
        %3281 = vmatprep.subr.mxu0 0.0
        %3282 = vmatpush1.msra.mxu0 %v3237
        %3283 = vmatprep.subr.mxu0 0.0
        %3284 = vmatpush1.msra.mxu0 %v3236
        %3285 = vmatprep.subr.mxu0 0.0
        %3286 = vmatpush1.msra.mxu0 %v3235
        %3287 = vmatprep.subr.mxu0 0.0
        %3288 = vmatpush1.msra.mxu0 %v3234
        %3289 = vmatprep.subr.mxu0 0.0
        %3290 = vmatpush2.msra.mxu0 0.0
        %3291 = vmatprep.subr.mxu0 0.0
        %3292 = vmatpush2.msra.mxu0 0.0
        %3293 = vmatprep.subr.mxu0 0.0
        %3294 = vmatpush2.msra.mxu0 0.0
        %3295 = vmatprep.subr.mxu0 0.0
        %3296 = vmatpush2.msra.mxu0 0.0
        %3297 = vmatprep.subr.mxu0 0.0
        %3298 = vmatpush2.msra.mxu0 0.0
        %3299 = vmatprep.subr.mxu0 0.0
        %3300 = vmatpush2.msra.mxu0 0.0
        %3301 = vmatprep.subr.mxu0 0.0
        %3302 = vmatpush2.msra.mxu0 0.0
        %3303 = vmatprep.subr.mxu0 0.0
        %3304 = vmatpush2.msra.mxu0 0.0
        %3305 = vmatprep.subr.mxu0 0.0
        %3306 = vmatpush2.msra.mxu0 0.0
        %3307 = vmatprep.subr.mxu0 0.0
        %3308 = vmatpush2.msra.mxu0 0.0
        %3309 = vmatprep.subr.mxu0 0.0
        %3310 = vmatpush2.msra.mxu0 0.0
        %3311 = vmatprep.subr.mxu0 0.0
        %3312 = vmatpush2.msra.mxu0 0.0
        %3313 = vmatprep.subr.mxu0 0.0
        %3314 = vmatpush2.msra.mxu0 0.0
        %3315 = vmatprep.subr.mxu0 0.0
        %3316 = vmatpush2.msra.mxu0 0.0
        %3317 = vmatprep.subr.mxu0 0.0
        %3318 = vmatpush2.msra.mxu0 0.0
        %3319 = vmatprep.subr.mxu0 0.0
        %3320 = vmatpush2.msra.mxu0 0.0
        %3321 = vmatprep.mubr.f32.mxu0 0.0
        %3322 = vmatmul.mubr.f32.gmra.mxu0 %v3217
        %v3323 = vpop.f32.mrf.mxu0
        %v3324 = vadd.f32 %v3255, %v3323
        %v3325 = vpop.f32.mrf.mxu0
        %3326 = vdwg.mxu0
        %3327 = vst.msk [vmem:[%s652] sm:$0xff] %vm2738, %v3324
        %s3328 = sand.u32 %s412, 1
        %s3329 = scalar_lea.sflag [#allocation4], %s3328
        %s3330 = sand.u32 %s412, 1
        %s3331 = smul.addr %s3330, 8
        %s3332 = scalar_lea.vmem [#allocation13], %s3331
        // Predicated region
        $region113: #{tpu_custom_call.1} parent=87 // pred_check
          %p3333 = pneg %p422
        $region114: #{tpu_custom_call.1} parent=87 // pred_check_branch
          %3335 = sbr.rel (%p3333) target = $region116
        $region115: #{tpu_custom_call.1} parent=87 // pred_region
          %s3337 = ssub.s32 128, 128
          %3338 = vsyncadd %s3329, %s3337
          %s3339 = smul.addr %s37, 128
          %s3340 = scalar_lea.hbm %s17, %s3339
          %s3342 = sshll.u32 %s3332, 4
          %s3343 = int_to_ptr.vmem [resolvable:$true] %s3342
          %3345 = dma.vmem_to_hbm [thread:$0]  %s3343, 128, %s3340, %s3329
        $region116: #{tpu_custom_call.1} parent=87 // pred_fallthru
          _
      $region88: #{tpu_custom_call.1} parent=5 // pred_fallthru
        _
      %p3346 = scmp.le.s32.totalorder 2, %s32
      // Predicated region
      $region117: #{tpu_custom_call.1} parent=5 // pred_check
        %p3347 = pneg %p3346
      $region118: #{tpu_custom_call.1} parent=5 // pred_check_branch
        %3349 = sbr.rel (%p3347) target = $region120
      $region119: #{tpu_custom_call.1} parent=5 // pred_region
        %s3350 = ssub.s32 %s32, 2
        // Predicated region
        $region121: #{tpu_custom_call.1} parent=119 // pred_check
          %p3351 = pneg %p428
        $region122: #{tpu_custom_call.1} parent=119 // pred_check_branch
          %3353 = sbr.rel (%p3351) target = $region124
        $region123: #{tpu_custom_call.1} parent=119 // pred_region
          %s3354 = sand.u32 %s413, 1
          %s3355 = scalar_lea.sflag [#allocation4], %s3354
          %s3356 = sand.u32 %s413, 1
          %s3357 = smul.addr %s3356, 8
          %s3358 = scalar_lea.vmem [#allocation13], %s3357
          %3359 = dma.done %s3355, 128
        $region124: #{tpu_custom_call.1} parent=119 // pred_fallthru
          _
      $region120: #{tpu_custom_call.1} parent=5 // pred_fallthru
        _
    $region6: #{tpu_custom_call.1} parent=1 // loop_footer
      %s36 = sadd.s32 1, %s32
    $region7: #{tpu_custom_call.1} parent=1 // loop_footer_branch
      %31 = sbr.rel target = $region3
    $region8: #{tpu_custom_call.1} parent=1 // loop_exit
      _
    %3360 = vsyncpa [#allocation3], 1
    %s3361 = scalar_lea.sflag [#allocation3], 1
    %3362 = vsyncpa %s3361, 1
    %3363 = vsyncpa [#allocation6], 1
    %3364 = vsyncpa [#allocation9], 1
    %3365 = vsyncpa [#allocation12], 1
    %3366 = vsyncpa [#allocation4], 1
    %s3367 = scalar_lea.sflag [#allocation4], 1
    %3368 = vsyncpa %s3367, 1

</llo_original>
